<compile_context>
chip_gen: v7x
topology: tpu7x:2x2x1
jax: 0.10.0
libtpu: 0.0.40
codegen_flags: <defaults>
</compile_context>

<pallas_src>
import jax
import jax.numpy as jnp
from jax.experimental import pallas as pl
from jax.experimental.pallas import tpu as pltpu

# --- model constants (fixed by the PyTorch module) ---
N = 256              # n
N_PRIME = 512        # n_prime
CONV_FILTERS = 256   # decoder_conv_filters
EMB_DIM = 256        # embedding_dim
CONTEXT_SIZE = 684
HIDDEN = 256
KSIZE = 11
PAD = 5
KSQ = KSIZE * KSIZE
NEG_INF = -1e30


# ---------------------------------------------------------------------------
# shared helpers (used by both the kernel-backed forward and the reference)
# ---------------------------------------------------------------------------
def _gru_step(x, h, w_ih, w_hh, b_ih, b_hh):
    """One PyTorch-convention GRU step (gate order r, z, n); weights pre-transposed."""
    hid = h.shape[-1]
    gi = jnp.dot(x, w_ih, preferred_element_type=jnp.float32) + b_ih
    gh = jnp.dot(h, w_hh, preferred_element_type=jnp.float32) + b_hh
    r = jax.nn.sigmoid(gi[:, :hid] + gh[:, :hid])
    z = jax.nn.sigmoid(gi[:, hid:2 * hid] + gh[:, hid:2 * hid])
    n = jnp.tanh(gi[:, 2 * hid:] + r * gh[:, 2 * hid:])
    return (1.0 - z) * n + z * h


def _im2col_coverage(beta, Hh, Ww):
    """im2col of the coverage map for the 11x11/pad-5 conv_Q (cross-correlation)."""
    bs = beta.shape[0]
    bp = jnp.pad(beta, ((0, 0), (PAD, PAD), (PAD, PAD)))
    patches = jnp.stack([bp[:, i:i + Hh, j:j + Ww]
                         for i in range(KSIZE) for j in range(KSIZE)], axis=-1)
    return patches.reshape(bs, Hh * Ww, KSQ)


def _round_up(x, m):
    return ((x + m - 1) // m) * m


def _pick_tile_l(L, max_tile=256):
    """Largest multiple of 128 (<= max_tile) dividing round_up(L, 128)."""
    lp = _round_up(L, 128)
    best = 128
    for t in range(256, max_tile + 1, 128):
        if lp % t == 0:
            best = t
    return best


def _derive_vmem_limit(bs, tile_l):
    """Derive the scoped-VMEM request from actual buffer sizes (v7x has 64 MiB)."""
    bf16, f32 = 2, 4
    streamed = (bs * tile_l * CONTEXT_SIZE * bf16        # feat tile
                + bs * tile_l * KSQ * bf16               # coverage-patch tile
                + tile_l * f32                           # mask tile
                + bs * tile_l * f32)                     # raw-score tile
    invariant = (CONTEXT_SIZE * N_PRIME * bf16           # Ua
                 + KSQ * N_PRIME * bf16                  # fused conv_Q @ Uf
                 + N_PRIME * bf16                        # Va row
                 + bs * N_PRIME * f32)                   # query row
    resident = bs * (2 + CONTEXT_SIZE) * f32             # m, l, ctx partials
    interm = 4 * bs * tile_l * N_PRIME * f32             # key/cov/pre/score temporaries
    total = 2 * (streamed + invariant + resident) + interm
    total = int(1.5 * total) + (8 << 20)
    return int(min(max(total, 24 << 20), 48 << 20))


# ---------------------------------------------------------------------------
# Pallas kernel: streaming coverage attention with online softmax
# ---------------------------------------------------------------------------
def _coverage_attention_kernel(qrow_ref, mask_ref, feat_ref, qpatch_ref,
                               ua_ref, quf_ref, va_ref,
                               eraw_ref, m_ref, l_ref, ctx_ref):
    """grid = (n_split, inner_tiles).

    Leading axis is "parallel" (one value per TensorCore on v7x); the inner
    axis is the flash-style online-softmax reduction over spatial tiles.
    Outputs m/l/ctx are per-core partials, merged in glue.
    """
    i = pl.program_id(1)

    @pl.when(i == 0)
    def _init():
        m_ref[...] = jnp.full(m_ref.shape, -jnp.inf, m_ref.dtype)
        l_ref[...] = jnp.zeros(l_ref.shape, l_ref.dtype)
        ctx_ref[...] = jnp.zeros(ctx_ref.shape, ctx_ref.dtype)

    feat = feat_ref[...]                                   # (bs, T, C) bf16
    qp = qpatch_ref[...]                                   # (bs, T, 121) bf16
    bs, T, C = feat.shape
    n_p = ua_ref.shape[-1]

    feat2 = feat.reshape(bs * T, C)
    qp2 = qp.reshape(bs * T, qp.shape[-1])

    # key = conv_Ua(x); cover = fc_Uf(conv_Q(beta))  [conv_Q*Uf fused in glue];
    # all biases plus the Wa query are folded into qrow.
    key = jnp.dot(feat2, ua_ref[...], preferred_element_type=jnp.float32)     # (bs*T, n')
    cov = jnp.dot(qp2, quf_ref[...], preferred_element_type=jnp.float32)      # (bs*T, n')
    pre = (key + cov).reshape(bs, T, n_p) + qrow_ref[...][:, None, :]
    score = jnp.tanh(pre.astype(jnp.bfloat16))                                # (bs, T, n') bf16

    # e_t = fc_Va(score) (Va bias handled exactly in glue): MXU batched matvec.
    va3 = jnp.broadcast_to(va_ref[...].reshape(1, 1, n_p), (bs, 1, n_p))
    e = jnp.einsum('bqn,btn->bqt', va3, score,
                   preferred_element_type=jnp.float32)                        # (bs, 1, T)
    e = e + mask_ref[...]                                                     # pads -> -1e30

    eraw_ref[...] = e[:, 0, :]                                                # (bs, T)

    # online softmax + context accumulation (per-core partials)
    m_prev = m_ref[0]                                                         # (bs, 1, 1)
    m_new = jnp.maximum(m_prev, jnp.max(e, axis=-1, keepdims=True))
    corr = jnp.exp(m_prev - m_new)
    p = jnp.exp(e - m_new)                                                    # (bs, 1, T)
    l_ref[0] = corr * l_ref[0] + jnp.sum(p, axis=-1, keepdims=True)
    ctx_ref[0] = corr * ctx_ref[0] + jnp.einsum(
        'bqt,btc->bqc', p.astype(feat.dtype), feat,
        preferred_element_type=jnp.float32)                                   # (bs, 1, C)
    m_ref[0] = m_new


# ---------------------------------------------------------------------------
# parameters
# ---------------------------------------------------------------------------
def init_params(key, num_classes):
    ks = list(jax.random.split(key, 32))
    it = iter(ks)

    def w(shape, scale=0.05):
        return scale * jax.random.normal(next(it), shape, jnp.float32)

    p = {}
    p["emb_w"] = w((num_classes, EMB_DIM))
    # GRU1: torch weight_ih (3H, E) / weight_hh (3H, H) stored transposed.
    p["g1_wih"] = w((EMB_DIM, 3 * HIDDEN))
    p["g1_whh"] = w((HIDDEN, 3 * HIDDEN))
    p["g1_bih"] = w((1, 3 * HIDDEN))
    p["g1_bhh"] = w((1, 3 * HIDDEN))
    # conv_Q: torch (256, 1, 11, 11) -> (121, 256)
    p["convq_w"] = w((KSQ, CONV_FILTERS))
    p["convq_b"] = w((1, CONV_FILTERS))
    # fc_Uf: torch (n', 256) -> (256, n')
    p["uf_w"] = w((CONV_FILTERS, N_PRIME))
    p["uf_b"] = w((1, N_PRIME))
    # conv_Ua: torch (n', 684, 1, 1) -> (684, n')
    p["ua_w"] = w((CONTEXT_SIZE, N_PRIME))
    p["ua_b"] = w((1, N_PRIME))
    # fc_Wa: torch (n', n) -> (n, n')
    p["wa_w"] = w((N, N_PRIME))
    p["wa_b"] = w((1, N_PRIME))
    # fc_Va: torch (1, n')
    p["va_w"] = w((1, N_PRIME))
    p["va_b"] = w((1, 1))
    # GRU2
    p["g2_wih"] = w((CONTEXT_SIZE, 3 * HIDDEN))
    p["g2_whh"] = w((HIDDEN, 3 * HIDDEN))
    p["g2_bih"] = w((1, 3 * HIDDEN))
    p["g2_bhh"] = w((1, 3 * HIDDEN))
    # fc_Ws: torch (E, H) -> (H, E)
    p["ws_w"] = w((HIDDEN, EMB_DIM))
    p["ws_b"] = w((1, EMB_DIM))
    # fc_Wc: torch (E, 684) -> (684, E)
    p["wc_w"] = w((CONTEXT_SIZE, EMB_DIM))
    p["wc_b"] = w((1, EMB_DIM))
    # fc_Wo: torch (K, E//2) -> (E//2, K)
    p["wo_w"] = w((EMB_DIM // 2, num_classes))
    p["wo_b"] = w((1, num_classes))
    return p


# ---------------------------------------------------------------------------
# forward pass (kernel + XLA glue)
# ---------------------------------------------------------------------------
def decoder_forward(params, x, hidden, feature, alpha_state=None, tile_l=None):
    """Mirrors Decoder.forward(x, hidden, feature) from the PyTorch module."""
    bs = x.shape[0]
    C, Hh, Ww = feature.shape[1], feature.shape[2], feature.shape[3]
    L = Hh * Ww
    num_classes = params["emb_w"].shape[0]

    if tile_l is None:
        tile_l = _pick_tile_l(L)
    assert tile_l % 128 == 0, "tile_l must be a multiple of 128 (lane-dense stores)"
    L_pad = _round_up(L, tile_l)
    n_tiles = L_pad // tile_l
    n_split = 2 if (n_tiles % 2 == 0 and n_tiles >= 2) else 1
    inner = n_tiles // n_split

    # ---- glue before the kernel: embedding, GRU1, attention query ----
    emb = jnp.take(params["emb_w"], x[:, 0], axis=0)                           # (bs, E)
    h0 = hidden[0]                                                             # (bs, H)
    pred = _gru_step(emb, h0, params["g1_wih"], params["g1_whh"],
                     params["g1_bih"], params["g1_bhh"])                       # (bs, H)

    # Fold every attention bias into the query row:
    # tanh(Ua x + (Q beta)(Wq Wuf) + [Wa s + b_Wa + b_Ua + b_Uf + b_Q Wuf])
    attn_bias = (params["wa_b"] + params["ua_b"] + params["uf_b"]
                 + jnp.dot(params["convq_b"], params["uf_w"]))                 # (1, n')
    qrow = jnp.dot(pred, params["wa_w"],
                   preferred_element_type=jnp.float32) + attn_bias             # (bs, n')

    # Feature map + coverage im2col, streamed in bf16, zero-padded to L_pad.
    feat = jnp.transpose(feature, (0, 2, 3, 1)).reshape(bs, L, C)
    if alpha_state is None:
        # CoverageAttention.reset_alpha: coverage starts at zero.
        alpha_state = jnp.zeros((bs, 1, L), jnp.float32)
    beta = jnp.sum(alpha_state, axis=1).reshape(bs, Hh, Ww)
    qpatch = _im2col_coverage(beta, Hh, Ww)                                    # (bs, L, 121)

    pad = L_pad - L
    feat_b = jnp.pad(feat, ((0, 0), (0, pad), (0, 0))).astype(jnp.bfloat16)
    qpatch_b = jnp.pad(qpatch, ((0, 0), (0, pad), (0, 0))).astype(jnp.bfloat16)
    mask = jnp.concatenate(
        [jnp.zeros((L,), jnp.float32),
         jnp.full((pad,), NEG_INF, jnp.float32)]).reshape(1, 1, L_pad)

    # Fuse conv_Q and fc_Uf into a single bf16 matrix; bf16 kernel weights.
    fused_quf = jnp.dot(params["convq_w"], params["uf_w"]).astype(jnp.bfloat16)  # (121, n')
    ua_w_b = params["ua_w"].astype(jnp.bfloat16)
    va_w_b = params["va_w"].astype(jnp.bfloat16)

    def _full(a):
        return pl.BlockSpec(a.shape, lambda c, i, nd=a.ndim: (0,) * nd)

    in_specs = [
        _full(qrow),                                                          # query row
        pl.BlockSpec((1, 1, tile_l), lambda c, i: (0, 0, c * inner + i)),     # mask tile
        pl.BlockSpec((bs, tile_l, C), lambda c, i: (0, c * inner + i, 0)),    # feat tile
        pl.BlockSpec((bs, tile_l, KSQ), lambda c, i: (0, c * inner + i, 0)),  # coverage tile
        _full(ua_w_b), _full(fused_quf), _full(va_w_b),
    ]
    out_shape = (
        jax.ShapeDtypeStruct((bs, L_pad), jnp.float32),             # raw scores
        jax.ShapeDtypeStruct((n_split, bs, 1, 1), jnp.float32),     # per-core running max
        jax.ShapeDtypeStruct((n_split, bs, 1, 1), jnp.float32),     # per-core running sum
        jax.ShapeDtypeStruct((n_split, bs, 1, C), jnp.float32),     # per-core context acc
    )
    out_specs = (
        pl.BlockSpec((bs, tile_l), lambda c, i: (0, c * inner + i)),
        pl.BlockSpec((1, bs, 1, 1), lambda c, i: (c, 0, 0, 0)),
        pl.BlockSpec((1, bs, 1, 1), lambda c, i: (c, 0, 0, 0)),
        pl.BlockSpec((1, bs, 1, C), lambda c, i: (c, 0, 0, 0)),
    )

    grid_spec = pltpu.PrefetchScalarGridSpec(
        num_scalar_prefetch=0,
        grid=(n_split, inner),
        in_specs=in_specs,
        out_specs=out_specs,
    )

    e_raw, m_part, l_part, ctx_part = pl.pallas_call(
        _coverage_attention_kernel,
        out_shape=out_shape,
        grid_spec=grid_spec,
        compiler_params=pltpu.CompilerParams(
            dimension_semantics=("parallel", "arbitrary"),
            vmem_limit_bytes=_derive_vmem_limit(bs, tile_l),
        ),
    )(qrow, mask, feat_b, qpatch_b, ua_w_b, fused_quf, va_w_b)

    # ---- glue after the kernel: 2-way flash merge, softmax, GRU2, head ----
    m_p = m_part.reshape(n_split, bs)
    l_p = l_part.reshape(n_split, bs)
    ctx_p = ctx_part.reshape(n_split, bs, C)

    m_g = jnp.max(m_p, axis=0)                                   # (bs,)
    scale = jnp.exp(m_p - m_g[None, :])                          # (n_split, bs)
    l_g = jnp.sum(scale * l_p, axis=0)                           # (bs,)
    ctx_num = jnp.sum(scale[:, :, None] * ctx_p, axis=0)         # (bs, C)

    # exact torch semantics: alpha = exp(e) / (sum(exp(e)) + 1e-8), e includes b_Va
    va_b = params["va_b"].reshape(())
    denom = l_g + 1e-8 * jnp.exp(-(m_g + va_b))                  # (bs,)
    context = ctx_num / denom[:, None]                           # (bs, C)
    alpha = (jnp.exp(e_raw - m_g[:, None]) / denom[:, None])[:, :L]   # (bs, L)

    new_h = _gru_step(context, pred, params["g2_wih"], params["g2_whh"],
                      params["g2_bih"], params["g2_bhh"])        # (bs, H)

    w_s = jnp.dot(new_h, params["ws_w"],
                  preferred_element_type=jnp.float32) + params["ws_b"]
    w_c = jnp.dot(context, params["wc_w"],
                  preferred_element_type=jnp.float32) + params["wc_b"]
    o = emb + w_s + w_c
    om = jnp.max(o.reshape(bs, EMB_DIM // 2, 2), axis=-1)        # Maxout(pool=2)
    logits = jnp.dot(om, params["wo_w"],
                     preferred_element_type=jnp.float32) + params["wo_b"]

    # TODO(synk): the module's stateful self.alpha concat is carried by the caller:
    #   next_alpha_state = jnp.concatenate([alpha_state, alpha[:, None, :]], axis=1)
    new_hidden = new_h[None]                                     # (1, bs, H)
    decoder_attention = alpha.reshape(bs, 1, Hh, Ww)
    return logits, new_hidden, decoder_attention


# ---------------------------------------------------------------------------
# pure-f32 reference (mirrors the PyTorch module exactly)
# ---------------------------------------------------------------------------
def reference_forward(params, x, hidden, feature, alpha_state=None):
    bs = x.shape[0]
    C, Hh, Ww = feature.shape[1], feature.shape[2], feature.shape[3]
    L = Hh * Ww
    emb = jnp.take(params["emb_w"], x[:, 0], axis=0)
    pred = _gru_step(emb, hidden[0], params["g1_wih"], params["g1_whh"],
                     params["g1_bih"], params["g1_bhh"])
    feat = jnp.transpose(feature, (0, 2, 3, 1)).reshape(bs, L, C)
    if alpha_state is None:
        alpha_state = jnp.zeros((bs, 1, L), jnp.float32)
    beta = jnp.sum(alpha_state, axis=1).reshape(bs, Hh, Ww)
    qpatch = _im2col_coverage(beta, Hh, Ww)
    key = feat @ params["ua_w"] + params["ua_b"]
    cov = (qpatch @ params["convq_w"] + params["convq_b"]) @ params["uf_w"] + params["uf_b"]
    query = pred @ params["wa_w"] + params["wa_b"]
    score = jnp.tanh(key + cov + query[:, None, :])
    e = jnp.squeeze(score @ params["va_w"].T, -1) + params["va_b"].reshape(())
    e_exp = jnp.exp(e)
    alpha = e_exp / (jnp.sum(e_exp, axis=1, keepdims=True) + 1e-8)
    context = jnp.einsum('bl,blc->bc', alpha, feat)
    new_h = _gru_step(context, pred, params["g2_wih"], params["g2_whh"],
                      params["g2_bih"], params["g2_bhh"])
    w_s = new_h @ params["ws_w"] + params["ws_b"]
    w_c = context @ params["wc_w"] + params["wc_b"]
    o = emb + w_s + w_c
    om = jnp.max(o.reshape(bs, EMB_DIM // 2, 2), axis=-1)
    logits = om @ params["wo_w"] + params["wo_b"]
    return logits, new_h[None], alpha.reshape(bs, 1, Hh, Ww)


if __name__ == "__main__":
    key = jax.random.PRNGKey(0)
    k_par, k_x, k_h, k_f, k_a = jax.random.split(key, 5)

    num_classes = 32
    bs, Hh, Ww = 2, 16, 30        # L = 480 -> padded to 512, 4 tiles of 128, 2-way split
    L = Hh * Ww

    params = init_params(k_par, num_classes)
    x = jax.random.randint(k_x, (bs, 1), 0, num_classes, dtype=jnp.int32)
    hidden = 0.1 * jax.random.normal(k_h, (1, bs, HIDDEN), jnp.float32)
    feature = 0.1 * jax.random.normal(k_f, (bs, CONTEXT_SIZE, Hh, Ww), jnp.float32)
    # two "previous" attention maps so the coverage (conv_Q) path is exercised
    alpha_state = jax.nn.softmax(
        jax.random.normal(k_a, (bs, 2, L), jnp.float32), axis=-1)

    out, new_hidden, attn = decoder_forward(params, x, hidden, feature,
                                            alpha_state=alpha_state, tile_l=128)
    jax.block_until_ready((out, new_hidden, attn))

    assert out.shape == (bs, num_classes)
    assert new_hidden.shape == (1, bs, HIDDEN)
    assert attn.shape == (bs, 1, Hh, Ww)
    assert bool(jnp.isfinite(out).all())
    row_sums = jnp.sum(attn.reshape(bs, -1), axis=1)
    assert bool(jnp.all(jnp.abs(row_sums - 1.0) < 1e-3))

    ref_out, ref_hidden, ref_attn = reference_forward(
        params, x, hidden, feature, alpha_state=alpha_state)
    assert bool(jnp.max(jnp.abs(out - ref_out)) < 3e-2)
    assert bool(jnp.max(jnp.abs(new_hidden - ref_hidden)) < 3e-2)
    assert bool(jnp.max(jnp.abs(attn - ref_attn)) < 5e-3)

    print("KERNEL_OK")
</pallas_src>

<mosaic_0001>
module attributes {stable_mosaic.version = 11 : i64} {
  func.func @_coverage_attention_kernel(%arg0: i32, %arg1: i32, %arg2: memref<2x512xf32, #tpu.memory_space<vmem>>, %arg3: memref<1x1x128xf32, #tpu.memory_space<vmem>>, %arg4: memref<2x128x684xbf16, #tpu.memory_space<vmem>>, %arg5: memref<2x128x121xbf16, #tpu.memory_space<vmem>>, %arg6: memref<684x512xbf16, #tpu.memory_space<vmem>>, %arg7: memref<121x512xbf16, #tpu.memory_space<vmem>>, %arg8: memref<1x512xbf16, #tpu.memory_space<vmem>>, %arg9: memref<2x128xf32, #tpu.memory_space<vmem>>, %arg10: memref<1x2x1x1xf32, #tpu.memory_space<vmem>>, %arg11: memref<1x2x1x1xf32, #tpu.memory_space<vmem>>, %arg12: memref<1x2x1x684xf32, #tpu.memory_space<vmem>>) attributes {dimension_semantics = [#tpu.dimension_semantics<parallel>, #tpu.dimension_semantics<arbitrary>], iteration_bounds = array<i64: 2, 2>, scalar_prefetch = 0 : i64, scratch_operands = 0 : i64, tpu.core_type = #tpu.core_type<tc>, window_params = [{pipeline_mode = #tpu.pipeline_mode<synchronous>, transform_indices = @transform_0, window_bounds = array<i64: 2, 512>}, {transform_indices = @transform_1, window_bounds = array<i64: 1, 1, 128>}, {transform_indices = @transform_2, window_bounds = array<i64: 2, 128, 684>}, {transform_indices = @transform_3, window_bounds = array<i64: 2, 128, 121>}, {pipeline_mode = #tpu.pipeline_mode<synchronous>, transform_indices = @transform_4, window_bounds = array<i64: 684, 512>}, {pipeline_mode = #tpu.pipeline_mode<synchronous>, transform_indices = @transform_5, window_bounds = array<i64: 121, 512>}, {pipeline_mode = #tpu.pipeline_mode<synchronous>, transform_indices = @transform_6, window_bounds = array<i64: 1, 512>}, {transform_indices = @transform_7, window_bounds = array<i64: 2, 128>}, {transform_indices = @transform_8, window_bounds = array<i64: 1, 2, 1, 1>}, {transform_indices = @transform_9, window_bounds = array<i64: 1, 2, 1, 1>}, {transform_indices = @transform_10, window_bounds = array<i64: 1, 2, 1, 684>}]} {
    %c0_i32 = arith.constant 0 : i32
    %0 = arith.cmpi eq, %arg1, %c0_i32 : i32
    %1 = arith.extui %0 : i1 to i32
    %c0_i32_0 = arith.constant 0 : i32
    %2 = arith.cmpi ne, %1, %c0_i32_0 : i32
    scf.if %2 {
      %cst_48 = arith.constant 0xFF800000 : f32
      %61 = vector.broadcast %cst_48 : f32 to vector<1x2x1x1xf32>
      %c0_49 = arith.constant 0 : index
      %c0_50 = arith.constant 0 : index
      %c0_51 = arith.constant 0 : index
      %c0_52 = arith.constant 0 : index
      %62 = vector.load %arg10[%c0_49, %c0_50, %c0_51, %c0_52] : memref<1x2x1x1xf32, #tpu.memory_space<vmem>>, vector<1x2x1x1xf32>
      tpu.vector_store %arg10[%c0_49, %c0_50, %c0_51, %c0_52], %61 {strides = array<i32>} : memref<1x2x1x1xf32, #tpu.memory_space<vmem>>, vector<1x2x1x1xf32>,
      %cst_53 = arith.constant 0.000000e+00 : f32
      %63 = vector.broadcast %cst_53 : f32 to vector<1x2x1x1xf32>
      %c0_54 = arith.constant 0 : index
      %c0_55 = arith.constant 0 : index
      %c0_56 = arith.constant 0 : index
      %c0_57 = arith.constant 0 : index
      %64 = vector.load %arg11[%c0_54, %c0_55, %c0_56, %c0_57] : memref<1x2x1x1xf32, #tpu.memory_space<vmem>>, vector<1x2x1x1xf32>
      tpu.vector_store %arg11[%c0_54, %c0_55, %c0_56, %c0_57], %63 {strides = array<i32>} : memref<1x2x1x1xf32, #tpu.memory_space<vmem>>, vector<1x2x1x1xf32>,
      %cst_58 = arith.constant 0.000000e+00 : f32
      %65 = vector.broadcast %cst_58 : f32 to vector<1x2x1x684xf32>
      %c0_59 = arith.constant 0 : index
      %c0_60 = arith.constant 0 : index
      %c0_61 = arith.constant 0 : index
      %c0_62 = arith.constant 0 : index
      %66 = vector.load %arg12[%c0_59, %c0_60, %c0_61, %c0_62] : memref<1x2x1x684xf32, #tpu.memory_space<vmem>>, vector<1x2x1x684xf32>
      tpu.vector_store %arg12[%c0_59, %c0_60, %c0_61, %c0_62], %65 {strides = array<i32>} : memref<1x2x1x684xf32, #tpu.memory_space<vmem>>, vector<1x2x1x684xf32>,
    } else {
    }
    %c0 = arith.constant 0 : index
    %c0_1 = arith.constant 0 : index
    %c0_2 = arith.constant 0 : index
    %3 = vector.load %arg4[%c0, %c0_1, %c0_2] : memref<2x128x684xbf16, #tpu.memory_space<vmem>>, vector<2x128x684xbf16>
    %c0_3 = arith.constant 0 : index
    %c0_4 = arith.constant 0 : index
    %c0_5 = arith.constant 0 : index
    %4 = vector.load %arg5[%c0_3, %c0_4, %c0_5] : memref<2x128x121xbf16, #tpu.memory_space<vmem>>, vector<2x128x121xbf16>
    %5 = vector.shape_cast %3 : vector<2x128x684xbf16> to vector<256x684xbf16>
    %6 = vector.shape_cast %4 : vector<2x128x121xbf16> to vector<256x121xbf16>
    %c0_6 = arith.constant 0 : index
    %c0_7 = arith.constant 0 : index
    %7 = vector.load %arg6[%c0_6, %c0_7] : memref<684x512xbf16, #tpu.memory_space<vmem>>, vector<684x512xbf16>
    %cst = arith.constant dense<0.000000e+00> : vector<256x512xf32>
    %8 = tpu.matmul %5, %7, %cst {dimension_numbers = #tpu.dot_dimension_numbers<[1], [0], [0], [1], [0, 0, 1, 1], [], []>} : vector<256x684xbf16>, vector<684x512xbf16>, vector<256x512xf32> -> vector<256x512xf32>
    %c0_8 = arith.constant 0 : index
    %c0_9 = arith.constant 0 : index
    %9 = vector.load %arg7[%c0_8, %c0_9] : memref<121x512xbf16, #tpu.memory_space<vmem>>, vector<121x512xbf16>
    %cst_10 = arith.constant dense<0.000000e+00> : vector<256x512xf32>
    %10 = tpu.matmul %6, %9, %cst_10 {dimension_numbers = #tpu.dot_dimension_numbers<[1], [0], [0], [1], [0, 0, 1, 1], [], []>} : vector<256x121xbf16>, vector<121x512xbf16>, vector<256x512xf32> -> vector<256x512xf32>
    %11 = arith.addf %8, %10 : vector<256x512xf32>
    %12 = vector.shape_cast %11 : vector<256x512xf32> to vector<2x128x512xf32>
    %c0_11 = arith.constant 0 : index
    %c0_12 = arith.constant 0 : index
    %13 = vector.load %arg2[%c0_11, %c0_12] : memref<2x512xf32, #tpu.memory_space<vmem>>, vector<2x512xf32>
    %14 = vector.shape_cast %13 : vector<2x512xf32> to vector<2x1x512xf32>
    %15 = vector.broadcast %14 : vector<2x1x512xf32> to vector<2x128x512xf32>
    %16 = arith.addf %12, %15 : vector<2x128x512xf32>
    %17 = arith.truncf %16 : vector<2x128x512xf32> to vector<2x128x512xbf16>
    %18 = math.tanh %17 : vector<2x128x512xbf16>
    %c0_13 = arith.constant 0 : index
    %c0_14 = arith.constant 0 : index
    %19 = vector.load %arg8[%c0_13, %c0_14] : memref<1x512xbf16, #tpu.memory_space<vmem>>, vector<1x512xbf16>
    %20 = vector.shape_cast %19 : vector<1x512xbf16> to vector<1x1x512xbf16>
    %21 = vector.shape_cast %20 : vector<1x1x512xbf16> to vector<1x1x512xbf16>
    %22 = vector.broadcast %21 : vector<1x1x512xbf16> to vector<2x1x512xbf16>
    "tpu.trace_start"() <{level = 10 : i32, message = "bqn,btn->bqt"}> : () -> ()
    %cst_15 = arith.constant dense<0.000000e+00> : vector<2x1x128xf32>
    %23 = tpu.matmul %22, %18, %cst_15 {dimension_numbers = #tpu.dot_dimension_numbers<[2], [2], [1], [1], [0, 0, 0, 1, 1, 1], [0], [0]>} : vector<2x1x512xbf16>, vector<2x128x512xbf16>, vector<2x1x128xf32> -> vector<2x1x128xf32>
    "tpu.trace_stop"() : () -> ()
    %c0_16 = arith.constant 0 : index
    %c0_17 = arith.constant 0 : index
    %c0_18 = arith.constant 0 : index
    %24 = vector.load %arg3[%c0_16, %c0_17, %c0_18] : memref<1x1x128xf32, #tpu.memory_space<vmem>>, vector<1x1x128xf32>
    %25 = vector.broadcast %24 : vector<1x1x128xf32> to vector<2x1x128xf32>
    %26 = arith.addf %23, %25 : vector<2x1x128xf32>
    %27 = vector.shape_cast %26 : vector<2x1x128xf32> to vector<2x128xf32>
    %c0_19 = arith.constant 0 : index
    %c0_20 = arith.constant 0 : index
    %28 = vector.load %arg9[%c0_19, %c0_20] : memref<2x128xf32, #tpu.memory_space<vmem>>, vector<2x128xf32>
    tpu.vector_store %arg9[%c0_19, %c0_20], %27 {strides = array<i32>} : memref<2x128xf32, #tpu.memory_space<vmem>>, vector<2x128xf32>,
    %c0_21 = arith.constant 0 : index
    %c0_22 = arith.constant 0 : index
    %c0_23 = arith.constant 0 : index
    %c0_24 = arith.constant 0 : index
    %29 = vector.load %arg10[%c0_21, %c0_22, %c0_23, %c0_24] : memref<1x2x1x1xf32, #tpu.memory_space<vmem>>, vector<1x2x1x1xf32>
    %30 = vector.shape_cast %29 : vector<1x2x1x1xf32> to vector<2x1x1xf32>
    %cst_25 = arith.constant dense<0xFF800000> : vector<2x1xf32>
    %31 = vector.multi_reduction <maximumf>, %26, %cst_25 [2] : vector<2x1x128xf32> to vector<2x1xf32>
    %32 = vector.shape_cast %31 : vector<2x1xf32> to vector<2x1x1xf32>
    %33 = arith.maximumf %30, %32 : vector<2x1x1xf32>
    %34 = arith.subf %30, %33 : vector<2x1x1xf32>
    %35 = math.exp %34 : vector<2x1x1xf32>
    %36 = vector.broadcast %33 : vector<2x1x1xf32> to vector<2x1x128xf32>
    %37 = arith.subf %26, %36 : vector<2x1x128xf32>
    %38 = math.exp %37 : vector<2x1x128xf32>
    %c0_26 = arith.constant 0 : index
    %c0_27 = arith.constant 0 : index
    %c0_28 = arith.constant 0 : index
    %c0_29 = arith.constant 0 : index
    %39 = vector.load %arg11[%c0_26, %c0_27, %c0_28, %c0_29] : memref<1x2x1x1xf32, #tpu.memory_space<vmem>>, vector<1x2x1x1xf32>
    %40 = vector.shape_cast %39 : vector<1x2x1x1xf32> to vector<2x1x1xf32>
    %41 = arith.mulf %35, %40 : vector<2x1x1xf32>
    %cst_30 = arith.constant dense<0.000000e+00> : vector<2x1xf32>
    %42 = vector.multi_reduction <add>, %38, %cst_30 [2] : vector<2x1x128xf32> to vector<2x1xf32>
    %43 = vector.shape_cast %42 : vector<2x1xf32> to vector<2x1x1xf32>
    %44 = arith.addf %41, %43 : vector<2x1x1xf32>
    %c0_31 = arith.constant 0 : index
    %c0_32 = arith.constant 0 : index
    %c0_33 = arith.constant 0 : index
    %c0_34 = arith.constant 0 : index
    %45 = vector.load %arg11[%c0_31, %c0_32, %c0_33, %c0_34] : memref<1x2x1x1xf32, #tpu.memory_space<vmem>>, vector<1x2x1x1xf32>
    %46 = vector.shape_cast %45 : vector<1x2x1x1xf32> to vector<2x1x1xf32>
    %47 = vector.shape_cast %44 : vector<2x1x1xf32> to vector<1x2x1x1xf32>
    tpu.vector_store %arg11[%c0_31, %c0_32, %c0_33, %c0_34], %47 {strides = array<i32>} : memref<1x2x1x1xf32, #tpu.memory_space<vmem>>, vector<1x2x1x1xf32>,
    %c0_35 = arith.constant 0 : index
    %c0_36 = arith.constant 0 : index
    %c0_37 = arith.constant 0 : index
    %c0_38 = arith.constant 0 : index
    %48 = vector.load %arg12[%c0_35, %c0_36, %c0_37, %c0_38] : memref<1x2x1x684xf32, #tpu.memory_space<vmem>>, vector<1x2x1x684xf32>
    %49 = vector.shape_cast %48 : vector<1x2x1x684xf32> to vector<2x1x684xf32>
    %50 = vector.broadcast %35 : vector<2x1x1xf32> to vector<2x1x684xf32>
    %51 = arith.mulf %50, %49 : vector<2x1x684xf32>
    %52 = arith.truncf %38 : vector<2x1x128xf32> to vector<2x1x128xbf16>
    "tpu.trace_start"() <{level = 10 : i32, message = "bqt,btc->bqc"}> : () -> ()
    %cst_39 = arith.constant dense<0.000000e+00> : vector<2x1x684xf32>
    %53 = tpu.matmul %52, %3, %cst_39 {dimension_numbers = #tpu.dot_dimension_numbers<[2], [1], [1], [2], [0, 0, 0, 1, 1, 2], [0], [0]>} : vector<2x1x128xbf16>, vector<2x128x684xbf16>, vector<2x1x684xf32> -> vector<2x1x684xf32>
    "tpu.trace_stop"() : () -> ()
    %54 = arith.addf %51, %53 : vector<2x1x684xf32>
    %c0_40 = arith.constant 0 : index
    %c0_41 = arith.constant 0 : index
    %c0_42 = arith.constant 0 : index
    %c0_43 = arith.constant 0 : index
    %55 = vector.load %arg12[%c0_40, %c0_41, %c0_42, %c0_43] : memref<1x2x1x684xf32, #tpu.memory_space<vmem>>, vector<1x2x1x684xf32>
    %56 = vector.shape_cast %55 : vector<1x2x1x684xf32> to vector<2x1x684xf32>
    %57 = vector.shape_cast %54 : vector<2x1x684xf32> to vector<1x2x1x684xf32>
    tpu.vector_store %arg12[%c0_40, %c0_41, %c0_42, %c0_43], %57 {strides = array<i32>} : memref<1x2x1x684xf32, #tpu.memory_space<vmem>>, vector<1x2x1x684xf32>,
    %c0_44 = arith.constant 0 : index
    %c0_45 = arith.constant 0 : index
    %c0_46 = arith.constant 0 : index
    %c0_47 = arith.constant 0 : index
    %58 = vector.load %arg10[%c0_44, %c0_45, %c0_46, %c0_47] : memref<1x2x1x1xf32, #tpu.memory_space<vmem>>, vector<1x2x1x1xf32>
    %59 = vector.shape_cast %58 : vector<1x2x1x1xf32> to vector<2x1x1xf32>
    %60 = vector.shape_cast %33 : vector<2x1x1xf32> to vector<1x2x1x1xf32>
    tpu.vector_store %arg10[%c0_44, %c0_45, %c0_46, %c0_47], %60 {strides = array<i32>} : memref<1x2x1x1xf32, #tpu.memory_space<vmem>>, vector<1x2x1x1xf32>,
    return
  }
  func.func @transform_0(%arg0: i32, %arg1: i32) -> (i32, i32) {
    %c0_i32 = arith.constant 0 : i32
    %c0_i32_0 = arith.constant 0 : i32
    %c0_i32_1 = arith.constant 0 : i32
    return %c0_i32, %c0_i32_0 : i32, i32
  }
  func.func @transform_1(%arg0: i32, %arg1: i32) -> (i32, i32, i32) {
    %c2_i32 = arith.constant 2 : i32
    %0 = arith.muli %arg0, %c2_i32 : i32
    %1 = arith.addi %0, %arg1 : i32
    %c0_i32 = arith.constant 0 : i32
    %c0_i32_0 = arith.constant 0 : i32
    %c0_i32_1 = arith.constant 0 : i32
    return %c0_i32, %c0_i32_0, %1 : i32, i32, i32
  }
  func.func @transform_2(%arg0: i32, %arg1: i32) -> (i32, i32, i32) {
    %c2_i32 = arith.constant 2 : i32
    %0 = arith.muli %arg0, %c2_i32 : i32
    %1 = arith.addi %0, %arg1 : i32
    %c0_i32 = arith.constant 0 : i32
    %c0_i32_0 = arith.constant 0 : i32
    %c0_i32_1 = arith.constant 0 : i32
    return %c0_i32, %1, %c0_i32_0 : i32, i32, i32
  }
  func.func @transform_3(%arg0: i32, %arg1: i32) -> (i32, i32, i32) {
    %c2_i32 = arith.constant 2 : i32
    %0 = arith.muli %arg0, %c2_i32 : i32
    %1 = arith.addi %0, %arg1 : i32
    %c0_i32 = arith.constant 0 : i32
    %c0_i32_0 = arith.constant 0 : i32
    %c0_i32_1 = arith.constant 0 : i32
    return %c0_i32, %1, %c0_i32_0 : i32, i32, i32
  }
  func.func @transform_4(%arg0: i32, %arg1: i32) -> (i32, i32) {
    %c0_i32 = arith.constant 0 : i32
    %c0_i32_0 = arith.constant 0 : i32
    %c0_i32_1 = arith.constant 0 : i32
    return %c0_i32, %c0_i32_0 : i32, i32
  }
  func.func @transform_5(%arg0: i32, %arg1: i32) -> (i32, i32) {
    %c0_i32 = arith.constant 0 : i32
    %c0_i32_0 = arith.constant 0 : i32
    %c0_i32_1 = arith.constant 0 : i32
    return %c0_i32, %c0_i32_0 : i32, i32
  }
  func.func @transform_6(%arg0: i32, %arg1: i32) -> (i32, i32) {
    %c0_i32 = arith.constant 0 : i32
    %c0_i32_0 = arith.constant 0 : i32
    %c0_i32_1 = arith.constant 0 : i32
    return %c0_i32, %c0_i32_0 : i32, i32
  }
  func.func @transform_7(%arg0: i32, %arg1: i32) -> (i32, i32) {
    %c2_i32 = arith.constant 2 : i32
    %0 = arith.muli %arg0, %c2_i32 : i32
    %1 = arith.addi %0, %arg1 : i32
    %c0_i32 = arith.constant 0 : i32
    %c0_i32_0 = arith.constant 0 : i32
    return %c0_i32, %1 : i32, i32
  }
  func.func @transform_8(%arg0: i32, %arg1: i32) -> (i32, i32, i32, i32) {
    %c0_i32 = arith.constant 0 : i32
    %c0_i32_0 = arith.constant 0 : i32
    %c0_i32_1 = arith.constant 0 : i32
    %c0_i32_2 = arith.constant 0 : i32
    return %arg0, %c0_i32, %c0_i32_0, %c0_i32_1 : i32, i32, i32, i32
  }
  func.func @transform_9(%arg0: i32, %arg1: i32) -> (i32, i32, i32, i32) {
    %c0_i32 = arith.constant 0 : i32
    %c0_i32_0 = arith.constant 0 : i32
    %c0_i32_1 = arith.constant 0 : i32
    %c0_i32_2 = arith.constant 0 : i32
    return %arg0, %c0_i32, %c0_i32_0, %c0_i32_1 : i32, i32, i32, i32
  }
  func.func @transform_10(%arg0: i32, %arg1: i32) -> (i32, i32, i32, i32) {
    %c0_i32 = arith.constant 0 : i32
    %c0_i32_0 = arith.constant 0 : i32
    %c0_i32_1 = arith.constant 0 : i32
    %c0_i32_2 = arith.constant 0 : i32
    return %arg0, %c0_i32, %c0_i32_0, %c0_i32_1 : i32, i32, i32, i32
  }
}

</mosaic_0001>

<llo_original>
// kernel: tpu_custom_call.1
$region0: #{tpu_custom_call.1}
  #allocation0 [shape = 'u32[]', space=smem, size = 0x4, offset = 0x4, fixed_abs, tag = 'smem constant byte address 0x4 - core index']
  #allocation1 [shape = 'u32[144,128]{1,0:T(1,128)}', space=vmem, size = 0x12000, scoped, tag = 'internal scratch']
  %s0 = inlined_call_operand.vmem [shape: f32[2,512], index: 0, kind: input, shape index: {}]
  %s1 = inlined_call_operand.vmem [shape: f32[1,1,512], index: 1, kind: input, shape index: {}]
  %s2 = inlined_call_operand.vmem [shape: bf16[2,512,684], index: 2, kind: input, shape index: {}]
  %s3 = inlined_call_operand.vmem [shape: bf16[2,512,121], index: 3, kind: input, shape index: {}]
  %s4 = inlined_call_operand.vmem [shape: bf16[684,512], index: 4, kind: input, shape index: {}]
  %s5 = inlined_call_operand.vmem [shape: bf16[121,512], index: 5, kind: input, shape index: {}]
  %s6 = inlined_call_operand.vmem [shape: bf16[1,512], index: 6, kind: input, shape index: {}]
  %s7 = inlined_call_operand.hbm [shape: f32[2,512], index: 7, kind: output, shape index: {0}]
  %s8 = inlined_call_operand.vmem [shape: f32[2,2,1,1], index: 8, kind: output, shape index: {1}]
  %s9 = inlined_call_operand.vmem [shape: f32[2,2,1,1], index: 9, kind: output, shape index: {2}]
  %s10 = inlined_call_operand.hbm [shape: f32[2,2,1,684], index: 10, kind: output, shape index: {3}]
  %11 = xla_tuple %s7, %s8, %s9, %s10
  %s12 = sld [smem:[#allocation0]]
  $region153: #{tpu_custom_call.1} parent=0
    _
  %s14 = ssub.s32 1, %s12
  %s15 = scalar_select 0, %s14, %s12
  $region1: #{tpu_custom_call.1} parent=0
    #allocation2 [shape = 'u8[786432]{0}', space=vmem, size = 0xc0000, scoped, tag = 'input window, operand 2']
    #allocation3 [shape = 'u8[131072]{0}', space=vmem, size = 0x20000, scoped, tag = 'input window, operand 3']
    #allocation4 [shape = 'u8[2048]{0}', space=vmem, size = 0x800, scoped, tag = 'output window, operand 0']
    #allocation5 [shape = 's32[2]{0}', space=sflag, size = 0x8, scoped, tag = 'scoped memory for tpu_custom_call.1']
    #allocation6 [shape = 'u8[12288]{0}', space=vmem, size = 0x3000, scoped, tag = 'output window, operand 3']
    #allocation7 [shape = 's32[2]{0}', space=sflag, size = 0x8, scoped, tag = 'scoped memory for tpu_custom_call.1']
    %16 = vsyncpa [#allocation5], 0
    %s17 = scalar_lea.sflag [#allocation5], 1
    %18 = vsyncpa %s17, 0
    %19 = vsyncpa [#allocation7], 0
    %s20 = scalar_lea.sflag [#allocation7], 1
    %21 = vsyncpa %s20, 0
    loop: start=0, step=1, limit=6
    $region2: #{tpu_custom_call.1} parent=1 // loop_pre_header
      _
    $region3: #{tpu_custom_call.1} parent=1 // loop_header
      %s23 = sphi 0, %s27
      %p24 = scmp.ge.s32.totalorder %s23, 6
      %s30 = sphi 0, %s42
      %s31 = sphi 0, %s38
      %s32 = sphi 0, %s30
      %s33 = sphi 0, %s31
      %s34 = sphi 0, %s32
      %s35 = sphi 0, %s33
      %s43 = sphi 0, %s43
      %s45 = sphi 0, %s43
      %s46 = sphi 0, %s45
      %s60 = sphi 0, %s46
      %s70 = sphi 0, %s72
      %s73 = sphi 0, %s70
      %s74 = sphi 0, %s73
      %s90 = sphi 0, %s74
      %s100 = sphi 0, %s102
      %s103 = sphi 0, %s100
      %s104 = sphi 0, %s103
      %s120 = sphi 0, %s104
      %s130 = sphi 0, %s132
      %s133 = sphi 0, %s130
      %s134 = sphi 0, %s133
      %s150 = sphi 0, %s134
      %s154 = sphi 0, %s154
      %s156 = sphi 0, %s154
      %s157 = sphi 0, %s156
      %s171 = sphi 0, %s157
      %s175 = sphi 0, %s175
      %s177 = sphi 0, %s175
      %s178 = sphi 0, %s177
      %s192 = sphi 0, %s178
      %s196 = sphi 0, %s196
      %s198 = sphi 0, %s196
      %s199 = sphi 0, %s198
      %s213 = sphi 0, %s199
      %s223 = sphi 0, %s225
      %s226 = sphi 0, %s223
      %s227 = sphi 0, %s226
      %s243 = sphi 0, %s227
      %s249 = sphi 0, %s251
      %s252 = sphi 0, %s249
      %s253 = sphi 0, %s252
      %s269 = sphi 0, %s253
      %s275 = sphi 0, %s277
      %s278 = sphi 0, %s275
      %s279 = sphi 0, %s278
      %s295 = sphi 0, %s279
      %s301 = sphi 0, %s303
      %s304 = sphi 0, %s301
      %s305 = sphi 0, %s304
      %s321 = sphi 0, %s305
    $region4: #{tpu_custom_call.1} parent=1 // loop_header_branch
      %26 = sbr.rel (%p24) target = $region8
    $region5: #{tpu_custom_call.1} parent=1 // loop_body
      %s28 = ssub.s32 %s23, 1
      %s29 = ssub.s32 %s23, 2
      %s36 = sadd.s32 1, %s31
      %p37 = scmp.ge.s32.totalorder %s36, 2
      %s38 = scalar_select %p37, 0, %s36
      %s39 = sadd.s32 1, %s30
      %s40 = scalar_select %p37, %s39, %s30
      %p41 = scmp.ge.s32.totalorder %s40, 2
      %s42 = scalar_select %p41, 0, %s40
      %s44 = sadd.s32 %s43, 1
      %p47 = scmp.eq.s32.totalorder %s23, 3
      %p48 = scmp.ne.s32.totalorder %s43, %s45
      %p49 = scmp.eq.s32.totalorder %s23, 0
      %p50 = por %p48, %p49
      %p51 = scmp.ne.s32.totalorder %s43, %s45
      %p52 = scmp.eq.s32.totalorder %s28, 3
      %p53 = por %p51, %p52
      %p54 = scmp.ne.s32.totalorder %s45, %s46
      %p55 = scmp.eq.s32.totalorder %s28, 0
      %p56 = por %p54, %p55
      %p57 = scmp.ne.s32.totalorder %s45, %s46
      %p58 = scmp.eq.s32.totalorder %s29, 3
      %p59 = por %p57, %p58
      %p61 = scmp.ne.s32.totalorder %s46, %s60
      %p62 = scmp.eq.s32.totalorder %s29, 0
      %p63 = por %p61, %p62
      %s64 = smul.u32 %s30, 2
      %s65 = sadd.s32 %s64, %s31
      %s66 = smul.u32 %s42, 2
      %s67 = sadd.s32 %s66, %s38
      %s68 = ssub.s32 %s65, %s67
      %p69 = scmp.eq.s32.totalorder %s68, 0
      %s71 = sadd.s32 %s70, 1
      %s72 = scalar_select %p69, %s70, %s71
      %p75 = pneg %p69
      %p76 = scmp.eq.s32.totalorder %s23, 3
      %p77 = por %p75, %p76
      %p78 = scmp.ne.s32.totalorder %s70, %s73
      %p79 = scmp.eq.s32.totalorder %s23, 0
      %p80 = por %p78, %p79
      %p81 = scmp.ne.s32.totalorder %s70, %s73
      %p82 = scmp.eq.s32.totalorder %s28, 3
      %p83 = por %p81, %p82
      %p84 = scmp.ne.s32.totalorder %s73, %s74
      %p85 = scmp.eq.s32.totalorder %s28, 0
      %p86 = por %p84, %p85
      %p87 = scmp.ne.s32.totalorder %s73, %s74
      %p88 = scmp.eq.s32.totalorder %s29, 3
      %p89 = por %p87, %p88
      %p91 = scmp.ne.s32.totalorder %s74, %s90
      %p92 = scmp.eq.s32.totalorder %s29, 0
      %p93 = por %p91, %p92
      %s94 = smul.u32 %s30, 2
      %s95 = sadd.s32 %s94, %s31
      %s96 = smul.u32 %s42, 2
      %s97 = sadd.s32 %s96, %s38
      %s98 = ssub.s32 %s95, %s97
      %p99 = scmp.eq.s32.totalorder %s98, 0
      %s101 = sadd.s32 %s100, 1
      %s102 = scalar_select %p99, %s100, %s101
      %p105 = pneg %p99
      %p106 = scmp.eq.s32.totalorder %s23, 3
      %p107 = por %p105, %p106
      %p108 = scmp.ne.s32.totalorder %s100, %s103
      %p109 = scmp.eq.s32.totalorder %s23, 0
      %p110 = por %p108, %p109
      %p111 = scmp.ne.s32.totalorder %s100, %s103
      %p112 = scmp.eq.s32.totalorder %s28, 3
      %p113 = por %p111, %p112
      %p114 = scmp.ne.s32.totalorder %s103, %s104
      %p115 = scmp.eq.s32.totalorder %s28, 0
      %p116 = por %p114, %p115
      %p117 = scmp.ne.s32.totalorder %s103, %s104
      %p118 = scmp.eq.s32.totalorder %s29, 3
      %p119 = por %p117, %p118
      %p121 = scmp.ne.s32.totalorder %s104, %s120
      %p122 = scmp.eq.s32.totalorder %s29, 0
      %p123 = por %p121, %p122
      %s124 = smul.u32 %s30, 2
      %s125 = sadd.s32 %s124, %s31
      %s126 = smul.u32 %s42, 2
      %s127 = sadd.s32 %s126, %s38
      %s128 = ssub.s32 %s125, %s127
      %p129 = scmp.eq.s32.totalorder %s128, 0
      %s131 = sadd.s32 %s130, 1
      %s132 = scalar_select %p129, %s130, %s131
      %p135 = pneg %p129
      %p136 = scmp.eq.s32.totalorder %s23, 3
      %p137 = por %p135, %p136
      %p138 = scmp.ne.s32.totalorder %s130, %s133
      %p139 = scmp.eq.s32.totalorder %s23, 0
      %p140 = por %p138, %p139
      %p141 = scmp.ne.s32.totalorder %s130, %s133
      %p142 = scmp.eq.s32.totalorder %s28, 3
      %p143 = por %p141, %p142
      %p144 = scmp.ne.s32.totalorder %s133, %s134
      %p145 = scmp.eq.s32.totalorder %s28, 0
      %p146 = por %p144, %p145
      %p147 = scmp.ne.s32.totalorder %s133, %s134
      %p148 = scmp.eq.s32.totalorder %s29, 3
      %p149 = por %p147, %p148
      %p151 = scmp.ne.s32.totalorder %s134, %s150
      %p152 = scmp.eq.s32.totalorder %s29, 0
      %p153 = por %p151, %p152
      %s155 = sadd.s32 %s154, 1
      %p158 = scmp.eq.s32.totalorder %s23, 3
      %p159 = scmp.ne.s32.totalorder %s154, %s156
      %p160 = scmp.eq.s32.totalorder %s23, 0
      %p161 = por %p159, %p160
      %p162 = scmp.ne.s32.totalorder %s154, %s156
      %p163 = scmp.eq.s32.totalorder %s28, 3
      %p164 = por %p162, %p163
      %p165 = scmp.ne.s32.totalorder %s156, %s157
      %p166 = scmp.eq.s32.totalorder %s28, 0
      %p167 = por %p165, %p166
      %p168 = scmp.ne.s32.totalorder %s156, %s157
      %p169 = scmp.eq.s32.totalorder %s29, 3
      %p170 = por %p168, %p169
      %p172 = scmp.ne.s32.totalorder %s157, %s171
      %p173 = scmp.eq.s32.totalorder %s29, 0
      %p174 = por %p172, %p173
      %s176 = sadd.s32 %s175, 1
      %p179 = scmp.eq.s32.totalorder %s23, 3
      %p180 = scmp.ne.s32.totalorder %s175, %s177
      %p181 = scmp.eq.s32.totalorder %s23, 0
      %p182 = por %p180, %p181
      %p183 = scmp.ne.s32.totalorder %s175, %s177
      %p184 = scmp.eq.s32.totalorder %s28, 3
      %p185 = por %p183, %p184
      %p186 = scmp.ne.s32.totalorder %s177, %s178
      %p187 = scmp.eq.s32.totalorder %s28, 0
      %p188 = por %p186, %p187
      %p189 = scmp.ne.s32.totalorder %s177, %s178
      %p190 = scmp.eq.s32.totalorder %s29, 3
      %p191 = por %p189, %p190
      %p193 = scmp.ne.s32.totalorder %s178, %s192
      %p194 = scmp.eq.s32.totalorder %s29, 0
      %p195 = por %p193, %p194
      %s197 = sadd.s32 %s196, 1
      %p200 = scmp.eq.s32.totalorder %s23, 3
      %p201 = scmp.ne.s32.totalorder %s196, %s198
      %p202 = scmp.eq.s32.totalorder %s23, 0
      %p203 = por %p201, %p202
      %p204 = scmp.ne.s32.totalorder %s196, %s198
      %p205 = scmp.eq.s32.totalorder %s28, 3
      %p206 = por %p204, %p205
      %p207 = scmp.ne.s32.totalorder %s198, %s199
      %p208 = scmp.eq.s32.totalorder %s28, 0
      %p209 = por %p207, %p208
      %p210 = scmp.ne.s32.totalorder %s198, %s199
      %p211 = scmp.eq.s32.totalorder %s29, 3
      %p212 = por %p210, %p211
      %p214 = scmp.ne.s32.totalorder %s199, %s213
      %p215 = scmp.eq.s32.totalorder %s29, 0
      %p216 = por %p214, %p215
      %s217 = smul.u32 %s30, 2
      %s218 = sadd.s32 %s217, %s31
      %s219 = smul.u32 %s42, 2
      %s220 = sadd.s32 %s219, %s38
      %s221 = ssub.s32 %s218, %s220
      %p222 = scmp.eq.s32.totalorder %s221, 0
      %s224 = sadd.s32 %s223, 1
      %s225 = scalar_select %p222, %s223, %s224
      %p228 = pneg %p222
      %p229 = scmp.eq.s32.totalorder %s23, 3
      %p230 = por %p228, %p229
      %p231 = scmp.ne.s32.totalorder %s223, %s226
      %p232 = scmp.eq.s32.totalorder %s23, 0
      %p233 = por %p231, %p232
      %p234 = scmp.ne.s32.totalorder %s223, %s226
      %p235 = scmp.eq.s32.totalorder %s28, 3
      %p236 = por %p234, %p235
      %p237 = scmp.ne.s32.totalorder %s226, %s227
      %p238 = scmp.eq.s32.totalorder %s28, 0
      %p239 = por %p237, %p238
      %p240 = scmp.ne.s32.totalorder %s226, %s227
      %p241 = scmp.eq.s32.totalorder %s29, 3
      %p242 = por %p240, %p241
      %p244 = scmp.ne.s32.totalorder %s227, %s243
      %p245 = scmp.eq.s32.totalorder %s29, 0
      %p246 = por %p244, %p245
      %s247 = ssub.s32 %s30, %s42
      %p248 = scmp.eq.s32.totalorder %s247, 0
      %s250 = sadd.s32 %s249, 1
      %s251 = scalar_select %p248, %s249, %s250
      %p254 = pneg %p248
      %p255 = scmp.eq.s32.totalorder %s23, 3
      %p256 = por %p254, %p255
      %p257 = scmp.ne.s32.totalorder %s249, %s252
      %p258 = scmp.eq.s32.totalorder %s23, 0
      %p259 = por %p257, %p258
      %p260 = scmp.ne.s32.totalorder %s249, %s252
      %p261 = scmp.eq.s32.totalorder %s28, 3
      %p262 = por %p260, %p261
      %p263 = scmp.ne.s32.totalorder %s252, %s253
      %p264 = scmp.eq.s32.totalorder %s28, 0
      %p265 = por %p263, %p264
      %p266 = scmp.ne.s32.totalorder %s252, %s253
      %p267 = scmp.eq.s32.totalorder %s29, 3
      %p268 = por %p266, %p267
      %p270 = scmp.ne.s32.totalorder %s253, %s269
      %p271 = scmp.eq.s32.totalorder %s29, 0
      %p272 = por %p270, %p271
      %s273 = ssub.s32 %s30, %s42
      %p274 = scmp.eq.s32.totalorder %s273, 0
      %s276 = sadd.s32 %s275, 1
      %s277 = scalar_select %p274, %s275, %s276
      %p280 = pneg %p274
      %p281 = scmp.eq.s32.totalorder %s23, 3
      %p282 = por %p280, %p281
      %p283 = scmp.ne.s32.totalorder %s275, %s278
      %p284 = scmp.eq.s32.totalorder %s23, 0
      %p285 = por %p283, %p284
      %p286 = scmp.ne.s32.totalorder %s275, %s278
      %p287 = scmp.eq.s32.totalorder %s28, 3
      %p288 = por %p286, %p287
      %p289 = scmp.ne.s32.totalorder %s278, %s279
      %p290 = scmp.eq.s32.totalorder %s28, 0
      %p291 = por %p289, %p290
      %p292 = scmp.ne.s32.totalorder %s278, %s279
      %p293 = scmp.eq.s32.totalorder %s29, 3
      %p294 = por %p292, %p293
      %p296 = scmp.ne.s32.totalorder %s279, %s295
      %p297 = scmp.eq.s32.totalorder %s29, 0
      %p298 = por %p296, %p297
      %s299 = ssub.s32 %s30, %s42
      %p300 = scmp.eq.s32.totalorder %s299, 0
      %s302 = sadd.s32 %s301, 1
      %s303 = scalar_select %p300, %s301, %s302
      %p306 = pneg %p300
      %p307 = scmp.eq.s32.totalorder %s23, 3
      %p308 = por %p306, %p307
      %p309 = scmp.ne.s32.totalorder %s301, %s304
      %p310 = scmp.eq.s32.totalorder %s23, 0
      %p311 = por %p309, %p310
      %p312 = scmp.ne.s32.totalorder %s301, %s304
      %p313 = scmp.eq.s32.totalorder %s28, 3
      %p314 = por %p312, %p313
      %p315 = scmp.ne.s32.totalorder %s304, %s305
      %p316 = scmp.eq.s32.totalorder %s28, 0
      %p317 = por %p315, %p316
      %p318 = scmp.ne.s32.totalorder %s304, %s305
      %p319 = scmp.eq.s32.totalorder %s29, 3
      %p320 = por %p318, %p319
      %p322 = scmp.ne.s32.totalorder %s305, %s321
      %p323 = scmp.eq.s32.totalorder %s29, 0
      %p324 = por %p322, %p323
      %p325 = scmp.le.s32.totalorder 1, %s23
      %p326 = scmp.lt.s32.totalorder %s23, 5
      %p327 = pnand %p325, %p326
      %p328 = pneg %p327
      // Predicated region
      $region9: #{tpu_custom_call.1} parent=5 // pred_check
        _
      $region10: #{tpu_custom_call.1} parent=5 // pred_check_branch
        %330 = sbr.rel (%p327) target = $region12
      $region11: #{tpu_custom_call.1} parent=5 // pred_region
        %s331 = ssub.s32 %s23, 1
        // Predicated region
        $region13: #{tpu_custom_call.1} parent=11 // pred_check
          %p332 = pneg %p56
        $region14: #{tpu_custom_call.1} parent=11 // pred_check_branch
          %334 = sbr.rel (%p332) target = $region16
        $region15: #{tpu_custom_call.1} parent=11 // pred_region
          _
        $region16: #{tpu_custom_call.1} parent=11 // pred_fallthru
          _
        // Predicated region
        $region17: #{tpu_custom_call.1} parent=11 // pred_check
          %p335 = pneg %p167
        $region18: #{tpu_custom_call.1} parent=11 // pred_check_branch
          %337 = sbr.rel (%p335) target = $region20
        $region19: #{tpu_custom_call.1} parent=11 // pred_region
          _
        $region20: #{tpu_custom_call.1} parent=11 // pred_fallthru
          _
        // Predicated region
        $region21: #{tpu_custom_call.1} parent=11 // pred_check
          %p338 = pneg %p188
        $region22: #{tpu_custom_call.1} parent=11 // pred_check_branch
          %340 = sbr.rel (%p338) target = $region24
        $region23: #{tpu_custom_call.1} parent=11 // pred_region
          _
        $region24: #{tpu_custom_call.1} parent=11 // pred_fallthru
          _
        // Predicated region
        $region25: #{tpu_custom_call.1} parent=11 // pred_check
          %p341 = pneg %p209
        $region26: #{tpu_custom_call.1} parent=11 // pred_check_branch
          %343 = sbr.rel (%p341) target = $region28
        $region27: #{tpu_custom_call.1} parent=11 // pred_region
          _
        $region28: #{tpu_custom_call.1} parent=11 // pred_fallthru
          _
      $region12: #{tpu_custom_call.1} parent=5 // pred_fallthru
        _
      %p344 = scmp.lt.s32.totalorder %s23, 4
      // Predicated region
      $region29: #{tpu_custom_call.1} parent=5 // pred_check
        %p345 = pneg %p344
      $region30: #{tpu_custom_call.1} parent=5 // pred_check_branch
        %347 = sbr.rel (%p345) target = $region32
      $region31: #{tpu_custom_call.1} parent=5 // pred_region
        // Predicated region
        $region33: #{tpu_custom_call.1} parent=31 // pred_check
          %p348 = pneg %p80
        $region34: #{tpu_custom_call.1} parent=31 // pred_check_branch
          %350 = sbr.rel (%p348) target = $region36
        $region35: #{tpu_custom_call.1} parent=31 // pred_region
          %s351 = smul.u32 %s30, 2
          %s352 = sadd.s32 %s351, %s31
          %p353 = scmp.lt.s32.totalorder %s352, 3
          %s354 = scalar_select %p353, %s352, 3
          %s355 = scalar_lea.vmem %s1, %s354
          %s356 = smul.u32 %s30, 2
          %s357 = sadd.s32 %s356, %s31
        $region36: #{tpu_custom_call.1} parent=31 // pred_fallthru
          _
        // Predicated region
        $region37: #{tpu_custom_call.1} parent=31 // pred_check
          %p358 = pneg %p110
        $region38: #{tpu_custom_call.1} parent=31 // pred_check_branch
          %360 = sbr.rel (%p358) target = $region40
        $region39: #{tpu_custom_call.1} parent=31 // pred_region
          %s361 = sand.u32 %s100, 1
          %s362 = sand.u32 %s100, 1
          %s363 = smul.addr %s362, 768
          %s364 = scalar_lea.vmem [#allocation2], %s363
          %s365 = smul.u32 %s30, 2
          %s366 = sadd.s32 %s365, %s31
          %s367 = smul.u32 16, %s366
          %s368 = smul.addr %s367, 6
          %s369 = smul.addr %s368, 4
          %s370 = scalar_lea.vmem %s2, %s369
          // Predicated region
          $region41: #{tpu_custom_call.1} parent=39 // pred_check
            _
          $region42: #{tpu_custom_call.1} parent=39 // pred_check_branch
            %372 = sbr.rel (0) target = $region44
          $region43: #{tpu_custom_call.1} parent=39 // pred_region
            // Predicated region
            $region45: #{tpu_custom_call.1} parent=43 // pred_check
              _
            $region46: #{tpu_custom_call.1} parent=43 // pred_check_branch
              %374 = sbr.rel (0) target = $region48
            $region47: #{tpu_custom_call.1} parent=43 // pred_region
              loop: start=0, step=1, limit=1
              $region49: #{tpu_custom_call.1} parent=47 // loop_pre_header
                _
              $region50: #{tpu_custom_call.1} parent=47 // loop_header
                %s376 = sphi 0, %s380
                %p377 = scmp.ge.s32.totalorder %s376, 1
                %s381 = sphi %s370, %s370
                %s382 = sphi %s364, %s364
              $region51: #{tpu_custom_call.1} parent=47 // loop_header_branch
                %379 = sbr.rel (%p377) target = $region55
              $region52: #{tpu_custom_call.1} parent=47 // loop_body
                %v383 = vld [vmem:[%s381] sm:$0xff]
                %384 = vst [vmem:[%s382] sm:$0xff] %v383
                %v385 = vld [vmem:[%s381 + $0x8] sm:$0xff]
                %386 = vst [vmem:[%s382 + $0x8] sm:$0xff] %v385
                %v387 = vld [vmem:[%s381 + $0x10] sm:$0xff]
                %388 = vst [vmem:[%s382 + $0x10] sm:$0xff] %v387
                %v389 = vld [vmem:[%s381 + $0x18] sm:$0xff]
                %390 = vst [vmem:[%s382 + $0x18] sm:$0xff] %v389
                %v391 = vld [vmem:[%s381 + $0x20] sm:$0xff]
                %392 = vst [vmem:[%s382 + $0x20] sm:$0xff] %v391
                %v393 = vld [vmem:[%s381 + $0x28] sm:$0xff]
                %394 = vst [vmem:[%s382 + $0x28] sm:$0xff] %v393
                %v395 = vld [vmem:[%s381 + $0x30] sm:$0xff]
                %396 = vst [vmem:[%s382 + $0x30] sm:$0xff] %v395
                %v397 = vld [vmem:[%s381 + $0x38] sm:$0xff]
                %398 = vst [vmem:[%s382 + $0x38] sm:$0xff] %v397
                %v399 = vld [vmem:[%s381 + $0x40] sm:$0xff]
                %400 = vst [vmem:[%s382 + $0x40] sm:$0xff] %v399
                %v401 = vld [vmem:[%s381 + $0x48] sm:$0xff]
                %402 = vst [vmem:[%s382 + $0x48] sm:$0xff] %v401
                %v403 = vld [vmem:[%s381 + $0x50] sm:$0xff]
                %404 = vst [vmem:[%s382 + $0x50] sm:$0xff] %v403
                %v405 = vld [vmem:[%s381 + $0x58] sm:$0xff]
                %406 = vst [vmem:[%s382 + $0x58] sm:$0xff] %v405
                %v407 = vld [vmem:[%s381 + $0x60] sm:$0xff]
                %408 = vst [vmem:[%s382 + $0x60] sm:$0xff] %v407
                %v409 = vld [vmem:[%s381 + $0x68] sm:$0xff]
                %410 = vst [vmem:[%s382 + $0x68] sm:$0xff] %v409
                %v411 = vld [vmem:[%s381 + $0x70] sm:$0xff]
                %412 = vst [vmem:[%s382 + $0x70] sm:$0xff] %v411
                %v413 = vld [vmem:[%s381 + $0x78] sm:$0xff]
                %414 = vst [vmem:[%s382 + $0x78] sm:$0xff] %v413
                %v415 = vld [vmem:[%s381 + $0x80] sm:$0xff]
                %416 = vst [vmem:[%s382 + $0x80] sm:$0xff] %v415
                %v417 = vld [vmem:[%s381 + $0x88] sm:$0xff]
                %418 = vst [vmem:[%s382 + $0x88] sm:$0xff] %v417
                %v419 = vld [vmem:[%s381 + $0x90] sm:$0xff]
                %420 = vst [vmem:[%s382 + $0x90] sm:$0xff] %v419
                %v421 = vld [vmem:[%s381 + $0x98] sm:$0xff]
                %422 = vst [vmem:[%s382 + $0x98] sm:$0xff] %v421
                %v423 = vld [vmem:[%s381 + $0xa0] sm:$0xff]
                %424 = vst [vmem:[%s382 + $0xa0] sm:$0xff] %v423
                %v425 = vld [vmem:[%s381 + $0xa8] sm:$0xff]
                %426 = vst [vmem:[%s382 + $0xa8] sm:$0xff] %v425
                %v427 = vld [vmem:[%s381 + $0xb0] sm:$0xff]
                %428 = vst [vmem:[%s382 + $0xb0] sm:$0xff] %v427
                %v429 = vld [vmem:[%s381 + $0xb8] sm:$0xff]
                %430 = vst [vmem:[%s382 + $0xb8] sm:$0xff] %v429
                %v431 = vld [vmem:[%s381 + $0xc0] sm:$0xff]
                %432 = vst [vmem:[%s382 + $0xc0] sm:$0xff] %v431
                %v433 = vld [vmem:[%s381 + $0xc8] sm:$0xff]
                %434 = vst [vmem:[%s382 + $0xc8] sm:$0xff] %v433
                %v435 = vld [vmem:[%s381 + $0xd0] sm:$0xff]
                %436 = vst [vmem:[%s382 + $0xd0] sm:$0xff] %v435
                %v437 = vld [vmem:[%s381 + $0xd8] sm:$0xff]
                %438 = vst [vmem:[%s382 + $0xd8] sm:$0xff] %v437
                %v439 = vld [vmem:[%s381 + $0xe0] sm:$0xff]
                %440 = vst [vmem:[%s382 + $0xe0] sm:$0xff] %v439
                %v441 = vld [vmem:[%s381 + $0xe8] sm:$0xff]
                %442 = vst [vmem:[%s382 + $0xe8] sm:$0xff] %v441
                %v443 = vld [vmem:[%s381 + $0xf0] sm:$0xff]
                %444 = vst [vmem:[%s382 + $0xf0] sm:$0xff] %v443
                %v445 = vld [vmem:[%s381 + $0xf8] sm:$0xff]
                %446 = vst [vmem:[%s382 + $0xf8] sm:$0xff] %v445
                %v447 = vld [vmem:[%s381 + $0x100] sm:$0xff]
                %448 = vst [vmem:[%s382 + $0x100] sm:$0xff] %v447
                %v449 = vld [vmem:[%s381 + $0x108] sm:$0xff]
                %450 = vst [vmem:[%s382 + $0x108] sm:$0xff] %v449
                %v451 = vld [vmem:[%s381 + $0x110] sm:$0xff]
                %452 = vst [vmem:[%s382 + $0x110] sm:$0xff] %v451
                %v453 = vld [vmem:[%s381 + $0x118] sm:$0xff]
                %454 = vst [vmem:[%s382 + $0x118] sm:$0xff] %v453
                %v455 = vld [vmem:[%s381 + $0x120] sm:$0xff]
                %456 = vst [vmem:[%s382 + $0x120] sm:$0xff] %v455
                %v457 = vld [vmem:[%s381 + $0x128] sm:$0xff]
                %458 = vst [vmem:[%s382 + $0x128] sm:$0xff] %v457
                %v459 = vld [vmem:[%s381 + $0x130] sm:$0xff]
                %460 = vst [vmem:[%s382 + $0x130] sm:$0xff] %v459
                %v461 = vld [vmem:[%s381 + $0x138] sm:$0xff]
                %462 = vst [vmem:[%s382 + $0x138] sm:$0xff] %v461
                %v463 = vld [vmem:[%s381 + $0x140] sm:$0xff]
                %464 = vst [vmem:[%s382 + $0x140] sm:$0xff] %v463
                %v465 = vld [vmem:[%s381 + $0x148] sm:$0xff]
                %466 = vst [vmem:[%s382 + $0x148] sm:$0xff] %v465
                %v467 = vld [vmem:[%s381 + $0x150] sm:$0xff]
                %468 = vst [vmem:[%s382 + $0x150] sm:$0xff] %v467
                %v469 = vld [vmem:[%s381 + $0x158] sm:$0xff]
                %470 = vst [vmem:[%s382 + $0x158] sm:$0xff] %v469
                %v471 = vld [vmem:[%s381 + $0x160] sm:$0xff]
                %472 = vst [vmem:[%s382 + $0x160] sm:$0xff] %v471
                %v473 = vld [vmem:[%s381 + $0x168] sm:$0xff]
                %474 = vst [vmem:[%s382 + $0x168] sm:$0xff] %v473
                %v475 = vld [vmem:[%s381 + $0x170] sm:$0xff]
                %476 = vst [vmem:[%s382 + $0x170] sm:$0xff] %v475
                %v477 = vld [vmem:[%s381 + $0x178] sm:$0xff]
                %478 = vst [vmem:[%s382 + $0x178] sm:$0xff] %v477
                %v479 = vld [vmem:[%s381 + $0x600] sm:$0xff]
                %480 = vst [vmem:[%s382 + $0x180] sm:$0xff] %v479
                %v481 = vld [vmem:[%s381 + $0x608] sm:$0xff]
                %482 = vst [vmem:[%s382 + $0x188] sm:$0xff] %v481
                %v483 = vld [vmem:[%s381 + $0x610] sm:$0xff]
                %484 = vst [vmem:[%s382 + $0x190] sm:$0xff] %v483
                %v485 = vld [vmem:[%s381 + $0x618] sm:$0xff]
                %486 = vst [vmem:[%s382 + $0x198] sm:$0xff] %v485
                %v487 = vld [vmem:[%s381 + $0x620] sm:$0xff]
                %488 = vst [vmem:[%s382 + $0x1a0] sm:$0xff] %v487
                %v489 = vld [vmem:[%s381 + $0x628] sm:$0xff]
                %490 = vst [vmem:[%s382 + $0x1a8] sm:$0xff] %v489
                %v491 = vld [vmem:[%s381 + $0x630] sm:$0xff]
                %492 = vst [vmem:[%s382 + $0x1b0] sm:$0xff] %v491
                %v493 = vld [vmem:[%s381 + $0x638] sm:$0xff]
                %494 = vst [vmem:[%s382 + $0x1b8] sm:$0xff] %v493
                %v495 = vld [vmem:[%s381 + $0x640] sm:$0xff]
                %496 = vst [vmem:[%s382 + $0x1c0] sm:$0xff] %v495
                %v497 = vld [vmem:[%s381 + $0x648] sm:$0xff]
                %498 = vst [vmem:[%s382 + $0x1c8] sm:$0xff] %v497
                %v499 = vld [vmem:[%s381 + $0x650] sm:$0xff]
                %500 = vst [vmem:[%s382 + $0x1d0] sm:$0xff] %v499
                %v501 = vld [vmem:[%s381 + $0x658] sm:$0xff]
                %502 = vst [vmem:[%s382 + $0x1d8] sm:$0xff] %v501
                %v503 = vld [vmem:[%s381 + $0x660] sm:$0xff]
                %504 = vst [vmem:[%s382 + $0x1e0] sm:$0xff] %v503
                %v505 = vld [vmem:[%s381 + $0x668] sm:$0xff]
                %506 = vst [vmem:[%s382 + $0x1e8] sm:$0xff] %v505
                %v507 = vld [vmem:[%s381 + $0x670] sm:$0xff]
                %508 = vst [vmem:[%s382 + $0x1f0] sm:$0xff] %v507
                %v509 = vld [vmem:[%s381 + $0x678] sm:$0xff]
                %510 = vst [vmem:[%s382 + $0x1f8] sm:$0xff] %v509
                %v511 = vld [vmem:[%s381 + $0x680] sm:$0xff]
                %512 = vst [vmem:[%s382 + $0x200] sm:$0xff] %v511
                %v513 = vld [vmem:[%s381 + $0x688] sm:$0xff]
                %514 = vst [vmem:[%s382 + $0x208] sm:$0xff] %v513
                %v515 = vld [vmem:[%s381 + $0x690] sm:$0xff]
                %516 = vst [vmem:[%s382 + $0x210] sm:$0xff] %v515
                %v517 = vld [vmem:[%s381 + $0x698] sm:$0xff]
                %518 = vst [vmem:[%s382 + $0x218] sm:$0xff] %v517
                %v519 = vld [vmem:[%s381 + $0x6a0] sm:$0xff]
                %520 = vst [vmem:[%s382 + $0x220] sm:$0xff] %v519
                %v521 = vld [vmem:[%s381 + $0x6a8] sm:$0xff]
                %522 = vst [vmem:[%s382 + $0x228] sm:$0xff] %v521
                %v523 = vld [vmem:[%s381 + $0x6b0] sm:$0xff]
                %524 = vst [vmem:[%s382 + $0x230] sm:$0xff] %v523
                %v525 = vld [vmem:[%s381 + $0x6b8] sm:$0xff]
                %526 = vst [vmem:[%s382 + $0x238] sm:$0xff] %v525
                %v527 = vld [vmem:[%s381 + $0x6c0] sm:$0xff]
                %528 = vst [vmem:[%s382 + $0x240] sm:$0xff] %v527
                %v529 = vld [vmem:[%s381 + $0x6c8] sm:$0xff]
                %530 = vst [vmem:[%s382 + $0x248] sm:$0xff] %v529
                %v531 = vld [vmem:[%s381 + $0x6d0] sm:$0xff]
                %532 = vst [vmem:[%s382 + $0x250] sm:$0xff] %v531
                %v533 = vld [vmem:[%s381 + $0x6d8] sm:$0xff]
                %534 = vst [vmem:[%s382 + $0x258] sm:$0xff] %v533
                %v535 = vld [vmem:[%s381 + $0x6e0] sm:$0xff]
                %536 = vst [vmem:[%s382 + $0x260] sm:$0xff] %v535
                %v537 = vld [vmem:[%s381 + $0x6e8] sm:$0xff]
                %538 = vst [vmem:[%s382 + $0x268] sm:$0xff] %v537
                %v539 = vld [vmem:[%s381 + $0x6f0] sm:$0xff]
                %540 = vst [vmem:[%s382 + $0x270] sm:$0xff] %v539
                %v541 = vld [vmem:[%s381 + $0x6f8] sm:$0xff]
                %542 = vst [vmem:[%s382 + $0x278] sm:$0xff] %v541
                %v543 = vld [vmem:[%s381 + $0x700] sm:$0xff]
                %544 = vst [vmem:[%s382 + $0x280] sm:$0xff] %v543
                %v545 = vld [vmem:[%s381 + $0x708] sm:$0xff]
                %546 = vst [vmem:[%s382 + $0x288] sm:$0xff] %v545
                %v547 = vld [vmem:[%s381 + $0x710] sm:$0xff]
                %548 = vst [vmem:[%s382 + $0x290] sm:$0xff] %v547
                %v549 = vld [vmem:[%s381 + $0x718] sm:$0xff]
                %550 = vst [vmem:[%s382 + $0x298] sm:$0xff] %v549
                %v551 = vld [vmem:[%s381 + $0x720] sm:$0xff]
                %552 = vst [vmem:[%s382 + $0x2a0] sm:$0xff] %v551
                %v553 = vld [vmem:[%s381 + $0x728] sm:$0xff]
                %554 = vst [vmem:[%s382 + $0x2a8] sm:$0xff] %v553
                %v555 = vld [vmem:[%s381 + $0x730] sm:$0xff]
                %556 = vst [vmem:[%s382 + $0x2b0] sm:$0xff] %v555
                %v557 = vld [vmem:[%s381 + $0x738] sm:$0xff]
                %558 = vst [vmem:[%s382 + $0x2b8] sm:$0xff] %v557
                %v559 = vld [vmem:[%s381 + $0x740] sm:$0xff]
                %560 = vst [vmem:[%s382 + $0x2c0] sm:$0xff] %v559
                %v561 = vld [vmem:[%s381 + $0x748] sm:$0xff]
                %562 = vst [vmem:[%s382 + $0x2c8] sm:$0xff] %v561
                %v563 = vld [vmem:[%s381 + $0x750] sm:$0xff]
                %564 = vst [vmem:[%s382 + $0x2d0] sm:$0xff] %v563
                %v565 = vld [vmem:[%s381 + $0x758] sm:$0xff]
                %566 = vst [vmem:[%s382 + $0x2d8] sm:$0xff] %v565
                %v567 = vld [vmem:[%s381 + $0x760] sm:$0xff]
                %568 = vst [vmem:[%s382 + $0x2e0] sm:$0xff] %v567
                %v569 = vld [vmem:[%s381 + $0x768] sm:$0xff]
                %570 = vst [vmem:[%s382 + $0x2e8] sm:$0xff] %v569
                %v571 = vld [vmem:[%s381 + $0x770] sm:$0xff]
                %572 = vst [vmem:[%s382 + $0x2f0] sm:$0xff] %v571
                %v573 = vld [vmem:[%s381 + $0x778] sm:$0xff]
                %574 = vst [vmem:[%s382 + $0x2f8] sm:$0xff] %v573
              $region53: #{tpu_custom_call.1} parent=47 // loop_footer
                %s380 = sadd.s32 1, %s376
              $region54: #{tpu_custom_call.1} parent=47 // loop_footer_branch
                %375 = sbr.rel target = $region50
              $region55: #{tpu_custom_call.1} parent=47 // loop_exit
                _
            $region48: #{tpu_custom_call.1} parent=43 // pred_fallthru
              _
            // Predicated region
            $region56: #{tpu_custom_call.1} parent=43 // pred_check
              _
            $region57: #{tpu_custom_call.1} parent=43 // pred_check_branch
              %576 = sbr.rel target = $region59
            $region58: #{tpu_custom_call.1} parent=43 // pred_region
              _
            $region59: #{tpu_custom_call.1} parent=43 // pred_fallthru
              _
          $region44: #{tpu_custom_call.1} parent=39 // pred_fallthru
            _
          %577 = vnop
        $region40: #{tpu_custom_call.1} parent=31 // pred_fallthru
          _
        // Predicated region
        $region60: #{tpu_custom_call.1} parent=31 // pred_check
          %p578 = pneg %p140
        $region61: #{tpu_custom_call.1} parent=31 // pred_check_branch
          %580 = sbr.rel (%p578) target = $region63
        $region62: #{tpu_custom_call.1} parent=31 // pred_region
          %s581 = sand.u32 %s130, 1
          %s582 = sand.u32 %s130, 1
          %s583 = smul.addr %s582, 128
          %s584 = scalar_lea.vmem [#allocation3], %s583
          %s585 = smul.u32 %s30, 2
          %s586 = sadd.s32 %s585, %s31
          %s587 = smul.u32 16, %s586
          %s588 = smul.addr %s587, 4
          %s589 = scalar_lea.vmem %s3, %s588
          // Predicated region
          $region64: #{tpu_custom_call.1} parent=62 // pred_check
            _
          $region65: #{tpu_custom_call.1} parent=62 // pred_check_branch
            %591 = sbr.rel (0) target = $region67
          $region66: #{tpu_custom_call.1} parent=62 // pred_region
            // Predicated region
            $region68: #{tpu_custom_call.1} parent=66 // pred_check
              _
            $region69: #{tpu_custom_call.1} parent=66 // pred_check_branch
              %593 = sbr.rel target = $region71
            $region70: #{tpu_custom_call.1} parent=66 // pred_region
              // Predicated region
              $region83: #{tpu_custom_call.1} parent=70 // pred_check
                _
              $region84: #{tpu_custom_call.1} parent=70 // pred_check_branch
                %670 = sbr.rel (0) target = $region86
              $region85: #{tpu_custom_call.1} parent=70 // pred_region
                loop: start=0, step=1, limit=1
                $region87: #{tpu_custom_call.1} parent=85 // loop_pre_header
                  _
                $region88: #{tpu_custom_call.1} parent=85 // loop_header
                  %s672 = sphi 0, %s676
                  %p673 = scmp.ge.s32.totalorder %s672, 1
                  %s677 = sphi %s589, %s589
                  %s678 = sphi %s584, %s584
                $region89: #{tpu_custom_call.1} parent=85 // loop_header_branch
                  %675 = sbr.rel (%p673) target = $region93
                $region90: #{tpu_custom_call.1} parent=85 // loop_body
                  _
                $region91: #{tpu_custom_call.1} parent=85 // loop_footer
                  %s676 = sadd.s32 1, %s672
                $region92: #{tpu_custom_call.1} parent=85 // loop_footer_branch
                  %671 = sbr.rel target = $region88
                $region93: #{tpu_custom_call.1} parent=85 // loop_exit
                  _
                loop: start=0, step=1, limit=1
                $region94: #{tpu_custom_call.1} parent=85 // loop_pre_header
                  _
                $region95: #{tpu_custom_call.1} parent=85 // loop_header
                  %s681 = sphi 0, %s685
                  %p682 = scmp.ge.s32.totalorder %s681, 1
                  %s686 = sphi %s589, %s589
                  %s687 = sphi %s584, %s584
                $region96: #{tpu_custom_call.1} parent=85 // loop_header_branch
                  %684 = sbr.rel (%p682) target = $region100
                $region97: #{tpu_custom_call.1} parent=85 // loop_body
                  %v688 = vld [vmem:[%s686] sm:$0xf]
                  %689 = vst [vmem:[%s687] sm:$0xf] %v688
                  %v690 = vld [vmem:[%s686 + $0x4] sm:$0xf]
                  %691 = vst [vmem:[%s687 + $0x4] sm:$0xf] %v690
                  %v692 = vld [vmem:[%s686 + $0x8] sm:$0xf]
                  %693 = vst [vmem:[%s687 + $0x8] sm:$0xf] %v692
                  %v694 = vld [vmem:[%s686 + $0xc] sm:$0xf]
                  %695 = vst [vmem:[%s687 + $0xc] sm:$0xf] %v694
                  %v696 = vld [vmem:[%s686 + $0x10] sm:$0xf]
                  %697 = vst [vmem:[%s687 + $0x10] sm:$0xf] %v696
                  %v698 = vld [vmem:[%s686 + $0x14] sm:$0xf]
                  %699 = vst [vmem:[%s687 + $0x14] sm:$0xf] %v698
                  %v700 = vld [vmem:[%s686 + $0x18] sm:$0xf]
                  %701 = vst [vmem:[%s687 + $0x18] sm:$0xf] %v700
                  %v702 = vld [vmem:[%s686 + $0x1c] sm:$0xf]
                  %703 = vst [vmem:[%s687 + $0x1c] sm:$0xf] %v702
                  %v704 = vld [vmem:[%s686 + $0x20] sm:$0xf]
                  %705 = vst [vmem:[%s687 + $0x20] sm:$0xf] %v704
                  %v706 = vld [vmem:[%s686 + $0x24] sm:$0xf]
                  %707 = vst [vmem:[%s687 + $0x24] sm:$0xf] %v706
                  %v708 = vld [vmem:[%s686 + $0x28] sm:$0xf]
                  %709 = vst [vmem:[%s687 + $0x28] sm:$0xf] %v708
                  %v710 = vld [vmem:[%s686 + $0x2c] sm:$0xf]
                  %711 = vst [vmem:[%s687 + $0x2c] sm:$0xf] %v710
                  %v712 = vld [vmem:[%s686 + $0x30] sm:$0xf]
                  %713 = vst [vmem:[%s687 + $0x30] sm:$0xf] %v712
                  %v714 = vld [vmem:[%s686 + $0x34] sm:$0xf]
                  %715 = vst [vmem:[%s687 + $0x34] sm:$0xf] %v714
                  %v716 = vld [vmem:[%s686 + $0x38] sm:$0xf]
                  %717 = vst [vmem:[%s687 + $0x38] sm:$0xf] %v716
                  %v718 = vld [vmem:[%s686 + $0x3c] sm:$0xf]
                  %719 = vst [vmem:[%s687 + $0x3c] sm:$0xf] %v718
                  %v720 = vld [vmem:[%s686 + $0x100] sm:$0xf]
                  %721 = vst [vmem:[%s687 + $0x40] sm:$0xf] %v720
                  %v722 = vld [vmem:[%s686 + $0x104] sm:$0xf]
                  %723 = vst [vmem:[%s687 + $0x44] sm:$0xf] %v722
                  %v724 = vld [vmem:[%s686 + $0x108] sm:$0xf]
                  %725 = vst [vmem:[%s687 + $0x48] sm:$0xf] %v724
                  %v726 = vld [vmem:[%s686 + $0x10c] sm:$0xf]
                  %727 = vst [vmem:[%s687 + $0x4c] sm:$0xf] %v726
                  %v728 = vld [vmem:[%s686 + $0x110] sm:$0xf]
                  %729 = vst [vmem:[%s687 + $0x50] sm:$0xf] %v728
                  %v730 = vld [vmem:[%s686 + $0x114] sm:$0xf]
                  %731 = vst [vmem:[%s687 + $0x54] sm:$0xf] %v730
                  %v732 = vld [vmem:[%s686 + $0x118] sm:$0xf]
                  %733 = vst [vmem:[%s687 + $0x58] sm:$0xf] %v732
                  %v734 = vld [vmem:[%s686 + $0x11c] sm:$0xf]
                  %735 = vst [vmem:[%s687 + $0x5c] sm:$0xf] %v734
                  %v736 = vld [vmem:[%s686 + $0x120] sm:$0xf]
                  %737 = vst [vmem:[%s687 + $0x60] sm:$0xf] %v736
                  %v738 = vld [vmem:[%s686 + $0x124] sm:$0xf]
                  %739 = vst [vmem:[%s687 + $0x64] sm:$0xf] %v738
                  %v740 = vld [vmem:[%s686 + $0x128] sm:$0xf]
                  %741 = vst [vmem:[%s687 + $0x68] sm:$0xf] %v740
                  %v742 = vld [vmem:[%s686 + $0x12c] sm:$0xf]
                  %743 = vst [vmem:[%s687 + $0x6c] sm:$0xf] %v742
                  %v744 = vld [vmem:[%s686 + $0x130] sm:$0xf]
                  %745 = vst [vmem:[%s687 + $0x70] sm:$0xf] %v744
                  %v746 = vld [vmem:[%s686 + $0x134] sm:$0xf]
                  %747 = vst [vmem:[%s687 + $0x74] sm:$0xf] %v746
                  %v748 = vld [vmem:[%s686 + $0x138] sm:$0xf]
                  %749 = vst [vmem:[%s687 + $0x78] sm:$0xf] %v748
                  %v750 = vld [vmem:[%s686 + $0x13c] sm:$0xf]
                  %751 = vst [vmem:[%s687 + $0x7c] sm:$0xf] %v750
                $region98: #{tpu_custom_call.1} parent=85 // loop_footer
                  %s685 = sadd.s32 1, %s681
                $region99: #{tpu_custom_call.1} parent=85 // loop_footer_branch
                  %680 = sbr.rel target = $region95
                $region100: #{tpu_custom_call.1} parent=85 // loop_exit
                  _
              $region86: #{tpu_custom_call.1} parent=70 // pred_fallthru
                _
            $region71: #{tpu_custom_call.1} parent=66 // pred_fallthru
              _
            // Predicated region
            $region72: #{tpu_custom_call.1} parent=66 // pred_check
              _
            $region73: #{tpu_custom_call.1} parent=66 // pred_check_branch
              %595 = sbr.rel (0) target = $region75
            $region74: #{tpu_custom_call.1} parent=66 // pred_region
              loop: start=0, step=1, limit=1
              $region76: #{tpu_custom_call.1} parent=74 // loop_pre_header
                _
              $region77: #{tpu_custom_call.1} parent=74 // loop_header
                %s598 = sphi 0, %s602
                %p599 = scmp.ge.s32.totalorder %s598, 1
                %s603 = sphi %s589, %s589
                %s604 = sphi %s584, %s584
              $region78: #{tpu_custom_call.1} parent=74 // loop_header_branch
                %601 = sbr.rel (%p599) target = $region82
              $region79: #{tpu_custom_call.1} parent=74 // loop_body
                %v605 = vld [vmem:[%s603] sm:$0xf]
                %606 = vst [vmem:[%s604] sm:$0xf] %v605
                %v607 = vld [vmem:[%s603 + $0x4] sm:$0xf]
                %608 = vst [vmem:[%s604 + $0x4] sm:$0xf] %v607
                %v609 = vld [vmem:[%s603 + $0x8] sm:$0xf]
                %610 = vst [vmem:[%s604 + $0x8] sm:$0xf] %v609
                %v611 = vld [vmem:[%s603 + $0xc] sm:$0xf]
                %612 = vst [vmem:[%s604 + $0xc] sm:$0xf] %v611
                %v613 = vld [vmem:[%s603 + $0x10] sm:$0xf]
                %614 = vst [vmem:[%s604 + $0x10] sm:$0xf] %v613
                %v615 = vld [vmem:[%s603 + $0x14] sm:$0xf]
                %616 = vst [vmem:[%s604 + $0x14] sm:$0xf] %v615
                %v617 = vld [vmem:[%s603 + $0x18] sm:$0xf]
                %618 = vst [vmem:[%s604 + $0x18] sm:$0xf] %v617
                %v619 = vld [vmem:[%s603 + $0x1c] sm:$0xf]
                %620 = vst [vmem:[%s604 + $0x1c] sm:$0xf] %v619
                %v621 = vld [vmem:[%s603 + $0x20] sm:$0xf]
                %622 = vst [vmem:[%s604 + $0x20] sm:$0xf] %v621
                %v623 = vld [vmem:[%s603 + $0x24] sm:$0xf]
                %624 = vst [vmem:[%s604 + $0x24] sm:$0xf] %v623
                %v625 = vld [vmem:[%s603 + $0x28] sm:$0xf]
                %626 = vst [vmem:[%s604 + $0x28] sm:$0xf] %v625
                %v627 = vld [vmem:[%s603 + $0x2c] sm:$0xf]
                %628 = vst [vmem:[%s604 + $0x2c] sm:$0xf] %v627
                %v629 = vld [vmem:[%s603 + $0x30] sm:$0xf]
                %630 = vst [vmem:[%s604 + $0x30] sm:$0xf] %v629
                %v631 = vld [vmem:[%s603 + $0x34] sm:$0xf]
                %632 = vst [vmem:[%s604 + $0x34] sm:$0xf] %v631
                %v633 = vld [vmem:[%s603 + $0x38] sm:$0xf]
                %634 = vst [vmem:[%s604 + $0x38] sm:$0xf] %v633
                %v635 = vld [vmem:[%s603 + $0x3c] sm:$0xf]
                %636 = vst [vmem:[%s604 + $0x3c] sm:$0xf] %v635
                %v637 = vld [vmem:[%s603 + $0x100] sm:$0xf]
                %638 = vst [vmem:[%s604 + $0x40] sm:$0xf] %v637
                %v639 = vld [vmem:[%s603 + $0x104] sm:$0xf]
                %640 = vst [vmem:[%s604 + $0x44] sm:$0xf] %v639
                %v641 = vld [vmem:[%s603 + $0x108] sm:$0xf]
                %642 = vst [vmem:[%s604 + $0x48] sm:$0xf] %v641
                %v643 = vld [vmem:[%s603 + $0x10c] sm:$0xf]
                %644 = vst [vmem:[%s604 + $0x4c] sm:$0xf] %v643
                %v645 = vld [vmem:[%s603 + $0x110] sm:$0xf]
                %646 = vst [vmem:[%s604 + $0x50] sm:$0xf] %v645
                %v647 = vld [vmem:[%s603 + $0x114] sm:$0xf]
                %648 = vst [vmem:[%s604 + $0x54] sm:$0xf] %v647
                %v649 = vld [vmem:[%s603 + $0x118] sm:$0xf]
                %650 = vst [vmem:[%s604 + $0x58] sm:$0xf] %v649
                %v651 = vld [vmem:[%s603 + $0x11c] sm:$0xf]
                %652 = vst [vmem:[%s604 + $0x5c] sm:$0xf] %v651
                %v653 = vld [vmem:[%s603 + $0x120] sm:$0xf]
                %654 = vst [vmem:[%s604 + $0x60] sm:$0xf] %v653
                %v655 = vld [vmem:[%s603 + $0x124] sm:$0xf]
                %656 = vst [vmem:[%s604 + $0x64] sm:$0xf] %v655
                %v657 = vld [vmem:[%s603 + $0x128] sm:$0xf]
                %658 = vst [vmem:[%s604 + $0x68] sm:$0xf] %v657
                %v659 = vld [vmem:[%s603 + $0x12c] sm:$0xf]
                %660 = vst [vmem:[%s604 + $0x6c] sm:$0xf] %v659
                %v661 = vld [vmem:[%s603 + $0x130] sm:$0xf]
                %662 = vst [vmem:[%s604 + $0x70] sm:$0xf] %v661
                %v663 = vld [vmem:[%s603 + $0x134] sm:$0xf]
                %664 = vst [vmem:[%s604 + $0x74] sm:$0xf] %v663
                %v665 = vld [vmem:[%s603 + $0x138] sm:$0xf]
                %666 = vst [vmem:[%s604 + $0x78] sm:$0xf] %v665
                %v667 = vld [vmem:[%s603 + $0x13c] sm:$0xf]
                %668 = vst [vmem:[%s604 + $0x7c] sm:$0xf] %v667
              $region80: #{tpu_custom_call.1} parent=74 // loop_footer
                %s602 = sadd.s32 1, %s598
              $region81: #{tpu_custom_call.1} parent=74 // loop_footer_branch
                %597 = sbr.rel target = $region77
              $region82: #{tpu_custom_call.1} parent=74 // loop_exit
                _
            $region75: #{tpu_custom_call.1} parent=66 // pred_fallthru
              _
          $region67: #{tpu_custom_call.1} parent=62 // pred_fallthru
            _
          %752 = vnop
        $region63: #{tpu_custom_call.1} parent=31 // pred_fallthru
          _
      $region32: #{tpu_custom_call.1} parent=5 // pred_fallthru
        _
      %p753 = scmp.le.s32.totalorder 1, %s23
      %p754 = scmp.lt.s32.totalorder %s23, 5
      %p755 = pnand %p753, %p754
      %p756 = pneg %p755
      // Predicated region
      $region101: #{tpu_custom_call.1} parent=5 // pred_check
        _
      $region102: #{tpu_custom_call.1} parent=5 // pred_check_branch
        %758 = sbr.rel (%p755) target = $region104
      $region103: #{tpu_custom_call.1} parent=5 // pred_region
        %s759 = ssub.s32 %s23, 1
        %s760 = sand.u32 %s103, 1
        %s761 = sand.u32 %s103, 1
        %s762 = smul.addr %s761, 768
        %s763 = scalar_lea.vmem [#allocation2], %s762
        // Predicated region
        $region105: #{tpu_custom_call.1} parent=103 // pred_check
          %p764 = pneg %p116
        $region106: #{tpu_custom_call.1} parent=103 // pred_check_branch
          %766 = sbr.rel (%p764) target = $region108
        $region107: #{tpu_custom_call.1} parent=103 // pred_region
          _
        $region108: #{tpu_custom_call.1} parent=103 // pred_fallthru
          _
        %s767 = sand.u32 %s133, 1
        %s768 = sand.u32 %s133, 1
        %s769 = smul.addr %s768, 128
        %s770 = scalar_lea.vmem [#allocation3], %s769
        // Predicated region
        $region109: #{tpu_custom_call.1} parent=103 // pred_check
          %p771 = pneg %p146
        $region110: #{tpu_custom_call.1} parent=103 // pred_check_branch
          %773 = sbr.rel (%p771) target = $region112
        $region111: #{tpu_custom_call.1} parent=103 // pred_region
          _
        $region112: #{tpu_custom_call.1} parent=103 // pred_fallthru
          _
        %p774 = pneg %p56
        %p775 = pneg %p53
        %s776 = smul.u32 %s32, 2
        %s777 = sadd.s32 %s776, %s33
        %p778 = scmp.lt.s32.totalorder %s777, 3
        %s779 = scalar_select %p778, %s777, 3
        %s780 = scalar_lea.vmem %s1, %s779
        %p781 = pneg %p86
        %p782 = pneg %p83
        %s783 = sand.u32 %s103, 1
        %s784 = sand.u32 %s103, 1
        %s785 = smul.addr %s784, 768
        %s786 = scalar_lea.vmem [#allocation2], %s785
        %p787 = pneg %p116
        %p788 = pneg %p113
        %s789 = sand.u32 %s133, 1
        %s790 = sand.u32 %s133, 1
        %s791 = smul.addr %s790, 128
        %s792 = scalar_lea.vmem [#allocation3], %s791
        %p793 = pneg %p146
        %p794 = pneg %p143
        %p795 = pneg %p167
        %p796 = pneg %p164
        %p797 = pneg %p188
        %p798 = pneg %p185
        %p799 = pneg %p209
        %p800 = pneg %p206
        %p801 = pneg %p239
        %p802 = pneg %p236
        %s803 = sand.u32 %s226, 1
        %s804 = scalar_lea.sflag [#allocation5], %s803
        %s805 = sand.u32 %s226, 1
        %s806 = smul.addr %s805, 2
        %s807 = scalar_lea.vmem [#allocation4], %s806
        %p808 = pneg %p265
        %p809 = pneg %p262
        %p810 = scmp.lt.s32.totalorder %s32, 1
        %s811 = scalar_select %p810, %s32, 1
        %s812 = smul.addr %s811, 2
        %s813 = scalar_lea.vmem %s8, %s812
        %p814 = pneg %p291
        %p815 = pneg %p288
        %p816 = scmp.lt.s32.totalorder %s32, 1
        %s817 = scalar_select %p816, %s32, 1
        %s818 = smul.addr %s817, 2
        %s819 = scalar_lea.vmem %s9, %s818
        %p820 = pneg %p317
        %p821 = pneg %p314
        %s822 = sand.u32 %s304, 1
        %s823 = scalar_lea.sflag [#allocation7], %s822
        %s824 = sand.u32 %s304, 1
        %s825 = smul.addr %s824, 12
        %s826 = scalar_lea.vmem [#allocation6], %s825
        %s827 = smul.u32 %s32, 2
        %s828 = sadd.s32 %s827, %s33
        %p829 = scmp.lt.s32.totalorder %s828, 3
        %s830 = scalar_select %p829, %s828, 3
        %s831 = scalar_lea.vmem %s1, %s830
        %s832 = smul.u32 %s32, 2
        %s833 = sadd.s32 %s832, %s33
        %s834 = smul.u32 %s32, 2
        %s835 = sadd.s32 %s834, %s33
        %s836 = smul.u32 16, %s835
        %s837 = smul.u32 %s32, 2
        %s838 = sadd.s32 %s837, %s33
        %s839 = smul.u32 16, %s838
        %s840 = smul.u32 %s32, 2
        %s841 = sadd.s32 %s840, %s33
        %p842 = scmp.lt.s32.totalorder %s32, 1
        %s843 = scalar_select %p842, %s32, 1
        %s844 = smul.addr %s843, 2
        %s845 = scalar_lea.vmem %s8, %s844
        %p846 = scmp.lt.s32.totalorder %s32, 1
        %s847 = scalar_select %p846, %s32, 1
        %s848 = smul.addr %s847, 2
        %s849 = scalar_lea.vmem %s9, %s848
        %p851 = scmp.eq.s32.totalorder %s33, 0
        // Predicated region
        $region113: #{tpu_custom_call.1} parent=103 // pred_check
          %p852 = pneg %p851
        $region114: #{tpu_custom_call.1} parent=103 // pred_check_branch
          %854 = sbr.rel (%p852) target = $region116
        $region115: #{tpu_custom_call.1} parent=103 // pred_region
          %vm855 = vcmask 0
          %856 = vst.msk [vmem:[%s845] sm:$0x1] %vm855, -inf
          %857 = vst.msk [vmem:[%s845 + $0x1] sm:$0x1] %vm855, -inf
          %858 = vst.msk [vmem:[%s849] sm:$0x1] %vm855, 0.0
          %859 = vst.msk [vmem:[%s849 + $0x1] sm:$0x1] %vm855, 0.0
          %v860 = vlaneseq
          %vm861 = vcmp.ge.s32.totalorder %v860, 0
          %vm862 = vcmp.lt.s32.totalorder %v860, 684
          %vm863 = vmand %vm861, %vm862
          %864 = vst.msk [vmem:[%s826] sm:$0x3f] %vm863, 0.0
          %865 = vst.msk [vmem:[%s826 + $0x6] sm:$0x3f] %vm863, 0.0
        $region116: #{tpu_custom_call.1} parent=103 // pred_fallthru
          _
        %v866 = vld [vmem:[%s763] sm:$0xff]
        %v867 = vld [vmem:[%s763 + $0x8] sm:$0xff]
        %v868 = vld [vmem:[%s763 + $0x10] sm:$0xff]
        %v869 = vld [vmem:[%s763 + $0x18] sm:$0xff]
        %v870 = vld [vmem:[%s763 + $0x20] sm:$0xff]
        %v871 = vld [vmem:[%s763 + $0x28] sm:$0xff]
        %v872 = vld [vmem:[%s763 + $0x30] sm:$0xff]
        %v873 = vld [vmem:[%s763 + $0x38] sm:$0xff]
        %v874 = vld [vmem:[%s763 + $0x40] sm:$0xff]
        %v875 = vld [vmem:[%s763 + $0x48] sm:$0xff]
        %v876 = vld [vmem:[%s763 + $0x50] sm:$0xff]
        %v877 = vld [vmem:[%s763 + $0x58] sm:$0xff]
        %v878 = vld [vmem:[%s763 + $0x60] sm:$0xff]
        %v879 = vld [vmem:[%s763 + $0x68] sm:$0xff]
        %v880 = vld [vmem:[%s763 + $0x70] sm:$0xff]
        %v881 = vld [vmem:[%s763 + $0x78] sm:$0xff]
        %v882 = vld [vmem:[%s763 + $0x80] sm:$0xff]
        %v883 = vld [vmem:[%s763 + $0x88] sm:$0xff]
        %v884 = vld [vmem:[%s763 + $0x90] sm:$0xff]
        %v885 = vld [vmem:[%s763 + $0x98] sm:$0xff]
        %v886 = vld [vmem:[%s763 + $0xa0] sm:$0xff]
        %v887 = vld [vmem:[%s763 + $0xa8] sm:$0xff]
        %v888 = vld [vmem:[%s763 + $0xb0] sm:$0xff]
        %v889 = vld [vmem:[%s763 + $0xb8] sm:$0xff]
        %v890 = vld [vmem:[%s763 + $0xc0] sm:$0xff]
        %v891 = vld [vmem:[%s763 + $0xc8] sm:$0xff]
        %v892 = vld [vmem:[%s763 + $0xd0] sm:$0xff]
        %v893 = vld [vmem:[%s763 + $0xd8] sm:$0xff]
        %v894 = vld [vmem:[%s763 + $0xe0] sm:$0xff]
        %v895 = vld [vmem:[%s763 + $0xe8] sm:$0xff]
        %v896 = vld [vmem:[%s763 + $0xf0] sm:$0xff]
        %v897 = vld [vmem:[%s763 + $0xf8] sm:$0xff]
        %v898 = vld [vmem:[%s763 + $0x100] sm:$0xff]
        %v899 = vld [vmem:[%s763 + $0x108] sm:$0xff]
        %v900 = vld [vmem:[%s763 + $0x110] sm:$0xff]
        %v901 = vld [vmem:[%s763 + $0x118] sm:$0xff]
        %v902 = vld [vmem:[%s763 + $0x120] sm:$0xff]
        %v903 = vld [vmem:[%s763 + $0x128] sm:$0xff]
        %v904 = vld [vmem:[%s763 + $0x130] sm:$0xff]
        %v905 = vld [vmem:[%s763 + $0x138] sm:$0xff]
        %v906 = vld [vmem:[%s763 + $0x140] sm:$0xff]
        %v907 = vld [vmem:[%s763 + $0x148] sm:$0xff]
        %v908 = vld [vmem:[%s763 + $0x150] sm:$0xff]
        %v909 = vld [vmem:[%s763 + $0x158] sm:$0xff]
        %v910 = vld [vmem:[%s763 + $0x160] sm:$0xff]
        %v911 = vld [vmem:[%s763 + $0x168] sm:$0xff]
        %v912 = vld [vmem:[%s763 + $0x170] sm:$0xff]
        %v913 = vld [vmem:[%s763 + $0x178] sm:$0xff]
        %v914 = vld [vmem:[%s763 + $0x180] sm:$0xff]
        %v915 = vld [vmem:[%s763 + $0x188] sm:$0xff]
        %v916 = vld [vmem:[%s763 + $0x190] sm:$0xff]
        %v917 = vld [vmem:[%s763 + $0x198] sm:$0xff]
        %v918 = vld [vmem:[%s763 + $0x1a0] sm:$0xff]
        %v919 = vld [vmem:[%s763 + $0x1a8] sm:$0xff]
        %v920 = vld [vmem:[%s763 + $0x1b0] sm:$0xff]
        %v921 = vld [vmem:[%s763 + $0x1b8] sm:$0xff]
        %v922 = vld [vmem:[%s763 + $0x1c0] sm:$0xff]
        %v923 = vld [vmem:[%s763 + $0x1c8] sm:$0xff]
        %v924 = vld [vmem:[%s763 + $0x1d0] sm:$0xff]
        %v925 = vld [vmem:[%s763 + $0x1d8] sm:$0xff]
        %v926 = vld [vmem:[%s763 + $0x1e0] sm:$0xff]
        %v927 = vld [vmem:[%s763 + $0x1e8] sm:$0xff]
        %v928 = vld [vmem:[%s763 + $0x1f0] sm:$0xff]
        %v929 = vld [vmem:[%s763 + $0x1f8] sm:$0xff]
        %v930 = vld [vmem:[%s763 + $0x200] sm:$0xff]
        %v931 = vld [vmem:[%s763 + $0x208] sm:$0xff]
        %v932 = vld [vmem:[%s763 + $0x210] sm:$0xff]
        %v933 = vld [vmem:[%s763 + $0x218] sm:$0xff]
        %v934 = vld [vmem:[%s763 + $0x220] sm:$0xff]
        %v935 = vld [vmem:[%s763 + $0x228] sm:$0xff]
        %v936 = vld [vmem:[%s763 + $0x230] sm:$0xff]
        %v937 = vld [vmem:[%s763 + $0x238] sm:$0xff]
        %v938 = vld [vmem:[%s763 + $0x240] sm:$0xff]
        %v939 = vld [vmem:[%s763 + $0x248] sm:$0xff]
        %v940 = vld [vmem:[%s763 + $0x250] sm:$0xff]
        %v941 = vld [vmem:[%s763 + $0x258] sm:$0xff]
        %v942 = vld [vmem:[%s763 + $0x260] sm:$0xff]
        %v943 = vld [vmem:[%s763 + $0x268] sm:$0xff]
        %v944 = vld [vmem:[%s763 + $0x270] sm:$0xff]
        %v945 = vld [vmem:[%s763 + $0x278] sm:$0xff]
        %v946 = vld [vmem:[%s763 + $0x280] sm:$0xff]
        %v947 = vld [vmem:[%s763 + $0x288] sm:$0xff]
        %v948 = vld [vmem:[%s763 + $0x290] sm:$0xff]
        %v949 = vld [vmem:[%s763 + $0x298] sm:$0xff]
        %v950 = vld [vmem:[%s763 + $0x2a0] sm:$0xff]
        %v951 = vld [vmem:[%s763 + $0x2a8] sm:$0xff]
        %v952 = vld [vmem:[%s763 + $0x2b0] sm:$0xff]
        %v953 = vld [vmem:[%s763 + $0x2b8] sm:$0xff]
        %v954 = vld [vmem:[%s763 + $0x2c0] sm:$0xff]
        %v955 = vld [vmem:[%s763 + $0x2c8] sm:$0xff]
        %v956 = vld [vmem:[%s763 + $0x2d0] sm:$0xff]
        %v957 = vld [vmem:[%s763 + $0x2d8] sm:$0xff]
        %v958 = vld [vmem:[%s763 + $0x2e0] sm:$0xff]
        %v959 = vld [vmem:[%s763 + $0x2e8] sm:$0xff]
        %v960 = vld [vmem:[%s763 + $0x2f0] sm:$0xff]
        %v961 = vld [vmem:[%s763 + $0x2f8] sm:$0xff]
        %v962 = vld [vmem:[%s770] sm:$0xf]
        %v963 = vld [vmem:[%s770 + $0x4] sm:$0xf]
        %v964 = vld [vmem:[%s770 + $0x8] sm:$0xf]
        %v965 = vld [vmem:[%s770 + $0xc] sm:$0xf]
        %v966 = vld [vmem:[%s770 + $0x10] sm:$0xf]
        %v967 = vld [vmem:[%s770 + $0x14] sm:$0xf]
        %v968 = vld [vmem:[%s770 + $0x18] sm:$0xf]
        %v969 = vld [vmem:[%s770 + $0x1c] sm:$0xf]
        %v970 = vld [vmem:[%s770 + $0x20] sm:$0xf]
        %v971 = vld [vmem:[%s770 + $0x24] sm:$0xf]
        %v972 = vld [vmem:[%s770 + $0x28] sm:$0xf]
        %v973 = vld [vmem:[%s770 + $0x2c] sm:$0xf]
        %v974 = vld [vmem:[%s770 + $0x30] sm:$0xf]
        %v975 = vld [vmem:[%s770 + $0x34] sm:$0xf]
        %v976 = vld [vmem:[%s770 + $0x38] sm:$0xf]
        %v977 = vld [vmem:[%s770 + $0x3c] sm:$0xf]
        %v978 = vld [vmem:[%s770 + $0x40] sm:$0xf]
        %v979 = vld [vmem:[%s770 + $0x44] sm:$0xf]
        %v980 = vld [vmem:[%s770 + $0x48] sm:$0xf]
        %v981 = vld [vmem:[%s770 + $0x4c] sm:$0xf]
        %v982 = vld [vmem:[%s770 + $0x50] sm:$0xf]
        %v983 = vld [vmem:[%s770 + $0x54] sm:$0xf]
        %v984 = vld [vmem:[%s770 + $0x58] sm:$0xf]
        %v985 = vld [vmem:[%s770 + $0x5c] sm:$0xf]
        %v986 = vld [vmem:[%s770 + $0x60] sm:$0xf]
        %v987 = vld [vmem:[%s770 + $0x64] sm:$0xf]
        %v988 = vld [vmem:[%s770 + $0x68] sm:$0xf]
        %v989 = vld [vmem:[%s770 + $0x6c] sm:$0xf]
        %v990 = vld [vmem:[%s770 + $0x70] sm:$0xf]
        %v991 = vld [vmem:[%s770 + $0x74] sm:$0xf]
        %v992 = vld [vmem:[%s770 + $0x78] sm:$0xf]
        %v993 = vld [vmem:[%s770 + $0x7c] sm:$0xf]
        %v994 = vld [vmem:[%s4] sm:$0xff]
        %v995 = vld [vmem:[%s4 + $0x8] sm:$0xff]
        %v996 = vld [vmem:[%s4 + $0x10] sm:$0xff]
        %v997 = vld [vmem:[%s4 + $0x18] sm:$0xff]
        %v998 = vld [vmem:[%s4 + $0x20] sm:$0xff]
        %v999 = vld [vmem:[%s4 + $0x28] sm:$0xff]
        %v1000 = vld [vmem:[%s4 + $0x30] sm:$0xff]
        %v1001 = vld [vmem:[%s4 + $0x38] sm:$0xff]
        %v1002 = vld [vmem:[%s4 + $0x40] sm:$0xff]
        %v1003 = vld [vmem:[%s4 + $0x48] sm:$0xff]
        %v1004 = vld [vmem:[%s4 + $0x50] sm:$0xff]
        %v1005 = vld [vmem:[%s4 + $0x58] sm:$0xff]
        %v1006 = vld [vmem:[%s4 + $0x60] sm:$0xff]
        %v1007 = vld [vmem:[%s4 + $0x68] sm:$0xff]
        %v1008 = vld [vmem:[%s4 + $0x70] sm:$0xff]
        %v1009 = vld [vmem:[%s4 + $0x78] sm:$0xff]
        %v1010 = vld [vmem:[%s4 + $0x80] sm:$0xff]
        %v1011 = vld [vmem:[%s4 + $0x88] sm:$0xff]
        %v1012 = vld [vmem:[%s4 + $0x90] sm:$0xff]
        %v1013 = vld [vmem:[%s4 + $0x98] sm:$0xff]
        %v1014 = vld [vmem:[%s4 + $0xa0] sm:$0xff]
        %v1015 = vld [vmem:[%s4 + $0xa8] sm:$0xff]
        %v1016 = vld [vmem:[%s4 + $0xb0] sm:$0xff]
        %v1017 = vld [vmem:[%s4 + $0xb8] sm:$0xff]
        %v1018 = vld [vmem:[%s4 + $0xc0] sm:$0xff]
        %v1019 = vld [vmem:[%s4 + $0xc8] sm:$0xff]
        %v1020 = vld [vmem:[%s4 + $0xd0] sm:$0xff]
        %v1021 = vld [vmem:[%s4 + $0xd8] sm:$0xff]
        %v1022 = vld [vmem:[%s4 + $0xe0] sm:$0xff]
        %v1023 = vld [vmem:[%s4 + $0xe8] sm:$0xff]
        %v1024 = vld [vmem:[%s4 + $0xf0] sm:$0xff]
        %v1025 = vld [vmem:[%s4 + $0xf8] sm:$0xff]
        %v1026 = vld [vmem:[%s4 + $0x100] sm:$0xff]
        %v1027 = vld [vmem:[%s4 + $0x108] sm:$0xff]
        %v1028 = vld [vmem:[%s4 + $0x110] sm:$0xff]
        %v1029 = vld [vmem:[%s4 + $0x118] sm:$0xff]
        %v1030 = vld [vmem:[%s4 + $0x120] sm:$0xff]
        %v1031 = vld [vmem:[%s4 + $0x128] sm:$0xff]
        %v1032 = vld [vmem:[%s4 + $0x130] sm:$0xff]
        %v1033 = vld [vmem:[%s4 + $0x138] sm:$0xff]
        %v1034 = vld [vmem:[%s4 + $0x140] sm:$0xff]
        %v1035 = vld [vmem:[%s4 + $0x148] sm:$0xff]
        %v1036 = vld [vmem:[%s4 + $0x150] sm:$0xff]
        %v1037 = vld [vmem:[%s4 + $0x158] sm:$0xff]
        %v1038 = vld [vmem:[%s4 + $0x160] sm:$0xff]
        %v1039 = vld [vmem:[%s4 + $0x168] sm:$0xff]
        %v1040 = vld [vmem:[%s4 + $0x170] sm:$0xff]
        %v1041 = vld [vmem:[%s4 + $0x178] sm:$0xff]
        %v1042 = vld [vmem:[%s4 + $0x180] sm:$0xff]
        %v1043 = vld [vmem:[%s4 + $0x188] sm:$0xff]
        %v1044 = vld [vmem:[%s4 + $0x190] sm:$0xff]
        %v1045 = vld [vmem:[%s4 + $0x198] sm:$0xff]
        %v1046 = vld [vmem:[%s4 + $0x1a0] sm:$0xff]
        %v1047 = vld [vmem:[%s4 + $0x1a8] sm:$0xff]
        %v1048 = vld [vmem:[%s4 + $0x1b0] sm:$0xff]
        %v1049 = vld [vmem:[%s4 + $0x1b8] sm:$0xff]
        %v1050 = vld [vmem:[%s4 + $0x1c0] sm:$0xff]
        %v1051 = vld [vmem:[%s4 + $0x1c8] sm:$0xff]
        %v1052 = vld [vmem:[%s4 + $0x1d0] sm:$0xff]
        %v1053 = vld [vmem:[%s4 + $0x1d8] sm:$0xff]
        %v1054 = vld [vmem:[%s4 + $0x1e0] sm:$0xff]
        %v1055 = vld [vmem:[%s4 + $0x1e8] sm:$0xff]
        %v1056 = vld [vmem:[%s4 + $0x1f0] sm:$0xff]
        %v1057 = vld [vmem:[%s4 + $0x1f8] sm:$0xff]
        %v1058 = vld [vmem:[%s4 + $0x200] sm:$0xff]
        %v1059 = vld [vmem:[%s4 + $0x208] sm:$0xff]
        %v1060 = vld [vmem:[%s4 + $0x210] sm:$0xff]
        %v1061 = vld [vmem:[%s4 + $0x218] sm:$0xff]
        %v1062 = vld [vmem:[%s4 + $0x220] sm:$0xff]
        %v1063 = vld [vmem:[%s4 + $0x228] sm:$0xff]
        %v1064 = vld [vmem:[%s4 + $0x230] sm:$0xff]
        %v1065 = vld [vmem:[%s4 + $0x238] sm:$0xff]
        %v1066 = vld [vmem:[%s4 + $0x240] sm:$0xff]
        %v1067 = vld [vmem:[%s4 + $0x248] sm:$0xff]
        %v1068 = vld [vmem:[%s4 + $0x250] sm:$0xff]
        %v1069 = vld [vmem:[%s4 + $0x258] sm:$0xff]
        %v1070 = vld [vmem:[%s4 + $0x260] sm:$0xff]
        %v1071 = vld [vmem:[%s4 + $0x268] sm:$0xff]
        %v1072 = vld [vmem:[%s4 + $0x270] sm:$0xff]
        %v1073 = vld [vmem:[%s4 + $0x278] sm:$0xff]
        %v1074 = vld [vmem:[%s4 + $0x280] sm:$0xff]
        %v1075 = vld [vmem:[%s4 + $0x288] sm:$0xff]
        %v1076 = vld [vmem:[%s4 + $0x290] sm:$0xff]
        %v1077 = vld [vmem:[%s4 + $0x298] sm:$0xff]
        %v1078 = vld [vmem:[%s4 + $0x2a0] sm:$0xff]
        %v1079 = vld [vmem:[%s4 + $0x2a8] sm:$0xff]
        %v1080 = vld [vmem:[%s4 + $0x2b0] sm:$0xff]
        %v1081 = vld [vmem:[%s4 + $0x2b8] sm:$0xff]
        %v1082 = vld [vmem:[%s4 + $0x2c0] sm:$0xff]
        %v1083 = vld [vmem:[%s4 + $0x2c8] sm:$0xff]
        %v1084 = vld [vmem:[%s4 + $0x2d0] sm:$0xff]
        %v1085 = vld [vmem:[%s4 + $0x2d8] sm:$0xff]
        %v1086 = vld [vmem:[%s4 + $0x2e0] sm:$0xff]
        %v1087 = vld [vmem:[%s4 + $0x2e8] sm:$0xff]
        %v1088 = vld [vmem:[%s4 + $0x2f0] sm:$0xff]
        %v1089 = vld [vmem:[%s4 + $0x2f8] sm:$0xff]
        %v1090 = vld [vmem:[%s4 + $0x300] sm:$0xff]
        %v1091 = vld [vmem:[%s4 + $0x308] sm:$0xff]
        %v1092 = vld [vmem:[%s4 + $0x310] sm:$0xff]
        %v1093 = vld [vmem:[%s4 + $0x318] sm:$0xff]
        %v1094 = vld [vmem:[%s4 + $0x320] sm:$0xff]
        %v1095 = vld [vmem:[%s4 + $0x328] sm:$0xff]
        %v1096 = vld [vmem:[%s4 + $0x330] sm:$0xff]
        %v1097 = vld [vmem:[%s4 + $0x338] sm:$0xff]
        %v1098 = vld [vmem:[%s4 + $0x340] sm:$0xff]
        %v1099 = vld [vmem:[%s4 + $0x348] sm:$0xff]
        %v1100 = vld [vmem:[%s4 + $0x350] sm:$0xff]
        %v1101 = vld [vmem:[%s4 + $0x358] sm:$0xff]
        %v1102 = vld [vmem:[%s4 + $0x360] sm:$0xff]
        %v1103 = vld [vmem:[%s4 + $0x368] sm:$0xff]
        %v1104 = vld [vmem:[%s4 + $0x370] sm:$0xff]
        %v1105 = vld [vmem:[%s4 + $0x378] sm:$0xff]
        %v1106 = vld [vmem:[%s4 + $0x380] sm:$0xff]
        %v1107 = vld [vmem:[%s4 + $0x388] sm:$0xff]
        %v1108 = vld [vmem:[%s4 + $0x390] sm:$0xff]
        %v1109 = vld [vmem:[%s4 + $0x398] sm:$0xff]
        %v1110 = vld [vmem:[%s4 + $0x3a0] sm:$0xff]
        %v1111 = vld [vmem:[%s4 + $0x3a8] sm:$0xff]
        %v1112 = vld [vmem:[%s4 + $0x3b0] sm:$0xff]
        %v1113 = vld [vmem:[%s4 + $0x3b8] sm:$0xff]
        %v1114 = vld [vmem:[%s4 + $0x3c0] sm:$0xff]
        %v1115 = vld [vmem:[%s4 + $0x3c8] sm:$0xff]
        %v1116 = vld [vmem:[%s4 + $0x3d0] sm:$0xff]
        %v1117 = vld [vmem:[%s4 + $0x3d8] sm:$0xff]
        %v1118 = vld [vmem:[%s4 + $0x3e0] sm:$0xff]
        %v1119 = vld [vmem:[%s4 + $0x3e8] sm:$0xff]
        %v1120 = vld [vmem:[%s4 + $0x3f0] sm:$0xff]
        %v1121 = vld [vmem:[%s4 + $0x3f8] sm:$0xff]
        %v1122 = vld [vmem:[%s4 + $0x400] sm:$0xff]
        %v1123 = vld [vmem:[%s4 + $0x408] sm:$0xff]
        %v1124 = vld [vmem:[%s4 + $0x410] sm:$0xff]
        %v1125 = vld [vmem:[%s4 + $0x418] sm:$0xff]
        %v1126 = vld [vmem:[%s4 + $0x420] sm:$0xff]
        %v1127 = vld [vmem:[%s4 + $0x428] sm:$0xff]
        %v1128 = vld [vmem:[%s4 + $0x430] sm:$0xff]
        %v1129 = vld [vmem:[%s4 + $0x438] sm:$0xff]
        %v1130 = vld [vmem:[%s4 + $0x440] sm:$0xff]
        %v1131 = vld [vmem:[%s4 + $0x448] sm:$0xff]
        %v1132 = vld [vmem:[%s4 + $0x450] sm:$0xff]
        %v1133 = vld [vmem:[%s4 + $0x458] sm:$0xff]
        %v1134 = vld [vmem:[%s4 + $0x460] sm:$0xff]
        %v1135 = vld [vmem:[%s4 + $0x468] sm:$0xff]
        %v1136 = vld [vmem:[%s4 + $0x470] sm:$0xff]
        %v1137 = vld [vmem:[%s4 + $0x478] sm:$0xff]
        %v1138 = vld [vmem:[%s4 + $0x480] sm:$0xff]
        %v1139 = vld [vmem:[%s4 + $0x488] sm:$0xff]
        %v1140 = vld [vmem:[%s4 + $0x490] sm:$0xff]
        %v1141 = vld [vmem:[%s4 + $0x498] sm:$0xff]
        %v1142 = vld [vmem:[%s4 + $0x4a0] sm:$0xff]
        %v1143 = vld [vmem:[%s4 + $0x4a8] sm:$0xff]
        %v1144 = vld [vmem:[%s4 + $0x4b0] sm:$0xff]
        %v1145 = vld [vmem:[%s4 + $0x4b8] sm:$0xff]
        %v1146 = vld [vmem:[%s4 + $0x4c0] sm:$0xff]
        %v1147 = vld [vmem:[%s4 + $0x4c8] sm:$0xff]
        %v1148 = vld [vmem:[%s4 + $0x4d0] sm:$0xff]
        %v1149 = vld [vmem:[%s4 + $0x4d8] sm:$0xff]
        %v1150 = vld [vmem:[%s4 + $0x4e0] sm:$0xff]
        %v1151 = vld [vmem:[%s4 + $0x4e8] sm:$0xff]
        %v1152 = vld [vmem:[%s4 + $0x4f0] sm:$0xff]
        %v1153 = vld [vmem:[%s4 + $0x4f8] sm:$0xff]
        %v1154 = vld [vmem:[%s4 + $0x500] sm:$0xff]
        %v1155 = vld [vmem:[%s4 + $0x508] sm:$0xff]
        %v1156 = vld [vmem:[%s4 + $0x510] sm:$0xff]
        %v1157 = vld [vmem:[%s4 + $0x518] sm:$0xff]
        %v1158 = vld [vmem:[%s4 + $0x520] sm:$0xff]
        %v1159 = vld [vmem:[%s4 + $0x528] sm:$0xff]
        %v1160 = vld [vmem:[%s4 + $0x530] sm:$0xff]
        %v1161 = vld [vmem:[%s4 + $0x538] sm:$0xff]
        %v1162 = vld [vmem:[%s4 + $0x540] sm:$0xff]
        %v1163 = vld [vmem:[%s4 + $0x548] sm:$0xff]
        %v1164 = vld [vmem:[%s4 + $0x550] sm:$0x33]
        %v1165 = vld [vmem:[%s4 + $0x558] sm:$0x33]
        %v1166 = vld [vmem:[%s5] sm:$0xff]
        %v1167 = vld [vmem:[%s5 + $0x8] sm:$0xff]
        %v1168 = vld [vmem:[%s5 + $0x10] sm:$0xff]
        %v1169 = vld [vmem:[%s5 + $0x18] sm:$0xff]
        %v1170 = vld [vmem:[%s5 + $0x20] sm:$0xff]
        %v1171 = vld [vmem:[%s5 + $0x28] sm:$0xff]
        %v1172 = vld [vmem:[%s5 + $0x30] sm:$0xff]
        %v1173 = vld [vmem:[%s5 + $0x38] sm:$0xff]
        %v1174 = vld [vmem:[%s5 + $0x40] sm:$0xff]
        %v1175 = vld [vmem:[%s5 + $0x48] sm:$0xff]
        %v1176 = vld [vmem:[%s5 + $0x50] sm:$0xff]
        %v1177 = vld [vmem:[%s5 + $0x58] sm:$0xff]
        %v1178 = vld [vmem:[%s5 + $0x60] sm:$0xff]
        %v1179 = vld [vmem:[%s5 + $0x68] sm:$0xff]
        %v1180 = vld [vmem:[%s5 + $0x70] sm:$0xff]
        %v1181 = vld [vmem:[%s5 + $0x78] sm:$0xff]
        %v1182 = vld [vmem:[%s5 + $0x80] sm:$0xff]
        %v1183 = vld [vmem:[%s5 + $0x88] sm:$0xff]
        %v1184 = vld [vmem:[%s5 + $0x90] sm:$0xff]
        %v1185 = vld [vmem:[%s5 + $0x98] sm:$0xff]
        %v1186 = vld [vmem:[%s5 + $0xa0] sm:$0xff]
        %v1187 = vld [vmem:[%s5 + $0xa8] sm:$0xff]
        %v1188 = vld [vmem:[%s5 + $0xb0] sm:$0xff]
        %v1189 = vld [vmem:[%s5 + $0xb8] sm:$0xff]
        %v1190 = vld [vmem:[%s5 + $0xc0] sm:$0xff]
        %v1191 = vld [vmem:[%s5 + $0xc8] sm:$0xff]
        %v1192 = vld [vmem:[%s5 + $0xd0] sm:$0xff]
        %v1193 = vld [vmem:[%s5 + $0xd8] sm:$0xff]
        %v1194 = vld [vmem:[%s5 + $0xe0] sm:$0xff]
        %v1195 = vld [vmem:[%s5 + $0xe8] sm:$0xff]
        %v1196 = vld [vmem:[%s5 + $0xf0] sm:$0x11]
        %v1197 = vld [vmem:[%s5 + $0xf8] sm:$0x11]
        %v1230 = vunpack.c.l.b16 %v962
        %v1231 = vunpack.c.l.b16 %v963
        %v1232 = vunpack.c.l.b16 %v964
        %v1233 = vunpack.c.l.b16 %v965
        %v1234 = vunpack.c.l.b16 %v966
        %v1235 = vunpack.c.l.b16 %v967
        %v1236 = vunpack.c.l.b16 %v968
        %v1237 = vunpack.c.l.b16 %v969
        %v1238 = vunpack.c.l.b16 %v970
        %v1239 = vunpack.c.l.b16 %v971
        %v1240 = vunpack.c.l.b16 %v972
        %v1241 = vunpack.c.l.b16 %v973
        %v1242 = vunpack.c.l.b16 %v974
        %v1243 = vunpack.c.l.b16 %v975
        %v1244 = vunpack.c.l.b16 %v976
        %v1245 = vunpack.c.l.b16 %v977
        %v1246 = vunpack.c.l.b16 %v978
        %v1247 = vunpack.c.l.b16 %v979
        %v1248 = vunpack.c.l.b16 %v980
        %v1249 = vunpack.c.l.b16 %v981
        %v1250 = vunpack.c.l.b16 %v982
        %v1251 = vunpack.c.l.b16 %v983
        %v1252 = vunpack.c.l.b16 %v984
        %v1253 = vunpack.c.l.b16 %v985
        %v1254 = vunpack.c.l.b16 %v986
        %v1255 = vunpack.c.l.b16 %v987
        %v1256 = vunpack.c.l.b16 %v988
        %v1257 = vunpack.c.l.b16 %v989
        %v1258 = vunpack.c.l.b16 %v990
        %v1259 = vunpack.c.l.b16 %v991
        %v1260 = vunpack.c.l.b16 %v992
        %v1261 = vunpack.c.l.b16 %v993
        %v1262 = vpack.c.b16 %v1231, %v1230
        %v1263 = vpack.c.b16 %v1233, %v1232
        %v1264 = vpack.c.b16 %v1235, %v1234
        %v1265 = vpack.c.b16 %v1237, %v1236
        %v1266 = vpack.c.b16 %v1239, %v1238
        %v1267 = vpack.c.b16 %v1241, %v1240
        %v1268 = vpack.c.b16 %v1243, %v1242
        %v1269 = vpack.c.b16 %v1245, %v1244
        %v1270 = vpack.c.b16 %v1247, %v1246
        %v1271 = vpack.c.b16 %v1249, %v1248
        %v1272 = vpack.c.b16 %v1251, %v1250
        %v1273 = vpack.c.b16 %v1253, %v1252
        %v1274 = vpack.c.b16 %v1255, %v1254
        %v1275 = vpack.c.b16 %v1257, %v1256
        %v1276 = vpack.c.b16 %v1259, %v1258
        %v1277 = vpack.c.b16 %v1261, %v1260
        %v1310 = vunpack.c.l.b16 %v1166
        %v1311 = vunpack.c.h.b16 %v1166
        %v1312 = vunpack.c.l.b16 %v1167
        %v1313 = vunpack.c.h.b16 %v1167
        %v1314 = vunpack.c.l.b16 %v1168
        %v1315 = vunpack.c.h.b16 %v1168
        %v1316 = vunpack.c.l.b16 %v1169
        %v1317 = vunpack.c.h.b16 %v1169
        %v1318 = vunpack.c.l.b16 %v1170
        %v1319 = vunpack.c.h.b16 %v1170
        %v1320 = vunpack.c.l.b16 %v1171
        %v1321 = vunpack.c.h.b16 %v1171
        %v1322 = vunpack.c.l.b16 %v1172
        %v1323 = vunpack.c.h.b16 %v1172
        %v1324 = vunpack.c.l.b16 %v1173
        %v1325 = vunpack.c.h.b16 %v1173
        %v1326 = vunpack.c.l.b16 %v1174
        %v1327 = vunpack.c.h.b16 %v1174
        %v1328 = vunpack.c.l.b16 %v1175
        %v1329 = vunpack.c.h.b16 %v1175
        %v1330 = vunpack.c.l.b16 %v1176
        %v1331 = vunpack.c.h.b16 %v1176
        %v1332 = vunpack.c.l.b16 %v1177
        %v1333 = vunpack.c.h.b16 %v1177
        %v1334 = vunpack.c.l.b16 %v1178
        %v1335 = vunpack.c.h.b16 %v1178
        %v1336 = vunpack.c.l.b16 %v1179
        %v1337 = vunpack.c.h.b16 %v1179
        %v1338 = vunpack.c.l.b16 %v1180
        %v1339 = vunpack.c.h.b16 %v1180
        %v1340 = vunpack.c.l.b16 %v1181
        %v1341 = vunpack.c.h.b16 %v1181
        %v1342 = vunpack.c.l.b16 %v1182
        %v1343 = vunpack.c.h.b16 %v1182
        %v1344 = vunpack.c.l.b16 %v1183
        %v1345 = vunpack.c.h.b16 %v1183
        %v1346 = vunpack.c.l.b16 %v1184
        %v1347 = vunpack.c.h.b16 %v1184
        %v1348 = vunpack.c.l.b16 %v1185
        %v1349 = vunpack.c.h.b16 %v1185
        %v1350 = vunpack.c.l.b16 %v1186
        %v1351 = vunpack.c.h.b16 %v1186
        %v1352 = vunpack.c.l.b16 %v1187
        %v1353 = vunpack.c.h.b16 %v1187
        %v1354 = vunpack.c.l.b16 %v1188
        %v1355 = vunpack.c.h.b16 %v1188
        %v1356 = vunpack.c.l.b16 %v1189
        %v1357 = vunpack.c.h.b16 %v1189
        %v1358 = vunpack.c.l.b16 %v1190
        %v1359 = vunpack.c.h.b16 %v1190
        %v1360 = vunpack.c.l.b16 %v1191
        %v1361 = vunpack.c.h.b16 %v1191
        %v1362 = vunpack.c.l.b16 %v1192
        %v1363 = vunpack.c.h.b16 %v1192
        %v1364 = vunpack.c.l.b16 %v1193
        %v1365 = vunpack.c.h.b16 %v1193
        %v1366 = vunpack.c.l.b16 %v1194
        %v1367 = vunpack.c.h.b16 %v1194
        %v1368 = vunpack.c.l.b16 %v1195
        %v1369 = vunpack.c.h.b16 %v1195
        %v1370 = vunpack.c.l.b16 %v1196
        %v1371 = vunpack.c.h.b16 %v1196
        %v1372 = vunpack.c.l.b16 %v1197
        %v1373 = vunpack.c.h.b16 %v1197
        %v1374 = vpack.c.b16 %v1314, %v1310
        %v1375 = vpack.c.b16 %v1315, %v1311
        %v1376 = vpack.c.b16 %v1316, %v1312
        %v1377 = vpack.c.b16 %v1317, %v1313
        %v1378 = vpack.c.b16 %v1322, %v1318
        %v1379 = vpack.c.b16 %v1323, %v1319
        %v1380 = vpack.c.b16 %v1324, %v1320
        %v1381 = vpack.c.b16 %v1325, %v1321
        %v1382 = vpack.c.b16 %v1330, %v1326
        %v1383 = vpack.c.b16 %v1331, %v1327
        %v1384 = vpack.c.b16 %v1332, %v1328
        %v1385 = vpack.c.b16 %v1333, %v1329
        %v1386 = vpack.c.b16 %v1338, %v1334
        %v1387 = vpack.c.b16 %v1339, %v1335
        %v1388 = vpack.c.b16 %v1340, %v1336
        %v1389 = vpack.c.b16 %v1341, %v1337
        %v1390 = vpack.c.b16 %v1346, %v1342
        %v1391 = vpack.c.b16 %v1347, %v1343
        %v1392 = vpack.c.b16 %v1348, %v1344
        %v1393 = vpack.c.b16 %v1349, %v1345
        %v1394 = vpack.c.b16 %v1354, %v1350
        %v1395 = vpack.c.b16 %v1355, %v1351
        %v1396 = vpack.c.b16 %v1356, %v1352
        %v1397 = vpack.c.b16 %v1357, %v1353
        %v1398 = vpack.c.b16 %v1362, %v1358
        %v1399 = vpack.c.b16 %v1363, %v1359
        %v1400 = vpack.c.b16 %v1364, %v1360
        %v1401 = vpack.c.b16 %v1365, %v1361
        %v1402 = vpack.c.b16 %v1370, %v1366
        %v1403 = vpack.c.b16 %v1371, %v1367
        %v1404 = vpack.c.b16 %v1372, %v1368
        %v1405 = vpack.c.b16 %v1373, %v1369
        %vm1434 = vcmask 990208
        %v1436 = vsel %vm1434, %v1262, 0
        %v1439 = vsel %vm1434, %v1263, 0
        %v1442 = vsel %vm1434, %v1264, 0
        %v1445 = vsel %vm1434, %v1265, 0
        %v1448 = vsel %vm1434, %v1266, 0
        %v1451 = vsel %vm1434, %v1267, 0
        %v1454 = vsel %vm1434, %v1268, 0
        %v1457 = vsel %vm1434, %v1269, 0
        %v1460 = vsel %vm1434, %v1270, 0
        %v1463 = vsel %vm1434, %v1271, 0
        %v1466 = vsel %vm1434, %v1272, 0
        %v1469 = vsel %vm1434, %v1273, 0
        %v1472 = vsel %vm1434, %v1274, 0
        %v1475 = vsel %vm1434, %v1275, 0
        %v1478 = vsel %vm1434, %v1276, 0
        %v1481 = vsel %vm1434, %v1277, 0
        %vm1483 = vcmask 1043456
        %vm1484 = vcmask 1044480
        %v1485 = vsel %vm1483, 4294967295, 65535
        %v1486 = vsel %vm1484, %v1485, 0
        %v1488 = vand.u32 %v1402, %v1486
        %v1491 = vand.u32 %v1403, %v1486
        %v1494 = vand.u32 %v1404, %v1486
        %v1497 = vand.u32 %v1405, %v1486
        %1499 = vmatprep.subr.bf16.mxu0 %v1375
        %1500 = vmatpush1.bf16.msra.mxu0 %v1374
        %1501 = vmatprep.subr.bf16.mxu0 %v1379
        %1502 = vmatpush1.bf16.msra.mxu0 %v1378
        %1503 = vmatprep.subr.bf16.mxu0 %v1383
        %1504 = vmatpush1.bf16.msra.mxu0 %v1382
        %1505 = vmatprep.subr.bf16.mxu0 %v1387
        %1506 = vmatpush1.bf16.msra.mxu0 %v1386
        %1507 = vmatprep.subr.bf16.mxu0 %v1391
        %1508 = vmatpush1.bf16.msra.mxu0 %v1390
        %1509 = vmatprep.subr.bf16.mxu0 %v1395
        %1510 = vmatpush1.bf16.msra.mxu0 %v1394
        %1511 = vmatprep.subr.bf16.mxu0 %v1399
        %1512 = vmatpush1.bf16.msra.mxu0 %v1398
        %1513 = vmatprep.subr.bf16.mxu0 %v1491
        %1514 = vmatpush1.bf16.msra.mxu0 %v1488
        %1515 = vmatprep.subr.bf16.mxu0 0
        %1516 = vmatpush1.bf16.msra.mxu0 0
        %1517 = vmatprep.subr.bf16.mxu0 0
        %1518 = vmatpush1.bf16.msra.mxu0 0
        %1519 = vmatprep.subr.bf16.mxu0 0
        %1520 = vmatpush1.bf16.msra.mxu0 0
        %1521 = vmatprep.subr.bf16.mxu0 0
        %1522 = vmatpush1.bf16.msra.mxu0 0
        %1523 = vmatprep.subr.bf16.mxu0 0
        %1524 = vmatpush1.bf16.msra.mxu0 0
        %1525 = vmatprep.subr.bf16.mxu0 0
        %1526 = vmatpush1.bf16.msra.mxu0 0
        %1527 = vmatprep.subr.bf16.mxu0 0
        %1528 = vmatpush1.bf16.msra.mxu0 0
        %1529 = vmatprep.subr.bf16.mxu0 0
        %1530 = vmatpush1.bf16.msra.mxu0 0
        %1531 = vmatprep.mubr.bf16.mxu0 0
        %1532 = vmatmul.mubr.bf16.gmra.mrb[0].mxu0 %v1436
        %v1533 = vpop.f32.mrb[0].mxu0
        %v1534 = vadd.f32 0.0, %v1533
        %v1535 = vpop.f32.mrb[0].mxu0
        %v1536 = vadd.f32 0.0, %v1535
        %v1537 = vpop.f32.mrb[0].mxu0
        %v1538 = vadd.f32 0.0, %v1537
        %v1539 = vpop.f32.mrb[0].mxu0
        %v1540 = vadd.f32 0.0, %v1539
        %1541 = vmatprep.mubr.bf16.mxu0 0
        %1542 = vmatmul.mubr.bf16.gmra.mrb[0].mxu0 %v1439
        %v1543 = vpop.f32.mrb[0].mxu0
        %v1544 = vadd.f32 0.0, %v1543
        %v1545 = vpop.f32.mrb[0].mxu0
        %v1546 = vadd.f32 0.0, %v1545
        %v1547 = vpop.f32.mrb[0].mxu0
        %v1548 = vadd.f32 0.0, %v1547
        %v1549 = vpop.f32.mrb[0].mxu0
        %v1550 = vadd.f32 0.0, %v1549
        %1551 = vmatprep.mubr.bf16.mxu0 0
        %1552 = vmatmul.mubr.bf16.gmra.mrb[0].mxu0 %v1442
        %v1553 = vpop.f32.mrb[0].mxu0
        %v1554 = vadd.f32 0.0, %v1553
        %v1555 = vpop.f32.mrb[0].mxu0
        %v1556 = vadd.f32 0.0, %v1555
        %v1557 = vpop.f32.mrb[0].mxu0
        %v1558 = vadd.f32 0.0, %v1557
        %v1559 = vpop.f32.mrb[0].mxu0
        %v1560 = vadd.f32 0.0, %v1559
        %1561 = vmatprep.mubr.bf16.mxu0 0
        %1562 = vmatmul.mubr.bf16.gmra.mrb[0].mxu0 %v1445
        %v1563 = vpop.f32.mrb[0].mxu0
        %v1564 = vadd.f32 0.0, %v1563
        %v1565 = vpop.f32.mrb[0].mxu0
        %v1566 = vadd.f32 0.0, %v1565
        %v1567 = vpop.f32.mrb[0].mxu0
        %v1568 = vadd.f32 0.0, %v1567
        %v1569 = vpop.f32.mrb[0].mxu0
        %v1570 = vadd.f32 0.0, %v1569
        %1571 = vmatprep.mubr.bf16.mxu0 0
        %1572 = vmatmul.mubr.bf16.gmra.mrb[0].mxu0 %v1448
        %v1573 = vpop.f32.mrb[0].mxu0
        %v1574 = vadd.f32 0.0, %v1573
        %v1575 = vpop.f32.mrb[0].mxu0
        %v1576 = vadd.f32 0.0, %v1575
        %v1577 = vpop.f32.mrb[0].mxu0
        %v1578 = vadd.f32 0.0, %v1577
        %v1579 = vpop.f32.mrb[0].mxu0
        %v1580 = vadd.f32 0.0, %v1579
        %1581 = vmatprep.mubr.bf16.mxu0 0
        %1582 = vmatmul.mubr.bf16.gmra.mrb[0].mxu0 %v1451
        %v1583 = vpop.f32.mrb[0].mxu0
        %v1584 = vadd.f32 0.0, %v1583
        %v1585 = vpop.f32.mrb[0].mxu0
        %v1586 = vadd.f32 0.0, %v1585
        %v1587 = vpop.f32.mrb[0].mxu0
        %v1588 = vadd.f32 0.0, %v1587
        %v1589 = vpop.f32.mrb[0].mxu0
        %v1590 = vadd.f32 0.0, %v1589
        %1591 = vmatprep.mubr.bf16.mxu0 0
        %1592 = vmatmul.mubr.bf16.gmra.mrb[0].mxu0 %v1454
        %v1593 = vpop.f32.mrb[0].mxu0
        %v1594 = vadd.f32 0.0, %v1593
        %v1595 = vpop.f32.mrb[0].mxu0
        %v1596 = vadd.f32 0.0, %v1595
        %v1597 = vpop.f32.mrb[0].mxu0
        %v1598 = vadd.f32 0.0, %v1597
        %v1599 = vpop.f32.mrb[0].mxu0
        %v1600 = vadd.f32 0.0, %v1599
        %1601 = vmatprep.mubr.bf16.mxu0 0
        %1602 = vmatmul.mubr.bf16.gmra.mrb[0].mxu0 %v1457
        %v1603 = vpop.f32.mrb[0].mxu0
        %v1604 = vadd.f32 0.0, %v1603
        %v1605 = vpop.f32.mrb[0].mxu0
        %v1606 = vadd.f32 0.0, %v1605
        %v1607 = vpop.f32.mrb[0].mxu0
        %v1608 = vadd.f32 0.0, %v1607
        %v1609 = vpop.f32.mrb[0].mxu0
        %v1610 = vadd.f32 0.0, %v1609
        %1611 = vmatprep.mubr.bf16.mxu0 0
        %1612 = vmatmul.mubr.bf16.gmra.mrb[0].mxu0 %v1460
        %v1613 = vpop.f32.mrb[0].mxu0
        %v1614 = vadd.f32 0.0, %v1613
        %v1615 = vpop.f32.mrb[0].mxu0
        %v1616 = vadd.f32 0.0, %v1615
        %v1617 = vpop.f32.mrb[0].mxu0
        %v1618 = vadd.f32 0.0, %v1617
        %v1619 = vpop.f32.mrb[0].mxu0
        %v1620 = vadd.f32 0.0, %v1619
        %1621 = vmatprep.mubr.bf16.mxu0 0
        %1622 = vmatmul.mubr.bf16.gmra.mrb[0].mxu0 %v1463
        %v1623 = vpop.f32.mrb[0].mxu0
        %v1624 = vadd.f32 0.0, %v1623
        %v1625 = vpop.f32.mrb[0].mxu0
        %v1626 = vadd.f32 0.0, %v1625
        %v1627 = vpop.f32.mrb[0].mxu0
        %v1628 = vadd.f32 0.0, %v1627
        %v1629 = vpop.f32.mrb[0].mxu0
        %v1630 = vadd.f32 0.0, %v1629
        %1631 = vmatprep.mubr.bf16.mxu0 0
        %1632 = vmatmul.mubr.bf16.gmra.mrb[0].mxu0 %v1466
        %v1633 = vpop.f32.mrb[0].mxu0
        %v1634 = vadd.f32 0.0, %v1633
        %v1635 = vpop.f32.mrb[0].mxu0
        %v1636 = vadd.f32 0.0, %v1635
        %v1637 = vpop.f32.mrb[0].mxu0
        %v1638 = vadd.f32 0.0, %v1637
        %v1639 = vpop.f32.mrb[0].mxu0
        %v1640 = vadd.f32 0.0, %v1639
        %1641 = vmatprep.mubr.bf16.mxu0 0
        %1642 = vmatmul.mubr.bf16.gmra.mrb[0].mxu0 %v1469
        %v1643 = vpop.f32.mrb[0].mxu0
        %v1644 = vadd.f32 0.0, %v1643
        %v1645 = vpop.f32.mrb[0].mxu0
        %v1646 = vadd.f32 0.0, %v1645
        %v1647 = vpop.f32.mrb[0].mxu0
        %v1648 = vadd.f32 0.0, %v1647
        %v1649 = vpop.f32.mrb[0].mxu0
        %v1650 = vadd.f32 0.0, %v1649
        %1651 = vmatprep.mubr.bf16.mxu0 0
        %1652 = vmatmul.mubr.bf16.gmra.mrb[0].mxu0 %v1472
        %v1653 = vpop.f32.mrb[0].mxu0
        %v1654 = vadd.f32 0.0, %v1653
        %v1655 = vpop.f32.mrb[0].mxu0
        %v1656 = vadd.f32 0.0, %v1655
        %v1657 = vpop.f32.mrb[0].mxu0
        %v1658 = vadd.f32 0.0, %v1657
        %v1659 = vpop.f32.mrb[0].mxu0
        %v1660 = vadd.f32 0.0, %v1659
        %1661 = vmatprep.mubr.bf16.mxu0 0
        %1662 = vmatmul.mubr.bf16.gmra.mrb[0].mxu0 %v1475
        %v1663 = vpop.f32.mrb[0].mxu0
        %v1664 = vadd.f32 0.0, %v1663
        %v1665 = vpop.f32.mrb[0].mxu0
        %v1666 = vadd.f32 0.0, %v1665
        %v1667 = vpop.f32.mrb[0].mxu0
        %v1668 = vadd.f32 0.0, %v1667
        %v1669 = vpop.f32.mrb[0].mxu0
        %v1670 = vadd.f32 0.0, %v1669
        %1671 = vmatprep.mubr.bf16.mxu0 0
        %1672 = vmatmul.mubr.bf16.gmra.mrb[0].mxu0 %v1478
        %v1673 = vpop.f32.mrb[0].mxu0
        %v1674 = vadd.f32 0.0, %v1673
        %v1675 = vpop.f32.mrb[0].mxu0
        %v1676 = vadd.f32 0.0, %v1675
        %v1677 = vpop.f32.mrb[0].mxu0
        %v1678 = vadd.f32 0.0, %v1677
        %v1679 = vpop.f32.mrb[0].mxu0
        %v1680 = vadd.f32 0.0, %v1679
        %1681 = vmatprep.mubr.bf16.mxu0 0
        %1682 = vmatmul.mubr.bf16.gmra.mrb[0].mxu0 %v1481
        %v1683 = vpop.f32.mrb[0].mxu0
        %v1684 = vadd.f32 0.0, %v1683
        %v1685 = vpop.f32.mrb[0].mxu0
        %v1686 = vadd.f32 0.0, %v1685
        %v1687 = vpop.f32.mrb[0].mxu0
        %v1688 = vadd.f32 0.0, %v1687
        %v1689 = vpop.f32.mrb[0].mxu0
        %v1690 = vadd.f32 0.0, %v1689
        %1691 = vdwg.mxu0
        %1692 = vmatprep.subr.bf16.mxu0 %v1377
        %1693 = vmatpush1.bf16.msra.mxu0 %v1376
        %1694 = vmatprep.subr.bf16.mxu0 %v1381
        %1695 = vmatpush1.bf16.msra.mxu0 %v1380
        %1696 = vmatprep.subr.bf16.mxu0 %v1385
        %1697 = vmatpush1.bf16.msra.mxu0 %v1384
        %1698 = vmatprep.subr.bf16.mxu0 %v1389
        %1699 = vmatpush1.bf16.msra.mxu0 %v1388
        %1700 = vmatprep.subr.bf16.mxu0 %v1393
        %1701 = vmatpush1.bf16.msra.mxu0 %v1392
        %1702 = vmatprep.subr.bf16.mxu0 %v1397
        %1703 = vmatpush1.bf16.msra.mxu0 %v1396
        %1704 = vmatprep.subr.bf16.mxu0 %v1401
        %1705 = vmatpush1.bf16.msra.mxu0 %v1400
        %1706 = vmatprep.subr.bf16.mxu0 %v1497
        %1707 = vmatpush1.bf16.msra.mxu0 %v1494
        %1708 = vmatprep.subr.bf16.mxu0 0
        %1709 = vmatpush1.bf16.msra.mxu0 0
        %1710 = vmatprep.subr.bf16.mxu0 0
        %1711 = vmatpush1.bf16.msra.mxu0 0
        %1712 = vmatprep.subr.bf16.mxu0 0
        %1713 = vmatpush1.bf16.msra.mxu0 0
        %1714 = vmatprep.subr.bf16.mxu0 0
        %1715 = vmatpush1.bf16.msra.mxu0 0
        %1716 = vmatprep.subr.bf16.mxu0 0
        %1717 = vmatpush1.bf16.msra.mxu0 0
        %1718 = vmatprep.subr.bf16.mxu0 0
        %1719 = vmatpush1.bf16.msra.mxu0 0
        %1720 = vmatprep.subr.bf16.mxu0 0
        %1721 = vmatpush1.bf16.msra.mxu0 0
        %1722 = vmatprep.subr.bf16.mxu0 0
        %1723 = vmatpush1.bf16.msra.mxu0 0
        %1724 = vmatprep.mubr.bf16.mxu0 0
        %1725 = vmatmul.mubr.bf16.gmra.mrb[0].mxu0 %v1436
        %v1726 = vpop.f32.mrb[0].mxu0
        %v1727 = vadd.f32 0.0, %v1726
        %v1728 = vpop.f32.mrb[0].mxu0
        %v1729 = vadd.f32 0.0, %v1728
        %v1730 = vpop.f32.mrb[0].mxu0
        %v1731 = vadd.f32 0.0, %v1730
        %v1732 = vpop.f32.mrb[0].mxu0
        %v1733 = vadd.f32 0.0, %v1732
        %1734 = vmatprep.mubr.bf16.mxu0 0
        %1735 = vmatmul.mubr.bf16.gmra.mrb[0].mxu0 %v1439
        %v1736 = vpop.f32.mrb[0].mxu0
        %v1737 = vadd.f32 0.0, %v1736
        %v1738 = vpop.f32.mrb[0].mxu0
        %v1739 = vadd.f32 0.0, %v1738
        %v1740 = vpop.f32.mrb[0].mxu0
        %v1741 = vadd.f32 0.0, %v1740
        %v1742 = vpop.f32.mrb[0].mxu0
        %v1743 = vadd.f32 0.0, %v1742
        %1744 = vmatprep.mubr.bf16.mxu0 0
        %1745 = vmatmul.mubr.bf16.gmra.mrb[0].mxu0 %v1442
        %v1746 = vpop.f32.mrb[0].mxu0
        %v1747 = vadd.f32 0.0, %v1746
        %v1748 = vpop.f32.mrb[0].mxu0
        %v1749 = vadd.f32 0.0, %v1748
        %v1750 = vpop.f32.mrb[0].mxu0
        %v1751 = vadd.f32 0.0, %v1750
        %v1752 = vpop.f32.mrb[0].mxu0
        %v1753 = vadd.f32 0.0, %v1752
        %1754 = vmatprep.mubr.bf16.mxu0 0
        %1755 = vmatmul.mubr.bf16.gmra.mrb[0].mxu0 %v1445
        %v1756 = vpop.f32.mrb[0].mxu0
        %v1757 = vadd.f32 0.0, %v1756
        %v1758 = vpop.f32.mrb[0].mxu0
        %v1759 = vadd.f32 0.0, %v1758
        %v1760 = vpop.f32.mrb[0].mxu0
        %v1761 = vadd.f32 0.0, %v1760
        %v1762 = vpop.f32.mrb[0].mxu0
        %v1763 = vadd.f32 0.0, %v1762
        %1764 = vmatprep.mubr.bf16.mxu0 0
        %1765 = vmatmul.mubr.bf16.gmra.mrb[0].mxu0 %v1448
        %v1766 = vpop.f32.mrb[0].mxu0
        %v1767 = vadd.f32 0.0, %v1766
        %v1768 = vpop.f32.mrb[0].mxu0
        %v1769 = vadd.f32 0.0, %v1768
        %v1770 = vpop.f32.mrb[0].mxu0
        %v1771 = vadd.f32 0.0, %v1770
        %v1772 = vpop.f32.mrb[0].mxu0
        %v1773 = vadd.f32 0.0, %v1772
        %1774 = vmatprep.mubr.bf16.mxu0 0
        %1775 = vmatmul.mubr.bf16.gmra.mrb[0].mxu0 %v1451
        %v1776 = vpop.f32.mrb[0].mxu0
        %v1777 = vadd.f32 0.0, %v1776
        %v1778 = vpop.f32.mrb[0].mxu0
        %v1779 = vadd.f32 0.0, %v1778
        %v1780 = vpop.f32.mrb[0].mxu0
        %v1781 = vadd.f32 0.0, %v1780
        %v1782 = vpop.f32.mrb[0].mxu0
        %v1783 = vadd.f32 0.0, %v1782
        %1784 = vmatprep.mubr.bf16.mxu0 0
        %1785 = vmatmul.mubr.bf16.gmra.mrb[0].mxu0 %v1454
        %v1786 = vpop.f32.mrb[0].mxu0
        %v1787 = vadd.f32 0.0, %v1786
        %v1788 = vpop.f32.mrb[0].mxu0
        %v1789 = vadd.f32 0.0, %v1788
        %v1790 = vpop.f32.mrb[0].mxu0
        %v1791 = vadd.f32 0.0, %v1790
        %v1792 = vpop.f32.mrb[0].mxu0
        %v1793 = vadd.f32 0.0, %v1792
        %1794 = vmatprep.mubr.bf16.mxu0 0
        %1795 = vmatmul.mubr.bf16.gmra.mrb[0].mxu0 %v1457
        %v1796 = vpop.f32.mrb[0].mxu0
        %v1797 = vadd.f32 0.0, %v1796
        %v1798 = vpop.f32.mrb[0].mxu0
        %v1799 = vadd.f32 0.0, %v1798
        %v1800 = vpop.f32.mrb[0].mxu0
        %v1801 = vadd.f32 0.0, %v1800
        %v1802 = vpop.f32.mrb[0].mxu0
        %v1803 = vadd.f32 0.0, %v1802
        %1804 = vmatprep.mubr.bf16.mxu0 0
        %1805 = vmatmul.mubr.bf16.gmra.mrb[0].mxu0 %v1460
        %v1806 = vpop.f32.mrb[0].mxu0
        %v1807 = vadd.f32 0.0, %v1806
        %v1808 = vpop.f32.mrb[0].mxu0
        %v1809 = vadd.f32 0.0, %v1808
        %v1810 = vpop.f32.mrb[0].mxu0
        %v1811 = vadd.f32 0.0, %v1810
        %v1812 = vpop.f32.mrb[0].mxu0
        %v1813 = vadd.f32 0.0, %v1812
        %1814 = vmatprep.mubr.bf16.mxu0 0
        %1815 = vmatmul.mubr.bf16.gmra.mrb[0].mxu0 %v1463
        %v1816 = vpop.f32.mrb[0].mxu0
        %v1817 = vadd.f32 0.0, %v1816
        %v1818 = vpop.f32.mrb[0].mxu0
        %v1819 = vadd.f32 0.0, %v1818
        %v1820 = vpop.f32.mrb[0].mxu0
        %v1821 = vadd.f32 0.0, %v1820
        %v1822 = vpop.f32.mrb[0].mxu0
        %v1823 = vadd.f32 0.0, %v1822
        %1824 = vmatprep.mubr.bf16.mxu0 0
        %1825 = vmatmul.mubr.bf16.gmra.mrb[0].mxu0 %v1466
        %v1826 = vpop.f32.mrb[0].mxu0
        %v1827 = vadd.f32 0.0, %v1826
        %v1828 = vpop.f32.mrb[0].mxu0
        %v1829 = vadd.f32 0.0, %v1828
        %v1830 = vpop.f32.mrb[0].mxu0
        %v1831 = vadd.f32 0.0, %v1830
        %v1832 = vpop.f32.mrb[0].mxu0
        %v1833 = vadd.f32 0.0, %v1832
        %1834 = vmatprep.mubr.bf16.mxu0 0
        %1835 = vmatmul.mubr.bf16.gmra.mrb[0].mxu0 %v1469
        %v1836 = vpop.f32.mrb[0].mxu0
        %v1837 = vadd.f32 0.0, %v1836
        %v1838 = vpop.f32.mrb[0].mxu0
        %v1839 = vadd.f32 0.0, %v1838
        %v1840 = vpop.f32.mrb[0].mxu0
        %v1841 = vadd.f32 0.0, %v1840
        %v1842 = vpop.f32.mrb[0].mxu0
        %v1843 = vadd.f32 0.0, %v1842
        %1844 = vmatprep.mubr.bf16.mxu0 0
        %1845 = vmatmul.mubr.bf16.gmra.mrb[0].mxu0 %v1472
        %v1846 = vpop.f32.mrb[0].mxu0
        %v1847 = vadd.f32 0.0, %v1846
        %v1848 = vpop.f32.mrb[0].mxu0
        %v1849 = vadd.f32 0.0, %v1848
        %v1850 = vpop.f32.mrb[0].mxu0
        %v1851 = vadd.f32 0.0, %v1850
        %v1852 = vpop.f32.mrb[0].mxu0
        %v1853 = vadd.f32 0.0, %v1852
        %1854 = vmatprep.mubr.bf16.mxu0 0
        %1855 = vmatmul.mubr.bf16.gmra.mrb[0].mxu0 %v1475
        %v1856 = vpop.f32.mrb[0].mxu0
        %v1857 = vadd.f32 0.0, %v1856
        %v1858 = vpop.f32.mrb[0].mxu0
        %v1859 = vadd.f32 0.0, %v1858
        %v1860 = vpop.f32.mrb[0].mxu0
        %v1861 = vadd.f32 0.0, %v1860
        %v1862 = vpop.f32.mrb[0].mxu0
        %v1863 = vadd.f32 0.0, %v1862
        %1864 = vmatprep.mubr.bf16.mxu0 0
        %1865 = vmatmul.mubr.bf16.gmra.mrb[0].mxu0 %v1478
        %v1866 = vpop.f32.mrb[0].mxu0
        %v1867 = vadd.f32 0.0, %v1866
        %v1868 = vpop.f32.mrb[0].mxu0
        %v1869 = vadd.f32 0.0, %v1868
        %v1870 = vpop.f32.mrb[0].mxu0
        %v1871 = vadd.f32 0.0, %v1870
        %v1872 = vpop.f32.mrb[0].mxu0
        %v1873 = vadd.f32 0.0, %v1872
        %1874 = vmatprep.mubr.bf16.mxu0 0
        %1875 = vmatmul.mubr.bf16.gmra.mrb[0].mxu0 %v1481
        %v1876 = vpop.f32.mrb[0].mxu0
        %v1877 = vadd.f32 0.0, %v1876
        %v1878 = vpop.f32.mrb[0].mxu0
        %v1879 = vadd.f32 0.0, %v1878
        %v1880 = vpop.f32.mrb[0].mxu0
        %v1881 = vadd.f32 0.0, %v1880
        %v1882 = vpop.f32.mrb[0].mxu0
        %v1883 = vadd.f32 0.0, %v1882
        %1884 = vdwg.mxu0
        %v1981 = vunpack.c.l.b16 %v866
        %v1982 = vunpack.c.h.b16 %v866
        %v1983 = vunpack.c.l.b16 %v867
        %v1984 = vunpack.c.h.b16 %v867
        %v1985 = vunpack.c.l.b16 %v868
        %v1986 = vunpack.c.h.b16 %v868
        %v1987 = vunpack.c.l.b16 %v869
        %v1988 = vunpack.c.h.b16 %v869
        %v1989 = vunpack.c.l.b16 %v870
        %v1990 = vunpack.c.h.b16 %v870
        %v1991 = vunpack.c.l.b16 %v871
        %v1992 = vunpack.c.h.b16 %v871
        %v1993 = vunpack.c.l.b16 %v872
        %v1994 = vunpack.c.h.b16 %v872
        %v1995 = vunpack.c.l.b16 %v873
        %v1996 = vunpack.c.h.b16 %v873
        %v1997 = vunpack.c.l.b16 %v874
        %v1998 = vunpack.c.h.b16 %v874
        %v1999 = vunpack.c.l.b16 %v875
        %v2000 = vunpack.c.h.b16 %v875
        %v2001 = vunpack.c.l.b16 %v876
        %v2002 = vunpack.c.h.b16 %v876
        %v2003 = vunpack.c.l.b16 %v877
        %v2004 = vunpack.c.h.b16 %v877
        %v2005 = vunpack.c.l.b16 %v878
        %v2006 = vunpack.c.h.b16 %v878
        %v2007 = vunpack.c.l.b16 %v879
        %v2008 = vunpack.c.h.b16 %v879
        %v2009 = vunpack.c.l.b16 %v880
        %v2010 = vunpack.c.h.b16 %v880
        %v2011 = vunpack.c.l.b16 %v881
        %v2012 = vunpack.c.h.b16 %v881
        %v2013 = vunpack.c.l.b16 %v882
        %v2014 = vunpack.c.h.b16 %v882
        %v2015 = vunpack.c.l.b16 %v883
        %v2016 = vunpack.c.h.b16 %v883
        %v2017 = vunpack.c.l.b16 %v884
        %v2018 = vunpack.c.h.b16 %v884
        %v2019 = vunpack.c.l.b16 %v885
        %v2020 = vunpack.c.h.b16 %v885
        %v2021 = vunpack.c.l.b16 %v886
        %v2022 = vunpack.c.h.b16 %v886
        %v2023 = vunpack.c.l.b16 %v887
        %v2024 = vunpack.c.h.b16 %v887
        %v2025 = vunpack.c.l.b16 %v888
        %v2026 = vunpack.c.h.b16 %v888
        %v2027 = vunpack.c.l.b16 %v889
        %v2028 = vunpack.c.h.b16 %v889
        %v2029 = vunpack.c.l.b16 %v890
        %v2030 = vunpack.c.h.b16 %v890
        %v2031 = vunpack.c.l.b16 %v891
        %v2032 = vunpack.c.h.b16 %v891
        %v2033 = vunpack.c.l.b16 %v892
        %v2034 = vunpack.c.h.b16 %v892
        %v2035 = vunpack.c.l.b16 %v893
        %v2036 = vunpack.c.h.b16 %v893
        %v2037 = vunpack.c.l.b16 %v894
        %v2038 = vunpack.c.h.b16 %v894
        %v2039 = vunpack.c.l.b16 %v895
        %v2040 = vunpack.c.h.b16 %v895
        %v2041 = vunpack.c.l.b16 %v896
        %v2042 = vunpack.c.h.b16 %v896
        %v2043 = vunpack.c.l.b16 %v897
        %v2044 = vunpack.c.h.b16 %v897
        %v2045 = vunpack.c.l.b16 %v898
        %v2046 = vunpack.c.h.b16 %v898
        %v2047 = vunpack.c.l.b16 %v899
        %v2048 = vunpack.c.h.b16 %v899
        %v2049 = vunpack.c.l.b16 %v900
        %v2050 = vunpack.c.h.b16 %v900
        %v2051 = vunpack.c.l.b16 %v901
        %v2052 = vunpack.c.h.b16 %v901
        %v2053 = vunpack.c.l.b16 %v902
        %v2054 = vunpack.c.h.b16 %v902
        %v2055 = vunpack.c.l.b16 %v903
        %v2056 = vunpack.c.h.b16 %v903
        %v2057 = vunpack.c.l.b16 %v904
        %v2058 = vunpack.c.h.b16 %v904
        %v2059 = vunpack.c.l.b16 %v905
        %v2060 = vunpack.c.h.b16 %v905
        %v2061 = vunpack.c.l.b16 %v906
        %v2062 = vunpack.c.h.b16 %v906
        %v2063 = vunpack.c.l.b16 %v907
        %v2064 = vunpack.c.h.b16 %v907
        %v2065 = vunpack.c.l.b16 %v908
        %v2066 = vunpack.c.h.b16 %v908
        %v2067 = vunpack.c.l.b16 %v909
        %v2068 = vunpack.c.h.b16 %v909
        %v2069 = vunpack.c.l.b16 %v910
        %v2070 = vunpack.c.h.b16 %v910
        %v2071 = vunpack.c.l.b16 %v911
        %v2072 = vunpack.c.h.b16 %v911
        %v2073 = vunpack.c.l.b16 %v912
        %v2074 = vunpack.c.h.b16 %v912
        %v2075 = vunpack.c.l.b16 %v913
        %v2076 = vunpack.c.h.b16 %v913
        %v2077 = vunpack.c.l.b16 %v914
        %v2078 = vunpack.c.h.b16 %v914
        %v2079 = vunpack.c.l.b16 %v915
        %v2080 = vunpack.c.h.b16 %v915
        %v2081 = vunpack.c.l.b16 %v916
        %v2082 = vunpack.c.h.b16 %v916
        %v2083 = vunpack.c.l.b16 %v917
        %v2084 = vunpack.c.h.b16 %v917
        %v2085 = vunpack.c.l.b16 %v918
        %v2086 = vunpack.c.h.b16 %v918
        %v2087 = vunpack.c.l.b16 %v919
        %v2088 = vunpack.c.h.b16 %v919
        %v2089 = vunpack.c.l.b16 %v920
        %v2090 = vunpack.c.h.b16 %v920
        %v2091 = vunpack.c.l.b16 %v921
        %v2092 = vunpack.c.h.b16 %v921
        %v2093 = vunpack.c.l.b16 %v922
        %v2094 = vunpack.c.h.b16 %v922
        %v2095 = vunpack.c.l.b16 %v923
        %v2096 = vunpack.c.h.b16 %v923
        %v2097 = vunpack.c.l.b16 %v924
        %v2098 = vunpack.c.h.b16 %v924
        %v2099 = vunpack.c.l.b16 %v925
        %v2100 = vunpack.c.h.b16 %v925
        %v2101 = vunpack.c.l.b16 %v926
        %v2102 = vunpack.c.h.b16 %v926
        %v2103 = vunpack.c.l.b16 %v927
        %v2104 = vunpack.c.h.b16 %v927
        %v2105 = vunpack.c.l.b16 %v928
        %v2106 = vunpack.c.h.b16 %v928
        %v2107 = vunpack.c.l.b16 %v929
        %v2108 = vunpack.c.h.b16 %v929
        %v2109 = vunpack.c.l.b16 %v930
        %v2110 = vunpack.c.h.b16 %v930
        %v2111 = vunpack.c.l.b16 %v931
        %v2112 = vunpack.c.h.b16 %v931
        %v2113 = vunpack.c.l.b16 %v932
        %v2114 = vunpack.c.h.b16 %v932
        %v2115 = vunpack.c.l.b16 %v933
        %v2116 = vunpack.c.h.b16 %v933
        %v2117 = vunpack.c.l.b16 %v934
        %v2118 = vunpack.c.h.b16 %v934
        %v2119 = vunpack.c.l.b16 %v935
        %v2120 = vunpack.c.h.b16 %v935
        %v2121 = vunpack.c.l.b16 %v936
        %v2122 = vunpack.c.h.b16 %v936
        %v2123 = vunpack.c.l.b16 %v937
        %v2124 = vunpack.c.h.b16 %v937
        %v2125 = vunpack.c.l.b16 %v938
        %v2126 = vunpack.c.h.b16 %v938
        %v2127 = vunpack.c.l.b16 %v939
        %v2128 = vunpack.c.h.b16 %v939
        %v2129 = vunpack.c.l.b16 %v940
        %v2130 = vunpack.c.h.b16 %v940
        %v2131 = vunpack.c.l.b16 %v941
        %v2132 = vunpack.c.h.b16 %v941
        %v2133 = vunpack.c.l.b16 %v942
        %v2134 = vunpack.c.h.b16 %v942
        %v2135 = vunpack.c.l.b16 %v943
        %v2136 = vunpack.c.h.b16 %v943
        %v2137 = vunpack.c.l.b16 %v944
        %v2138 = vunpack.c.h.b16 %v944
        %v2139 = vunpack.c.l.b16 %v945
        %v2140 = vunpack.c.h.b16 %v945
        %v2141 = vunpack.c.l.b16 %v946
        %v2142 = vunpack.c.h.b16 %v946
        %v2143 = vunpack.c.l.b16 %v947
        %v2144 = vunpack.c.h.b16 %v947
        %v2145 = vunpack.c.l.b16 %v948
        %v2146 = vunpack.c.h.b16 %v948
        %v2147 = vunpack.c.l.b16 %v949
        %v2148 = vunpack.c.h.b16 %v949
        %v2149 = vunpack.c.l.b16 %v950
        %v2150 = vunpack.c.h.b16 %v950
        %v2151 = vunpack.c.l.b16 %v951
        %v2152 = vunpack.c.h.b16 %v951
        %v2153 = vunpack.c.l.b16 %v952
        %v2154 = vunpack.c.h.b16 %v952
        %v2155 = vunpack.c.l.b16 %v953
        %v2156 = vunpack.c.h.b16 %v953
        %v2157 = vunpack.c.l.b16 %v954
        %v2158 = vunpack.c.h.b16 %v954
        %v2159 = vunpack.c.l.b16 %v955
        %v2160 = vunpack.c.h.b16 %v955
        %v2161 = vunpack.c.l.b16 %v956
        %v2162 = vunpack.c.h.b16 %v956
        %v2163 = vunpack.c.l.b16 %v957
        %v2164 = vunpack.c.h.b16 %v957
        %v2165 = vunpack.c.l.b16 %v958
        %v2166 = vunpack.c.h.b16 %v958
        %v2167 = vunpack.c.l.b16 %v959
        %v2168 = vunpack.c.h.b16 %v959
        %v2169 = vunpack.c.l.b16 %v960
        %v2170 = vunpack.c.h.b16 %v960
        %v2171 = vunpack.c.l.b16 %v961
        %v2172 = vunpack.c.h.b16 %v961
        %v2173 = vpack.c.b16 %v1987, %v1981
        %v2174 = vpack.c.b16 %v1988, %v1982
        %v2175 = vpack.c.b16 %v1989, %v1983
        %v2176 = vpack.c.b16 %v1990, %v1984
        %v2177 = vpack.c.b16 %v1991, %v1985
        %v2178 = vpack.c.b16 %v1992, %v1986
        %v2179 = vpack.c.b16 %v1999, %v1993
        %v2180 = vpack.c.b16 %v2000, %v1994
        %v2181 = vpack.c.b16 %v2001, %v1995
        %v2182 = vpack.c.b16 %v2002, %v1996
        %v2183 = vpack.c.b16 %v2003, %v1997
        %v2184 = vpack.c.b16 %v2004, %v1998
        %v2185 = vpack.c.b16 %v2011, %v2005
        %v2186 = vpack.c.b16 %v2012, %v2006
        %v2187 = vpack.c.b16 %v2013, %v2007
        %v2188 = vpack.c.b16 %v2014, %v2008
        %v2189 = vpack.c.b16 %v2015, %v2009
        %v2190 = vpack.c.b16 %v2016, %v2010
        %v2191 = vpack.c.b16 %v2023, %v2017
        %v2192 = vpack.c.b16 %v2024, %v2018
        %v2193 = vpack.c.b16 %v2025, %v2019
        %v2194 = vpack.c.b16 %v2026, %v2020
        %v2195 = vpack.c.b16 %v2027, %v2021
        %v2196 = vpack.c.b16 %v2028, %v2022
        %v2197 = vpack.c.b16 %v2035, %v2029
        %v2198 = vpack.c.b16 %v2036, %v2030
        %v2199 = vpack.c.b16 %v2037, %v2031
        %v2200 = vpack.c.b16 %v2038, %v2032
        %v2201 = vpack.c.b16 %v2039, %v2033
        %v2202 = vpack.c.b16 %v2040, %v2034
        %v2203 = vpack.c.b16 %v2047, %v2041
        %v2204 = vpack.c.b16 %v2048, %v2042
        %v2205 = vpack.c.b16 %v2049, %v2043
        %v2206 = vpack.c.b16 %v2050, %v2044
        %v2207 = vpack.c.b16 %v2051, %v2045
        %v2208 = vpack.c.b16 %v2052, %v2046
        %v2209 = vpack.c.b16 %v2059, %v2053
        %v2210 = vpack.c.b16 %v2060, %v2054
        %v2211 = vpack.c.b16 %v2061, %v2055
        %v2212 = vpack.c.b16 %v2062, %v2056
        %v2213 = vpack.c.b16 %v2063, %v2057
        %v2214 = vpack.c.b16 %v2064, %v2058
        %v2215 = vpack.c.b16 %v2071, %v2065
        %v2216 = vpack.c.b16 %v2072, %v2066
        %v2217 = vpack.c.b16 %v2073, %v2067
        %v2218 = vpack.c.b16 %v2074, %v2068
        %v2219 = vpack.c.b16 %v2075, %v2069
        %v2220 = vpack.c.b16 %v2076, %v2070
        %v2221 = vpack.c.b16 %v2083, %v2077
        %v2222 = vpack.c.b16 %v2084, %v2078
        %v2223 = vpack.c.b16 %v2085, %v2079
        %v2224 = vpack.c.b16 %v2086, %v2080
        %v2225 = vpack.c.b16 %v2087, %v2081
        %v2226 = vpack.c.b16 %v2088, %v2082
        %v2227 = vpack.c.b16 %v2095, %v2089
        %v2228 = vpack.c.b16 %v2096, %v2090
        %v2229 = vpack.c.b16 %v2097, %v2091
        %v2230 = vpack.c.b16 %v2098, %v2092
        %v2231 = vpack.c.b16 %v2099, %v2093
        %v2232 = vpack.c.b16 %v2100, %v2094
        %v2233 = vpack.c.b16 %v2107, %v2101
        %v2234 = vpack.c.b16 %v2108, %v2102
        %v2235 = vpack.c.b16 %v2109, %v2103
        %v2236 = vpack.c.b16 %v2110, %v2104
        %v2237 = vpack.c.b16 %v2111, %v2105
        %v2238 = vpack.c.b16 %v2112, %v2106
        %v2239 = vpack.c.b16 %v2119, %v2113
        %v2240 = vpack.c.b16 %v2120, %v2114
        %v2241 = vpack.c.b16 %v2121, %v2115
        %v2242 = vpack.c.b16 %v2122, %v2116
        %v2243 = vpack.c.b16 %v2123, %v2117
        %v2244 = vpack.c.b16 %v2124, %v2118
        %v2245 = vpack.c.b16 %v2131, %v2125
        %v2246 = vpack.c.b16 %v2132, %v2126
        %v2247 = vpack.c.b16 %v2133, %v2127
        %v2248 = vpack.c.b16 %v2134, %v2128
        %v2249 = vpack.c.b16 %v2135, %v2129
        %v2250 = vpack.c.b16 %v2136, %v2130
        %v2251 = vpack.c.b16 %v2143, %v2137
        %v2252 = vpack.c.b16 %v2144, %v2138
        %v2253 = vpack.c.b16 %v2145, %v2139
        %v2254 = vpack.c.b16 %v2146, %v2140
        %v2255 = vpack.c.b16 %v2147, %v2141
        %v2256 = vpack.c.b16 %v2148, %v2142
        %v2257 = vpack.c.b16 %v2155, %v2149
        %v2258 = vpack.c.b16 %v2156, %v2150
        %v2259 = vpack.c.b16 %v2157, %v2151
        %v2260 = vpack.c.b16 %v2158, %v2152
        %v2261 = vpack.c.b16 %v2159, %v2153
        %v2262 = vpack.c.b16 %v2160, %v2154
        %v2263 = vpack.c.b16 %v2167, %v2161
        %v2264 = vpack.c.b16 %v2168, %v2162
        %v2265 = vpack.c.b16 %v2169, %v2163
        %v2266 = vpack.c.b16 %v2170, %v2164
        %v2267 = vpack.c.b16 %v2171, %v2165
        %v2268 = vpack.c.b16 %v2172, %v2166
        %v2521 = vunpack.c.l.b16 %v994
        %v2522 = vunpack.c.h.b16 %v994
        %v2523 = vunpack.c.l.b16 %v995
        %v2524 = vunpack.c.h.b16 %v995
        %v2525 = vunpack.c.l.b16 %v996
        %v2526 = vunpack.c.h.b16 %v996
        %v2527 = vunpack.c.l.b16 %v997
        %v2528 = vunpack.c.h.b16 %v997
        %v2529 = vunpack.c.l.b16 %v998
        %v2530 = vunpack.c.h.b16 %v998
        %v2531 = vunpack.c.l.b16 %v999
        %v2532 = vunpack.c.h.b16 %v999
        %v2533 = vunpack.c.l.b16 %v1000
        %v2534 = vunpack.c.h.b16 %v1000
        %v2535 = vunpack.c.l.b16 %v1001
        %v2536 = vunpack.c.h.b16 %v1001
        %v2537 = vunpack.c.l.b16 %v1002
        %v2538 = vunpack.c.h.b16 %v1002
        %v2539 = vunpack.c.l.b16 %v1003
        %v2540 = vunpack.c.h.b16 %v1003
        %v2541 = vunpack.c.l.b16 %v1004
        %v2542 = vunpack.c.h.b16 %v1004
        %v2543 = vunpack.c.l.b16 %v1005
        %v2544 = vunpack.c.h.b16 %v1005
        %v2545 = vunpack.c.l.b16 %v1006
        %v2546 = vunpack.c.h.b16 %v1006
        %v2547 = vunpack.c.l.b16 %v1007
        %v2548 = vunpack.c.h.b16 %v1007
        %v2549 = vunpack.c.l.b16 %v1008
        %v2550 = vunpack.c.h.b16 %v1008
        %v2551 = vunpack.c.l.b16 %v1009
        %v2552 = vunpack.c.h.b16 %v1009
        %v2553 = vunpack.c.l.b16 %v1010
        %v2554 = vunpack.c.h.b16 %v1010
        %v2555 = vunpack.c.l.b16 %v1011
        %v2556 = vunpack.c.h.b16 %v1011
        %v2557 = vunpack.c.l.b16 %v1012
        %v2558 = vunpack.c.h.b16 %v1012
        %v2559 = vunpack.c.l.b16 %v1013
        %v2560 = vunpack.c.h.b16 %v1013
        %v2561 = vunpack.c.l.b16 %v1014
        %v2562 = vunpack.c.h.b16 %v1014
        %v2563 = vunpack.c.l.b16 %v1015
        %v2564 = vunpack.c.h.b16 %v1015
        %v2565 = vunpack.c.l.b16 %v1016
        %v2566 = vunpack.c.h.b16 %v1016
        %v2567 = vunpack.c.l.b16 %v1017
        %v2568 = vunpack.c.h.b16 %v1017
        %v2569 = vunpack.c.l.b16 %v1018
        %v2570 = vunpack.c.h.b16 %v1018
        %v2571 = vunpack.c.l.b16 %v1019
        %v2572 = vunpack.c.h.b16 %v1019
        %v2573 = vunpack.c.l.b16 %v1020
        %v2574 = vunpack.c.h.b16 %v1020
        %v2575 = vunpack.c.l.b16 %v1021
        %v2576 = vunpack.c.h.b16 %v1021
        %v2577 = vunpack.c.l.b16 %v1022
        %v2578 = vunpack.c.h.b16 %v1022
        %v2579 = vunpack.c.l.b16 %v1023
        %v2580 = vunpack.c.h.b16 %v1023
        %v2581 = vunpack.c.l.b16 %v1024
        %v2582 = vunpack.c.h.b16 %v1024
        %v2583 = vunpack.c.l.b16 %v1025
        %v2584 = vunpack.c.h.b16 %v1025
        %v2585 = vunpack.c.l.b16 %v1026
        %v2586 = vunpack.c.h.b16 %v1026
        %v2587 = vunpack.c.l.b16 %v1027
        %v2588 = vunpack.c.h.b16 %v1027
        %v2589 = vunpack.c.l.b16 %v1028
        %v2590 = vunpack.c.h.b16 %v1028
        %v2591 = vunpack.c.l.b16 %v1029
        %v2592 = vunpack.c.h.b16 %v1029
        %v2593 = vunpack.c.l.b16 %v1030
        %v2594 = vunpack.c.h.b16 %v1030
        %v2595 = vunpack.c.l.b16 %v1031
        %v2596 = vunpack.c.h.b16 %v1031
        %v2597 = vunpack.c.l.b16 %v1032
        %v2598 = vunpack.c.h.b16 %v1032
        %v2599 = vunpack.c.l.b16 %v1033
        %v2600 = vunpack.c.h.b16 %v1033
        %v2601 = vunpack.c.l.b16 %v1034
        %v2602 = vunpack.c.h.b16 %v1034
        %v2603 = vunpack.c.l.b16 %v1035
        %v2604 = vunpack.c.h.b16 %v1035
        %v2605 = vunpack.c.l.b16 %v1036
        %v2606 = vunpack.c.h.b16 %v1036
        %v2607 = vunpack.c.l.b16 %v1037
        %v2608 = vunpack.c.h.b16 %v1037
        %v2609 = vunpack.c.l.b16 %v1038
        %v2610 = vunpack.c.h.b16 %v1038
        %v2611 = vunpack.c.l.b16 %v1039
        %v2612 = vunpack.c.h.b16 %v1039
        %v2613 = vunpack.c.l.b16 %v1040
        %v2614 = vunpack.c.h.b16 %v1040
        %v2615 = vunpack.c.l.b16 %v1041
        %v2616 = vunpack.c.h.b16 %v1041
        %v2617 = vunpack.c.l.b16 %v1042
        %v2618 = vunpack.c.h.b16 %v1042
        %v2619 = vunpack.c.l.b16 %v1043
        %v2620 = vunpack.c.h.b16 %v1043
        %v2621 = vunpack.c.l.b16 %v1044
        %v2622 = vunpack.c.h.b16 %v1044
        %v2623 = vunpack.c.l.b16 %v1045
        %v2624 = vunpack.c.h.b16 %v1045
        %v2625 = vunpack.c.l.b16 %v1046
        %v2626 = vunpack.c.h.b16 %v1046
        %v2627 = vunpack.c.l.b16 %v1047
        %v2628 = vunpack.c.h.b16 %v1047
        %v2629 = vunpack.c.l.b16 %v1048
        %v2630 = vunpack.c.h.b16 %v1048
        %v2631 = vunpack.c.l.b16 %v1049
        %v2632 = vunpack.c.h.b16 %v1049
        %v2633 = vunpack.c.l.b16 %v1050
        %v2634 = vunpack.c.h.b16 %v1050
        %v2635 = vunpack.c.l.b16 %v1051
        %v2636 = vunpack.c.h.b16 %v1051
        %v2637 = vunpack.c.l.b16 %v1052
        %v2638 = vunpack.c.h.b16 %v1052
        %v2639 = vunpack.c.l.b16 %v1053
        %v2640 = vunpack.c.h.b16 %v1053
        %v2641 = vunpack.c.l.b16 %v1054
        %v2642 = vunpack.c.h.b16 %v1054
        %v2643 = vunpack.c.l.b16 %v1055
        %v2644 = vunpack.c.h.b16 %v1055
        %v2645 = vunpack.c.l.b16 %v1056
        %v2646 = vunpack.c.h.b16 %v1056
        %v2647 = vunpack.c.l.b16 %v1057
        %v2648 = vunpack.c.h.b16 %v1057
        %v2649 = vunpack.c.l.b16 %v1058
        %v2650 = vunpack.c.h.b16 %v1058
        %v2651 = vunpack.c.l.b16 %v1059
        %v2652 = vunpack.c.h.b16 %v1059
        %v2653 = vunpack.c.l.b16 %v1060
        %v2654 = vunpack.c.h.b16 %v1060
        %v2655 = vunpack.c.l.b16 %v1061
        %v2656 = vunpack.c.h.b16 %v1061
        %v2657 = vunpack.c.l.b16 %v1062
        %v2658 = vunpack.c.h.b16 %v1062
        %v2659 = vunpack.c.l.b16 %v1063
        %v2660 = vunpack.c.h.b16 %v1063
        %v2661 = vunpack.c.l.b16 %v1064
        %v2662 = vunpack.c.h.b16 %v1064
        %v2663 = vunpack.c.l.b16 %v1065
        %v2664 = vunpack.c.h.b16 %v1065
        %v2665 = vunpack.c.l.b16 %v1066
        %v2666 = vunpack.c.h.b16 %v1066
        %v2667 = vunpack.c.l.b16 %v1067
        %v2668 = vunpack.c.h.b16 %v1067
        %v2669 = vunpack.c.l.b16 %v1068
        %v2670 = vunpack.c.h.b16 %v1068
        %v2671 = vunpack.c.l.b16 %v1069
        %v2672 = vunpack.c.h.b16 %v1069
        %v2673 = vunpack.c.l.b16 %v1070
        %v2674 = vunpack.c.h.b16 %v1070
        %v2675 = vunpack.c.l.b16 %v1071
        %v2676 = vunpack.c.h.b16 %v1071
        %v2677 = vunpack.c.l.b16 %v1072
        %v2678 = vunpack.c.h.b16 %v1072
        %v2679 = vunpack.c.l.b16 %v1073
        %v2680 = vunpack.c.h.b16 %v1073
        %v2681 = vunpack.c.l.b16 %v1074
        %v2682 = vunpack.c.h.b16 %v1074
        %v2683 = vunpack.c.l.b16 %v1075
        %v2684 = vunpack.c.h.b16 %v1075
        %v2685 = vunpack.c.l.b16 %v1076
        %v2686 = vunpack.c.h.b16 %v1076
        %v2687 = vunpack.c.l.b16 %v1077
        %v2688 = vunpack.c.h.b16 %v1077
        %v2689 = vunpack.c.l.b16 %v1078
        %v2690 = vunpack.c.h.b16 %v1078
        %v2691 = vunpack.c.l.b16 %v1079
        %v2692 = vunpack.c.h.b16 %v1079
        %v2693 = vunpack.c.l.b16 %v1080
        %v2694 = vunpack.c.h.b16 %v1080
        %v2695 = vunpack.c.l.b16 %v1081
        %v2696 = vunpack.c.h.b16 %v1081
        %v2697 = vunpack.c.l.b16 %v1082
        %v2698 = vunpack.c.h.b16 %v1082
        %v2699 = vunpack.c.l.b16 %v1083
        %v2700 = vunpack.c.h.b16 %v1083
        %v2701 = vunpack.c.l.b16 %v1084
        %v2702 = vunpack.c.h.b16 %v1084
        %v2703 = vunpack.c.l.b16 %v1085
        %v2704 = vunpack.c.h.b16 %v1085
        %v2705 = vunpack.c.l.b16 %v1086
        %v2706 = vunpack.c.h.b16 %v1086
        %v2707 = vunpack.c.l.b16 %v1087
        %v2708 = vunpack.c.h.b16 %v1087
        %v2709 = vunpack.c.l.b16 %v1088
        %v2710 = vunpack.c.h.b16 %v1088
        %v2711 = vunpack.c.l.b16 %v1089
        %v2712 = vunpack.c.h.b16 %v1089
        %v2713 = vunpack.c.l.b16 %v1090
        %v2714 = vunpack.c.h.b16 %v1090
        %v2715 = vunpack.c.l.b16 %v1091
        %v2716 = vunpack.c.h.b16 %v1091
        %v2717 = vunpack.c.l.b16 %v1092
        %v2718 = vunpack.c.h.b16 %v1092
        %v2719 = vunpack.c.l.b16 %v1093
        %v2720 = vunpack.c.h.b16 %v1093
        %v2721 = vunpack.c.l.b16 %v1094
        %v2722 = vunpack.c.h.b16 %v1094
        %v2723 = vunpack.c.l.b16 %v1095
        %v2724 = vunpack.c.h.b16 %v1095
        %v2725 = vunpack.c.l.b16 %v1096
        %v2726 = vunpack.c.h.b16 %v1096
        %v2727 = vunpack.c.l.b16 %v1097
        %v2728 = vunpack.c.h.b16 %v1097
        %v2729 = vunpack.c.l.b16 %v1098
        %v2730 = vunpack.c.h.b16 %v1098
        %v2731 = vunpack.c.l.b16 %v1099
        %v2732 = vunpack.c.h.b16 %v1099
        %v2733 = vunpack.c.l.b16 %v1100
        %v2734 = vunpack.c.h.b16 %v1100
        %v2735 = vunpack.c.l.b16 %v1101
        %v2736 = vunpack.c.h.b16 %v1101
        %v2737 = vunpack.c.l.b16 %v1102
        %v2738 = vunpack.c.h.b16 %v1102
        %v2739 = vunpack.c.l.b16 %v1103
        %v2740 = vunpack.c.h.b16 %v1103
        %v2741 = vunpack.c.l.b16 %v1104
        %v2742 = vunpack.c.h.b16 %v1104
        %v2743 = vunpack.c.l.b16 %v1105
        %v2744 = vunpack.c.h.b16 %v1105
        %v2745 = vunpack.c.l.b16 %v1106
        %v2746 = vunpack.c.h.b16 %v1106
        %v2747 = vunpack.c.l.b16 %v1107
        %v2748 = vunpack.c.h.b16 %v1107
        %v2749 = vunpack.c.l.b16 %v1108
        %v2750 = vunpack.c.h.b16 %v1108
        %v2751 = vunpack.c.l.b16 %v1109
        %v2752 = vunpack.c.h.b16 %v1109
        %v2753 = vunpack.c.l.b16 %v1110
        %v2754 = vunpack.c.h.b16 %v1110
        %v2755 = vunpack.c.l.b16 %v1111
        %v2756 = vunpack.c.h.b16 %v1111
        %v2757 = vunpack.c.l.b16 %v1112
        %v2758 = vunpack.c.h.b16 %v1112
        %v2759 = vunpack.c.l.b16 %v1113
        %v2760 = vunpack.c.h.b16 %v1113
        %v2761 = vunpack.c.l.b16 %v1114
        %v2762 = vunpack.c.h.b16 %v1114
        %v2763 = vunpack.c.l.b16 %v1115
        %v2764 = vunpack.c.h.b16 %v1115
        %v2765 = vunpack.c.l.b16 %v1116
        %v2766 = vunpack.c.h.b16 %v1116
        %v2767 = vunpack.c.l.b16 %v1117
        %v2768 = vunpack.c.h.b16 %v1117
        %v2769 = vunpack.c.l.b16 %v1118
        %v2770 = vunpack.c.h.b16 %v1118
        %v2771 = vunpack.c.l.b16 %v1119
        %v2772 = vunpack.c.h.b16 %v1119
        %v2773 = vunpack.c.l.b16 %v1120
        %v2774 = vunpack.c.h.b16 %v1120
        %v2775 = vunpack.c.l.b16 %v1121
        %v2776 = vunpack.c.h.b16 %v1121
        %v2777 = vunpack.c.l.b16 %v1122
        %v2778 = vunpack.c.h.b16 %v1122
        %v2779 = vunpack.c.l.b16 %v1123
        %v2780 = vunpack.c.h.b16 %v1123
        %v2781 = vunpack.c.l.b16 %v1124
        %v2782 = vunpack.c.h.b16 %v1124
        %v2783 = vunpack.c.l.b16 %v1125
        %v2784 = vunpack.c.h.b16 %v1125
        %v2785 = vunpack.c.l.b16 %v1126
        %v2786 = vunpack.c.h.b16 %v1126
        %v2787 = vunpack.c.l.b16 %v1127
        %v2788 = vunpack.c.h.b16 %v1127
        %v2789 = vunpack.c.l.b16 %v1128
        %v2790 = vunpack.c.h.b16 %v1128
        %v2791 = vunpack.c.l.b16 %v1129
        %v2792 = vunpack.c.h.b16 %v1129
        %v2793 = vunpack.c.l.b16 %v1130
        %v2794 = vunpack.c.h.b16 %v1130
        %v2795 = vunpack.c.l.b16 %v1131
        %v2796 = vunpack.c.h.b16 %v1131
        %v2797 = vunpack.c.l.b16 %v1132
        %v2798 = vunpack.c.h.b16 %v1132
        %v2799 = vunpack.c.l.b16 %v1133
        %v2800 = vunpack.c.h.b16 %v1133
        %v2801 = vunpack.c.l.b16 %v1134
        %v2802 = vunpack.c.h.b16 %v1134
        %v2803 = vunpack.c.l.b16 %v1135
        %v2804 = vunpack.c.h.b16 %v1135
        %v2805 = vunpack.c.l.b16 %v1136
        %v2806 = vunpack.c.h.b16 %v1136
        %v2807 = vunpack.c.l.b16 %v1137
        %v2808 = vunpack.c.h.b16 %v1137
        %v2809 = vunpack.c.l.b16 %v1138
        %v2810 = vunpack.c.h.b16 %v1138
        %v2811 = vunpack.c.l.b16 %v1139
        %v2812 = vunpack.c.h.b16 %v1139
        %v2813 = vunpack.c.l.b16 %v1140
        %v2814 = vunpack.c.h.b16 %v1140
        %v2815 = vunpack.c.l.b16 %v1141
        %v2816 = vunpack.c.h.b16 %v1141
        %v2817 = vunpack.c.l.b16 %v1142
        %v2818 = vunpack.c.h.b16 %v1142
        %v2819 = vunpack.c.l.b16 %v1143
        %v2820 = vunpack.c.h.b16 %v1143
        %v2821 = vunpack.c.l.b16 %v1144
        %v2822 = vunpack.c.h.b16 %v1144
        %v2823 = vunpack.c.l.b16 %v1145
        %v2824 = vunpack.c.h.b16 %v1145
        %v2825 = vunpack.c.l.b16 %v1146
        %v2826 = vunpack.c.h.b16 %v1146
        %v2827 = vunpack.c.l.b16 %v1147
        %v2828 = vunpack.c.h.b16 %v1147
        %v2829 = vunpack.c.l.b16 %v1148
        %v2830 = vunpack.c.h.b16 %v1148
        %v2831 = vunpack.c.l.b16 %v1149
        %v2832 = vunpack.c.h.b16 %v1149
        %v2833 = vunpack.c.l.b16 %v1150
        %v2834 = vunpack.c.h.b16 %v1150
        %v2835 = vunpack.c.l.b16 %v1151
        %v2836 = vunpack.c.h.b16 %v1151
        %v2837 = vunpack.c.l.b16 %v1152
        %v2838 = vunpack.c.h.b16 %v1152
        %v2839 = vunpack.c.l.b16 %v1153
        %v2840 = vunpack.c.h.b16 %v1153
        %v2841 = vunpack.c.l.b16 %v1154
        %v2842 = vunpack.c.h.b16 %v1154
        %v2843 = vunpack.c.l.b16 %v1155
        %v2844 = vunpack.c.h.b16 %v1155
        %v2845 = vunpack.c.l.b16 %v1156
        %v2846 = vunpack.c.h.b16 %v1156
        %v2847 = vunpack.c.l.b16 %v1157
        %v2848 = vunpack.c.h.b16 %v1157
        %v2849 = vunpack.c.l.b16 %v1158
        %v2850 = vunpack.c.h.b16 %v1158
        %v2851 = vunpack.c.l.b16 %v1159
        %v2852 = vunpack.c.h.b16 %v1159
        %v2853 = vunpack.c.l.b16 %v1160
        %v2854 = vunpack.c.h.b16 %v1160
        %v2855 = vunpack.c.l.b16 %v1161
        %v2856 = vunpack.c.h.b16 %v1161
        %v2857 = vunpack.c.l.b16 %v1162
        %v2858 = vunpack.c.h.b16 %v1162
        %v2859 = vunpack.c.l.b16 %v1163
        %v2860 = vunpack.c.h.b16 %v1163
        %v2861 = vunpack.c.l.b16 %v1164
        %v2862 = vunpack.c.h.b16 %v1164
        %v2863 = vunpack.c.l.b16 %v1165
        %v2864 = vunpack.c.h.b16 %v1165
        %v2865 = vpack.c.b16 %v2525, %v2521
        %v2866 = vpack.c.b16 %v2526, %v2522
        %v2867 = vpack.c.b16 %v2527, %v2523
        %v2868 = vpack.c.b16 %v2528, %v2524
        %v2869 = vpack.c.b16 %v2533, %v2529
        %v2870 = vpack.c.b16 %v2534, %v2530
        %v2871 = vpack.c.b16 %v2535, %v2531
        %v2872 = vpack.c.b16 %v2536, %v2532
        %v2873 = vpack.c.b16 %v2541, %v2537
        %v2874 = vpack.c.b16 %v2542, %v2538
        %v2875 = vpack.c.b16 %v2543, %v2539
        %v2876 = vpack.c.b16 %v2544, %v2540
        %v2877 = vpack.c.b16 %v2549, %v2545
        %v2878 = vpack.c.b16 %v2550, %v2546
        %v2879 = vpack.c.b16 %v2551, %v2547
        %v2880 = vpack.c.b16 %v2552, %v2548
        %v2881 = vpack.c.b16 %v2557, %v2553
        %v2882 = vpack.c.b16 %v2558, %v2554
        %v2883 = vpack.c.b16 %v2559, %v2555
        %v2884 = vpack.c.b16 %v2560, %v2556
        %v2885 = vpack.c.b16 %v2565, %v2561
        %v2886 = vpack.c.b16 %v2566, %v2562
        %v2887 = vpack.c.b16 %v2567, %v2563
        %v2888 = vpack.c.b16 %v2568, %v2564
        %v2889 = vpack.c.b16 %v2573, %v2569
        %v2890 = vpack.c.b16 %v2574, %v2570
        %v2891 = vpack.c.b16 %v2575, %v2571
        %v2892 = vpack.c.b16 %v2576, %v2572
        %v2893 = vpack.c.b16 %v2581, %v2577
        %v2894 = vpack.c.b16 %v2582, %v2578
        %v2895 = vpack.c.b16 %v2583, %v2579
        %v2896 = vpack.c.b16 %v2584, %v2580
        %v2897 = vpack.c.b16 %v2589, %v2585
        %v2898 = vpack.c.b16 %v2590, %v2586
        %v2899 = vpack.c.b16 %v2591, %v2587
        %v2900 = vpack.c.b16 %v2592, %v2588
        %v2901 = vpack.c.b16 %v2597, %v2593
        %v2902 = vpack.c.b16 %v2598, %v2594
        %v2903 = vpack.c.b16 %v2599, %v2595
        %v2904 = vpack.c.b16 %v2600, %v2596
        %v2905 = vpack.c.b16 %v2605, %v2601
        %v2906 = vpack.c.b16 %v2606, %v2602
        %v2907 = vpack.c.b16 %v2607, %v2603
        %v2908 = vpack.c.b16 %v2608, %v2604
        %v2909 = vpack.c.b16 %v2613, %v2609
        %v2910 = vpack.c.b16 %v2614, %v2610
        %v2911 = vpack.c.b16 %v2615, %v2611
        %v2912 = vpack.c.b16 %v2616, %v2612
        %v2913 = vpack.c.b16 %v2621, %v2617
        %v2914 = vpack.c.b16 %v2622, %v2618
        %v2915 = vpack.c.b16 %v2623, %v2619
        %v2916 = vpack.c.b16 %v2624, %v2620
        %v2917 = vpack.c.b16 %v2629, %v2625
        %v2918 = vpack.c.b16 %v2630, %v2626
        %v2919 = vpack.c.b16 %v2631, %v2627
        %v2920 = vpack.c.b16 %v2632, %v2628
        %v2921 = vpack.c.b16 %v2637, %v2633
        %v2922 = vpack.c.b16 %v2638, %v2634
        %v2923 = vpack.c.b16 %v2639, %v2635
        %v2924 = vpack.c.b16 %v2640, %v2636
        %v2925 = vpack.c.b16 %v2645, %v2641
        %v2926 = vpack.c.b16 %v2646, %v2642
        %v2927 = vpack.c.b16 %v2647, %v2643
        %v2928 = vpack.c.b16 %v2648, %v2644
        %v2929 = vpack.c.b16 %v2653, %v2649
        %v2930 = vpack.c.b16 %v2654, %v2650
        %v2931 = vpack.c.b16 %v2655, %v2651
        %v2932 = vpack.c.b16 %v2656, %v2652
        %v2933 = vpack.c.b16 %v2661, %v2657
        %v2934 = vpack.c.b16 %v2662, %v2658
        %v2935 = vpack.c.b16 %v2663, %v2659
        %v2936 = vpack.c.b16 %v2664, %v2660
        %v2937 = vpack.c.b16 %v2669, %v2665
        %v2938 = vpack.c.b16 %v2670, %v2666
        %v2939 = vpack.c.b16 %v2671, %v2667
        %v2940 = vpack.c.b16 %v2672, %v2668
        %v2941 = vpack.c.b16 %v2677, %v2673
        %v2942 = vpack.c.b16 %v2678, %v2674
        %v2943 = vpack.c.b16 %v2679, %v2675
        %v2944 = vpack.c.b16 %v2680, %v2676
        %v2945 = vpack.c.b16 %v2685, %v2681
        %v2946 = vpack.c.b16 %v2686, %v2682
        %v2947 = vpack.c.b16 %v2687, %v2683
        %v2948 = vpack.c.b16 %v2688, %v2684
        %v2949 = vpack.c.b16 %v2693, %v2689
        %v2950 = vpack.c.b16 %v2694, %v2690
        %v2951 = vpack.c.b16 %v2695, %v2691
        %v2952 = vpack.c.b16 %v2696, %v2692
        %v2953 = vpack.c.b16 %v2701, %v2697
        %v2954 = vpack.c.b16 %v2702, %v2698
        %v2955 = vpack.c.b16 %v2703, %v2699
        %v2956 = vpack.c.b16 %v2704, %v2700
        %v2957 = vpack.c.b16 %v2709, %v2705
        %v2958 = vpack.c.b16 %v2710, %v2706
        %v2959 = vpack.c.b16 %v2711, %v2707
        %v2960 = vpack.c.b16 %v2712, %v2708
        %v2961 = vpack.c.b16 %v2717, %v2713
        %v2962 = vpack.c.b16 %v2718, %v2714
        %v2963 = vpack.c.b16 %v2719, %v2715
        %v2964 = vpack.c.b16 %v2720, %v2716
        %v2965 = vpack.c.b16 %v2725, %v2721
        %v2966 = vpack.c.b16 %v2726, %v2722
        %v2967 = vpack.c.b16 %v2727, %v2723
        %v2968 = vpack.c.b16 %v2728, %v2724
        %v2969 = vpack.c.b16 %v2733, %v2729
        %v2970 = vpack.c.b16 %v2734, %v2730
        %v2971 = vpack.c.b16 %v2735, %v2731
        %v2972 = vpack.c.b16 %v2736, %v2732
        %v2973 = vpack.c.b16 %v2741, %v2737
        %v2974 = vpack.c.b16 %v2742, %v2738
        %v2975 = vpack.c.b16 %v2743, %v2739
        %v2976 = vpack.c.b16 %v2744, %v2740
        %v2977 = vpack.c.b16 %v2749, %v2745
        %v2978 = vpack.c.b16 %v2750, %v2746
        %v2979 = vpack.c.b16 %v2751, %v2747
        %v2980 = vpack.c.b16 %v2752, %v2748
        %v2981 = vpack.c.b16 %v2757, %v2753
        %v2982 = vpack.c.b16 %v2758, %v2754
        %v2983 = vpack.c.b16 %v2759, %v2755
        %v2984 = vpack.c.b16 %v2760, %v2756
        %v2985 = vpack.c.b16 %v2765, %v2761
        %v2986 = vpack.c.b16 %v2766, %v2762
        %v2987 = vpack.c.b16 %v2767, %v2763
        %v2988 = vpack.c.b16 %v2768, %v2764
        %v2989 = vpack.c.b16 %v2773, %v2769
        %v2990 = vpack.c.b16 %v2774, %v2770
        %v2991 = vpack.c.b16 %v2775, %v2771
        %v2992 = vpack.c.b16 %v2776, %v2772
        %v2993 = vpack.c.b16 %v2781, %v2777
        %v2994 = vpack.c.b16 %v2782, %v2778
        %v2995 = vpack.c.b16 %v2783, %v2779
        %v2996 = vpack.c.b16 %v2784, %v2780
        %v2997 = vpack.c.b16 %v2789, %v2785
        %v2998 = vpack.c.b16 %v2790, %v2786
        %v2999 = vpack.c.b16 %v2791, %v2787
        %v3000 = vpack.c.b16 %v2792, %v2788
        %v3001 = vpack.c.b16 %v2797, %v2793
        %v3002 = vpack.c.b16 %v2798, %v2794
        %v3003 = vpack.c.b16 %v2799, %v2795
        %v3004 = vpack.c.b16 %v2800, %v2796
        %v3005 = vpack.c.b16 %v2805, %v2801
        %v3006 = vpack.c.b16 %v2806, %v2802
        %v3007 = vpack.c.b16 %v2807, %v2803
        %v3008 = vpack.c.b16 %v2808, %v2804
        %v3009 = vpack.c.b16 %v2813, %v2809
        %v3010 = vpack.c.b16 %v2814, %v2810
        %v3011 = vpack.c.b16 %v2815, %v2811
        %v3012 = vpack.c.b16 %v2816, %v2812
        %v3013 = vpack.c.b16 %v2821, %v2817
        %v3014 = vpack.c.b16 %v2822, %v2818
        %v3015 = vpack.c.b16 %v2823, %v2819
        %v3016 = vpack.c.b16 %v2824, %v2820
        %v3017 = vpack.c.b16 %v2829, %v2825
        %v3018 = vpack.c.b16 %v2830, %v2826
        %v3019 = vpack.c.b16 %v2831, %v2827
        %v3020 = vpack.c.b16 %v2832, %v2828
        %v3021 = vpack.c.b16 %v2837, %v2833
        %v3022 = vpack.c.b16 %v2838, %v2834
        %v3023 = vpack.c.b16 %v2839, %v2835
        %v3024 = vpack.c.b16 %v2840, %v2836
        %v3025 = vpack.c.b16 %v2845, %v2841
        %v3026 = vpack.c.b16 %v2846, %v2842
        %v3027 = vpack.c.b16 %v2847, %v2843
        %v3028 = vpack.c.b16 %v2848, %v2844
        %v3029 = vpack.c.b16 %v2853, %v2849
        %v3030 = vpack.c.b16 %v2854, %v2850
        %v3031 = vpack.c.b16 %v2855, %v2851
        %v3032 = vpack.c.b16 %v2856, %v2852
        %v3033 = vpack.c.b16 %v2861, %v2857
        %v3034 = vpack.c.b16 %v2862, %v2858
        %v3035 = vpack.c.b16 %v2863, %v2859
        %v3036 = vpack.c.b16 %v2864, %v2860
        %vm3205 = vcmask 359424
        %v3207 = vsel %vm3205, %v2178, 0
        %v3210 = vsel %vm3205, %v2184, 0
        %v3213 = vsel %vm3205, %v2190, 0
        %v3216 = vsel %vm3205, %v2196, 0
        %v3219 = vsel %vm3205, %v2202, 0
        %v3222 = vsel %vm3205, %v2208, 0
        %v3225 = vsel %vm3205, %v2214, 0
        %v3228 = vsel %vm3205, %v2220, 0
        %v3231 = vsel %vm3205, %v2226, 0
        %v3234 = vsel %vm3205, %v2232, 0
        %v3237 = vsel %vm3205, %v2238, 0
        %v3240 = vsel %vm3205, %v2244, 0
        %v3243 = vsel %vm3205, %v2250, 0
        %v3246 = vsel %vm3205, %v2256, 0
        %v3249 = vsel %vm3205, %v2262, 0
        %v3252 = vsel %vm3205, %v2268, 0
        %vm3254 = vcmask 1045504
        %v3256 = vsel %vm3254, %v3033, 0
        %v3259 = vsel %vm3254, %v3034, 0
        %v3262 = vsel %vm3254, %v3035, 0
        %v3265 = vsel %vm3254, %v3036, 0
        %3267 = vmatprep.subr.bf16.mxu0 %v2866
        %3268 = vmatpush1.bf16.msra.mxu0 %v2865
        %3269 = vmatprep.subr.bf16.mxu0 %v2870
        %3270 = vmatpush1.bf16.msra.mxu0 %v2869
        %3271 = vmatprep.subr.bf16.mxu0 %v2874
        %3272 = vmatpush1.bf16.msra.mxu0 %v2873
        %3273 = vmatprep.subr.bf16.mxu0 %v2878
        %3274 = vmatpush1.bf16.msra.mxu0 %v2877
        %3275 = vmatprep.subr.bf16.mxu0 %v2882
        %3276 = vmatpush1.bf16.msra.mxu0 %v2881
        %3277 = vmatprep.subr.bf16.mxu0 %v2886
        %3278 = vmatpush1.bf16.msra.mxu0 %v2885
        %3279 = vmatprep.subr.bf16.mxu0 %v2890
        %3280 = vmatpush1.bf16.msra.mxu0 %v2889
        %3281 = vmatprep.subr.bf16.mxu0 %v2894
        %3282 = vmatpush1.bf16.msra.mxu0 %v2893
        %3283 = vmatprep.subr.bf16.mxu0 %v2898
        %3284 = vmatpush1.bf16.msra.mxu0 %v2897
        %3285 = vmatprep.subr.bf16.mxu0 %v2902
        %3286 = vmatpush1.bf16.msra.mxu0 %v2901
        %3287 = vmatprep.subr.bf16.mxu0 %v2906
        %3288 = vmatpush1.bf16.msra.mxu0 %v2905
        %3289 = vmatprep.subr.bf16.mxu0 %v2910
        %3290 = vmatpush1.bf16.msra.mxu0 %v2909
        %3291 = vmatprep.subr.bf16.mxu0 %v2914
        %3292 = vmatpush1.bf16.msra.mxu0 %v2913
        %3293 = vmatprep.subr.bf16.mxu0 %v2918
        %3294 = vmatpush1.bf16.msra.mxu0 %v2917
        %3295 = vmatprep.subr.bf16.mxu0 %v2922
        %3296 = vmatpush1.bf16.msra.mxu0 %v2921
        %3297 = vmatprep.subr.bf16.mxu0 %v2926
        %3298 = vmatpush1.bf16.msra.mxu0 %v2925
        %3299 = vmatprep.mubr.bf16.mxu0 %v2174
        %3300 = vmatmul.mubr.bf16.gmra.mrb[0].mxu0 %v2173
        %v3301 = vpop.f32.mrb[0].mxu0
        %v3302 = vadd.f32 %v1534, %v3301
        %v3303 = vpop.f32.mrb[0].mxu0
        %v3304 = vadd.f32 %v1536, %v3303
        %v3305 = vpop.f32.mrb[0].mxu0
        %v3306 = vadd.f32 %v1538, %v3305
        %v3307 = vpop.f32.mrb[0].mxu0
        %v3308 = vadd.f32 %v1540, %v3307
        %3309 = vmatprep.mubr.bf16.mxu0 %v2180
        %3310 = vmatmul.mubr.bf16.gmra.mrb[0].mxu0 %v2179
        %v3311 = vpop.f32.mrb[0].mxu0
        %v3312 = vadd.f32 %v1544, %v3311
        %v3313 = vpop.f32.mrb[0].mxu0
        %v3314 = vadd.f32 %v1546, %v3313
        %v3315 = vpop.f32.mrb[0].mxu0
        %v3316 = vadd.f32 %v1548, %v3315
        %v3317 = vpop.f32.mrb[0].mxu0
        %v3318 = vadd.f32 %v1550, %v3317
        %3319 = vmatprep.mubr.bf16.mxu0 %v2186
        %3320 = vmatmul.mubr.bf16.gmra.mrb[0].mxu0 %v2185
        %v3321 = vpop.f32.mrb[0].mxu0
        %v3322 = vadd.f32 %v1554, %v3321
        %v3323 = vpop.f32.mrb[0].mxu0
        %v3324 = vadd.f32 %v1556, %v3323
        %v3325 = vpop.f32.mrb[0].mxu0
        %v3326 = vadd.f32 %v1558, %v3325
        %v3327 = vpop.f32.mrb[0].mxu0
        %v3328 = vadd.f32 %v1560, %v3327
        %3329 = vmatprep.mubr.bf16.mxu0 %v2192
        %3330 = vmatmul.mubr.bf16.gmra.mrb[0].mxu0 %v2191
        %v3331 = vpop.f32.mrb[0].mxu0
        %v3332 = vadd.f32 %v1564, %v3331
        %v3333 = vpop.f32.mrb[0].mxu0
        %v3334 = vadd.f32 %v1566, %v3333
        %v3335 = vpop.f32.mrb[0].mxu0
        %v3336 = vadd.f32 %v1568, %v3335
        %v3337 = vpop.f32.mrb[0].mxu0
        %v3338 = vadd.f32 %v1570, %v3337
        %3339 = vmatprep.mubr.bf16.mxu0 %v2198
        %3340 = vmatmul.mubr.bf16.gmra.mrb[0].mxu0 %v2197
        %v3341 = vpop.f32.mrb[0].mxu0
        %v3342 = vadd.f32 %v1574, %v3341
        %v3343 = vpop.f32.mrb[0].mxu0
        %v3344 = vadd.f32 %v1576, %v3343
        %v3345 = vpop.f32.mrb[0].mxu0
        %v3346 = vadd.f32 %v1578, %v3345
        %v3347 = vpop.f32.mrb[0].mxu0
        %v3348 = vadd.f32 %v1580, %v3347
        %3349 = vmatprep.mubr.bf16.mxu0 %v2204
        %3350 = vmatmul.mubr.bf16.gmra.mrb[0].mxu0 %v2203
        %v3351 = vpop.f32.mrb[0].mxu0
        %v3352 = vadd.f32 %v1584, %v3351
        %v3353 = vpop.f32.mrb[0].mxu0
        %v3354 = vadd.f32 %v1586, %v3353
        %v3355 = vpop.f32.mrb[0].mxu0
        %v3356 = vadd.f32 %v1588, %v3355
        %v3357 = vpop.f32.mrb[0].mxu0
        %v3358 = vadd.f32 %v1590, %v3357
        %3359 = vmatprep.mubr.bf16.mxu0 %v2210
        %3360 = vmatmul.mubr.bf16.gmra.mrb[0].mxu0 %v2209
        %v3361 = vpop.f32.mrb[0].mxu0
        %v3362 = vadd.f32 %v1594, %v3361
        %v3363 = vpop.f32.mrb[0].mxu0
        %v3364 = vadd.f32 %v1596, %v3363
        %v3365 = vpop.f32.mrb[0].mxu0
        %v3366 = vadd.f32 %v1598, %v3365
        %v3367 = vpop.f32.mrb[0].mxu0
        %v3368 = vadd.f32 %v1600, %v3367
        %3369 = vmatprep.mubr.bf16.mxu0 %v2216
        %3370 = vmatmul.mubr.bf16.gmra.mrb[0].mxu0 %v2215
        %v3371 = vpop.f32.mrb[0].mxu0
        %v3372 = vadd.f32 %v1604, %v3371
        %v3373 = vpop.f32.mrb[0].mxu0
        %v3374 = vadd.f32 %v1606, %v3373
        %v3375 = vpop.f32.mrb[0].mxu0
        %v3376 = vadd.f32 %v1608, %v3375
        %v3377 = vpop.f32.mrb[0].mxu0
        %v3378 = vadd.f32 %v1610, %v3377
        %3379 = vmatprep.mubr.bf16.mxu0 %v2222
        %3380 = vmatmul.mubr.bf16.gmra.mrb[0].mxu0 %v2221
        %v3381 = vpop.f32.mrb[0].mxu0
        %v3382 = vadd.f32 %v1614, %v3381
        %v3383 = vpop.f32.mrb[0].mxu0
        %v3384 = vadd.f32 %v1616, %v3383
        %v3385 = vpop.f32.mrb[0].mxu0
        %v3386 = vadd.f32 %v1618, %v3385
        %v3387 = vpop.f32.mrb[0].mxu0
        %v3388 = vadd.f32 %v1620, %v3387
        %3389 = vmatprep.mubr.bf16.mxu0 %v2228
        %3390 = vmatmul.mubr.bf16.gmra.mrb[0].mxu0 %v2227
        %v3391 = vpop.f32.mrb[0].mxu0
        %v3392 = vadd.f32 %v1624, %v3391
        %v3393 = vpop.f32.mrb[0].mxu0
        %v3394 = vadd.f32 %v1626, %v3393
        %v3395 = vpop.f32.mrb[0].mxu0
        %v3396 = vadd.f32 %v1628, %v3395
        %v3397 = vpop.f32.mrb[0].mxu0
        %v3398 = vadd.f32 %v1630, %v3397
        %3399 = vmatprep.mubr.bf16.mxu0 %v2234
        %3400 = vmatmul.mubr.bf16.gmra.mrb[0].mxu0 %v2233
        %v3401 = vpop.f32.mrb[0].mxu0
        %v3402 = vadd.f32 %v1634, %v3401
        %v3403 = vpop.f32.mrb[0].mxu0
        %v3404 = vadd.f32 %v1636, %v3403
        %v3405 = vpop.f32.mrb[0].mxu0
        %v3406 = vadd.f32 %v1638, %v3405
        %v3407 = vpop.f32.mrb[0].mxu0
        %v3408 = vadd.f32 %v1640, %v3407
        %3409 = vmatprep.mubr.bf16.mxu0 %v2240
        %3410 = vmatmul.mubr.bf16.gmra.mrb[0].mxu0 %v2239
        %v3411 = vpop.f32.mrb[0].mxu0
        %v3412 = vadd.f32 %v1644, %v3411
        %v3413 = vpop.f32.mrb[0].mxu0
        %v3414 = vadd.f32 %v1646, %v3413
        %v3415 = vpop.f32.mrb[0].mxu0
        %v3416 = vadd.f32 %v1648, %v3415
        %v3417 = vpop.f32.mrb[0].mxu0
        %v3418 = vadd.f32 %v1650, %v3417
        %3419 = vmatprep.mubr.bf16.mxu0 %v2246
        %3420 = vmatmul.mubr.bf16.gmra.mrb[0].mxu0 %v2245
        %v3421 = vpop.f32.mrb[0].mxu0
        %v3422 = vadd.f32 %v1654, %v3421
        %v3423 = vpop.f32.mrb[0].mxu0
        %v3424 = vadd.f32 %v1656, %v3423
        %v3425 = vpop.f32.mrb[0].mxu0
        %v3426 = vadd.f32 %v1658, %v3425
        %v3427 = vpop.f32.mrb[0].mxu0
        %v3428 = vadd.f32 %v1660, %v3427
        %3429 = vmatprep.mubr.bf16.mxu0 %v2252
        %3430 = vmatmul.mubr.bf16.gmra.mrb[0].mxu0 %v2251
        %v3431 = vpop.f32.mrb[0].mxu0
        %v3432 = vadd.f32 %v1664, %v3431
        %v3433 = vpop.f32.mrb[0].mxu0
        %v3434 = vadd.f32 %v1666, %v3433
        %v3435 = vpop.f32.mrb[0].mxu0
        %v3436 = vadd.f32 %v1668, %v3435
        %v3437 = vpop.f32.mrb[0].mxu0
        %v3438 = vadd.f32 %v1670, %v3437
        %3439 = vmatprep.mubr.bf16.mxu0 %v2258
        %3440 = vmatmul.mubr.bf16.gmra.mrb[0].mxu0 %v2257
        %v3441 = vpop.f32.mrb[0].mxu0
        %v3442 = vadd.f32 %v1674, %v3441
        %v3443 = vpop.f32.mrb[0].mxu0
        %v3444 = vadd.f32 %v1676, %v3443
        %v3445 = vpop.f32.mrb[0].mxu0
        %v3446 = vadd.f32 %v1678, %v3445
        %v3447 = vpop.f32.mrb[0].mxu0
        %v3448 = vadd.f32 %v1680, %v3447
        %3449 = vmatprep.mubr.bf16.mxu0 %v2264
        %3450 = vmatmul.mubr.bf16.gmra.mrb[0].mxu0 %v2263
        %v3451 = vpop.f32.mrb[0].mxu0
        %v3452 = vadd.f32 %v1684, %v3451
        %v3453 = vpop.f32.mrb[0].mxu0
        %v3454 = vadd.f32 %v1686, %v3453
        %v3455 = vpop.f32.mrb[0].mxu0
        %v3456 = vadd.f32 %v1688, %v3455
        %v3457 = vpop.f32.mrb[0].mxu0
        %v3458 = vadd.f32 %v1690, %v3457
        %3459 = vdwg.mxu0
        %3460 = vmatprep.subr.bf16.mxu0 %v2930
        %3461 = vmatpush1.bf16.msra.mxu0 %v2929
        %3462 = vmatprep.subr.bf16.mxu0 %v2934
        %3463 = vmatpush1.bf16.msra.mxu0 %v2933
        %3464 = vmatprep.subr.bf16.mxu0 %v2938
        %3465 = vmatpush1.bf16.msra.mxu0 %v2937
        %3466 = vmatprep.subr.bf16.mxu0 %v2942
        %3467 = vmatpush1.bf16.msra.mxu0 %v2941
        %3468 = vmatprep.subr.bf16.mxu0 %v2946
        %3469 = vmatpush1.bf16.msra.mxu0 %v2945
        %3470 = vmatprep.subr.bf16.mxu0 %v2950
        %3471 = vmatpush1.bf16.msra.mxu0 %v2949
        %3472 = vmatprep.subr.bf16.mxu0 %v2954
        %3473 = vmatpush1.bf16.msra.mxu0 %v2953
        %3474 = vmatprep.subr.bf16.mxu0 %v2958
        %3475 = vmatpush1.bf16.msra.mxu0 %v2957
        %3476 = vmatprep.subr.bf16.mxu0 %v2962
        %3477 = vmatpush1.bf16.msra.mxu0 %v2961
        %3478 = vmatprep.subr.bf16.mxu0 %v2966
        %3479 = vmatpush1.bf16.msra.mxu0 %v2965
        %3480 = vmatprep.subr.bf16.mxu0 %v2970
        %3481 = vmatpush1.bf16.msra.mxu0 %v2969
        %3482 = vmatprep.subr.bf16.mxu0 %v2974
        %3483 = vmatpush1.bf16.msra.mxu0 %v2973
        %3484 = vmatprep.subr.bf16.mxu0 %v2978
        %3485 = vmatpush1.bf16.msra.mxu0 %v2977
        %3486 = vmatprep.subr.bf16.mxu0 %v2982
        %3487 = vmatpush1.bf16.msra.mxu0 %v2981
        %3488 = vmatprep.subr.bf16.mxu0 %v2986
        %3489 = vmatpush1.bf16.msra.mxu0 %v2985
        %3490 = vmatprep.subr.bf16.mxu0 %v2990
        %3491 = vmatpush1.bf16.msra.mxu0 %v2989
        %3492 = vmatprep.mubr.bf16.mxu0 %v2176
        %3493 = vmatmul.mubr.bf16.gmra.mrb[0].mxu0 %v2175
        %v3494 = vpop.f32.mrb[0].mxu0
        %v3495 = vadd.f32 %v3302, %v3494
        %v3496 = vpop.f32.mrb[0].mxu0
        %v3497 = vadd.f32 %v3304, %v3496
        %v3498 = vpop.f32.mrb[0].mxu0
        %v3499 = vadd.f32 %v3306, %v3498
        %v3500 = vpop.f32.mrb[0].mxu0
        %v3501 = vadd.f32 %v3308, %v3500
        %3502 = vmatprep.mubr.bf16.mxu0 %v2182
        %3503 = vmatmul.mubr.bf16.gmra.mrb[0].mxu0 %v2181
        %v3504 = vpop.f32.mrb[0].mxu0
        %v3505 = vadd.f32 %v3312, %v3504
        %v3506 = vpop.f32.mrb[0].mxu0
        %v3507 = vadd.f32 %v3314, %v3506
        %v3508 = vpop.f32.mrb[0].mxu0
        %v3509 = vadd.f32 %v3316, %v3508
        %v3510 = vpop.f32.mrb[0].mxu0
        %v3511 = vadd.f32 %v3318, %v3510
        %3512 = vmatprep.mubr.bf16.mxu0 %v2188
        %3513 = vmatmul.mubr.bf16.gmra.mrb[0].mxu0 %v2187
        %v3514 = vpop.f32.mrb[0].mxu0
        %v3515 = vadd.f32 %v3322, %v3514
        %v3516 = vpop.f32.mrb[0].mxu0
        %v3517 = vadd.f32 %v3324, %v3516
        %v3518 = vpop.f32.mrb[0].mxu0
        %v3519 = vadd.f32 %v3326, %v3518
        %v3520 = vpop.f32.mrb[0].mxu0
        %v3521 = vadd.f32 %v3328, %v3520
        %3522 = vmatprep.mubr.bf16.mxu0 %v2194
        %3523 = vmatmul.mubr.bf16.gmra.mrb[0].mxu0 %v2193
        %v3524 = vpop.f32.mrb[0].mxu0
        %v3525 = vadd.f32 %v3332, %v3524
        %v3526 = vpop.f32.mrb[0].mxu0
        %v3527 = vadd.f32 %v3334, %v3526
        %v3528 = vpop.f32.mrb[0].mxu0
        %v3529 = vadd.f32 %v3336, %v3528
        %v3530 = vpop.f32.mrb[0].mxu0
        %v3531 = vadd.f32 %v3338, %v3530
        %3532 = vmatprep.mubr.bf16.mxu0 %v2200
        %3533 = vmatmul.mubr.bf16.gmra.mrb[0].mxu0 %v2199
        %v3534 = vpop.f32.mrb[0].mxu0
        %v3535 = vadd.f32 %v3342, %v3534
        %v3536 = vpop.f32.mrb[0].mxu0
        %v3537 = vadd.f32 %v3344, %v3536
        %v3538 = vpop.f32.mrb[0].mxu0
        %v3539 = vadd.f32 %v3346, %v3538
        %v3540 = vpop.f32.mrb[0].mxu0
        %v3541 = vadd.f32 %v3348, %v3540
        %3542 = vmatprep.mubr.bf16.mxu0 %v2206
        %3543 = vmatmul.mubr.bf16.gmra.mrb[0].mxu0 %v2205
        %v3544 = vpop.f32.mrb[0].mxu0
        %v3545 = vadd.f32 %v3352, %v3544
        %v3546 = vpop.f32.mrb[0].mxu0
        %v3547 = vadd.f32 %v3354, %v3546
        %v3548 = vpop.f32.mrb[0].mxu0
        %v3549 = vadd.f32 %v3356, %v3548
        %v3550 = vpop.f32.mrb[0].mxu0
        %v3551 = vadd.f32 %v3358, %v3550
        %3552 = vmatprep.mubr.bf16.mxu0 %v2212
        %3553 = vmatmul.mubr.bf16.gmra.mrb[0].mxu0 %v2211
        %v3554 = vpop.f32.mrb[0].mxu0
        %v3555 = vadd.f32 %v3362, %v3554
        %v3556 = vpop.f32.mrb[0].mxu0
        %v3557 = vadd.f32 %v3364, %v3556
        %v3558 = vpop.f32.mrb[0].mxu0
        %v3559 = vadd.f32 %v3366, %v3558
        %v3560 = vpop.f32.mrb[0].mxu0
        %v3561 = vadd.f32 %v3368, %v3560
        %3562 = vmatprep.mubr.bf16.mxu0 %v2218
        %3563 = vmatmul.mubr.bf16.gmra.mrb[0].mxu0 %v2217
        %v3564 = vpop.f32.mrb[0].mxu0
        %v3565 = vadd.f32 %v3372, %v3564
        %v3566 = vpop.f32.mrb[0].mxu0
        %v3567 = vadd.f32 %v3374, %v3566
        %v3568 = vpop.f32.mrb[0].mxu0
        %v3569 = vadd.f32 %v3376, %v3568
        %v3570 = vpop.f32.mrb[0].mxu0
        %v3571 = vadd.f32 %v3378, %v3570
        %3572 = vmatprep.mubr.bf16.mxu0 %v2224
        %3573 = vmatmul.mubr.bf16.gmra.mrb[0].mxu0 %v2223
        %v3574 = vpop.f32.mrb[0].mxu0
        %v3575 = vadd.f32 %v3382, %v3574
        %v3576 = vpop.f32.mrb[0].mxu0
        %v3577 = vadd.f32 %v3384, %v3576
        %v3578 = vpop.f32.mrb[0].mxu0
        %v3579 = vadd.f32 %v3386, %v3578
        %v3580 = vpop.f32.mrb[0].mxu0
        %v3581 = vadd.f32 %v3388, %v3580
        %3582 = vmatprep.mubr.bf16.mxu0 %v2230
        %3583 = vmatmul.mubr.bf16.gmra.mrb[0].mxu0 %v2229
        %v3584 = vpop.f32.mrb[0].mxu0
        %v3585 = vadd.f32 %v3392, %v3584
        %v3586 = vpop.f32.mrb[0].mxu0
        %v3587 = vadd.f32 %v3394, %v3586
        %v3588 = vpop.f32.mrb[0].mxu0
        %v3589 = vadd.f32 %v3396, %v3588
        %v3590 = vpop.f32.mrb[0].mxu0
        %v3591 = vadd.f32 %v3398, %v3590
        %3592 = vmatprep.mubr.bf16.mxu0 %v2236
        %3593 = vmatmul.mubr.bf16.gmra.mrb[0].mxu0 %v2235
        %v3594 = vpop.f32.mrb[0].mxu0
        %v3595 = vadd.f32 %v3402, %v3594
        %v3596 = vpop.f32.mrb[0].mxu0
        %v3597 = vadd.f32 %v3404, %v3596
        %v3598 = vpop.f32.mrb[0].mxu0
        %v3599 = vadd.f32 %v3406, %v3598
        %v3600 = vpop.f32.mrb[0].mxu0
        %v3601 = vadd.f32 %v3408, %v3600
        %3602 = vmatprep.mubr.bf16.mxu0 %v2242
        %3603 = vmatmul.mubr.bf16.gmra.mrb[0].mxu0 %v2241
        %v3604 = vpop.f32.mrb[0].mxu0
        %v3605 = vadd.f32 %v3412, %v3604
        %v3606 = vpop.f32.mrb[0].mxu0
        %v3607 = vadd.f32 %v3414, %v3606
        %v3608 = vpop.f32.mrb[0].mxu0
        %v3609 = vadd.f32 %v3416, %v3608
        %v3610 = vpop.f32.mrb[0].mxu0
        %v3611 = vadd.f32 %v3418, %v3610
        %3612 = vmatprep.mubr.bf16.mxu0 %v2248
        %3613 = vmatmul.mubr.bf16.gmra.mrb[0].mxu0 %v2247
        %v3614 = vpop.f32.mrb[0].mxu0
        %v3615 = vadd.f32 %v3422, %v3614
        %v3616 = vpop.f32.mrb[0].mxu0
        %v3617 = vadd.f32 %v3424, %v3616
        %v3618 = vpop.f32.mrb[0].mxu0
        %v3619 = vadd.f32 %v3426, %v3618
        %v3620 = vpop.f32.mrb[0].mxu0
        %v3621 = vadd.f32 %v3428, %v3620
        %3622 = vmatprep.mubr.bf16.mxu0 %v2254
        %3623 = vmatmul.mubr.bf16.gmra.mrb[0].mxu0 %v2253
        %v3624 = vpop.f32.mrb[0].mxu0
        %v3625 = vadd.f32 %v3432, %v3624
        %v3626 = vpop.f32.mrb[0].mxu0
        %v3627 = vadd.f32 %v3434, %v3626
        %v3628 = vpop.f32.mrb[0].mxu0
        %v3629 = vadd.f32 %v3436, %v3628
        %v3630 = vpop.f32.mrb[0].mxu0
        %v3631 = vadd.f32 %v3438, %v3630
        %3632 = vmatprep.mubr.bf16.mxu0 %v2260
        %3633 = vmatmul.mubr.bf16.gmra.mrb[0].mxu0 %v2259
        %v3634 = vpop.f32.mrb[0].mxu0
        %v3635 = vadd.f32 %v3442, %v3634
        %v3636 = vpop.f32.mrb[0].mxu0
        %v3637 = vadd.f32 %v3444, %v3636
        %v3638 = vpop.f32.mrb[0].mxu0
        %v3639 = vadd.f32 %v3446, %v3638
        %v3640 = vpop.f32.mrb[0].mxu0
        %v3641 = vadd.f32 %v3448, %v3640
        %3642 = vmatprep.mubr.bf16.mxu0 %v2266
        %3643 = vmatmul.mubr.bf16.gmra.mrb[0].mxu0 %v2265
        %v3644 = vpop.f32.mrb[0].mxu0
        %v3645 = vadd.f32 %v3452, %v3644
        %v3646 = vpop.f32.mrb[0].mxu0
        %v3647 = vadd.f32 %v3454, %v3646
        %v3648 = vpop.f32.mrb[0].mxu0
        %v3649 = vadd.f32 %v3456, %v3648
        %v3650 = vpop.f32.mrb[0].mxu0
        %v3651 = vadd.f32 %v3458, %v3650
        %3652 = vdwg.mxu0
        %3653 = vmatprep.subr.bf16.mxu0 %v2994
        %3654 = vmatpush1.bf16.msra.mxu0 %v2993
        %3655 = vmatprep.subr.bf16.mxu0 %v2998
        %3656 = vmatpush1.bf16.msra.mxu0 %v2997
        %3657 = vmatprep.subr.bf16.mxu0 %v3002
        %3658 = vmatpush1.bf16.msra.mxu0 %v3001
        %3659 = vmatprep.subr.bf16.mxu0 %v3006
        %3660 = vmatpush1.bf16.msra.mxu0 %v3005
        %3661 = vmatprep.subr.bf16.mxu0 %v3010
        %3662 = vmatpush1.bf16.msra.mxu0 %v3009
        %3663 = vmatprep.subr.bf16.mxu0 %v3014
        %3664 = vmatpush1.bf16.msra.mxu0 %v3013
        %3665 = vmatprep.subr.bf16.mxu0 %v3018
        %3666 = vmatpush1.bf16.msra.mxu0 %v3017
        %3667 = vmatprep.subr.bf16.mxu0 %v3022
        %3668 = vmatpush1.bf16.msra.mxu0 %v3021
        %3669 = vmatprep.subr.bf16.mxu0 %v3026
        %3670 = vmatpush1.bf16.msra.mxu0 %v3025
        %3671 = vmatprep.subr.bf16.mxu0 %v3030
        %3672 = vmatpush1.bf16.msra.mxu0 %v3029
        %3673 = vmatprep.subr.bf16.mxu0 %v3259
        %3674 = vmatpush1.bf16.msra.mxu0 %v3256
        %3675 = vmatprep.subr.bf16.mxu0 0
        %3676 = vmatpush1.bf16.msra.mxu0 0
        %3677 = vmatprep.subr.bf16.mxu0 0
        %3678 = vmatpush1.bf16.msra.mxu0 0
        %3679 = vmatprep.subr.bf16.mxu0 0
        %3680 = vmatpush1.bf16.msra.mxu0 0
        %3681 = vmatprep.subr.bf16.mxu0 0
        %3682 = vmatpush1.bf16.msra.mxu0 0
        %3683 = vmatprep.subr.bf16.mxu0 0
        %3684 = vmatpush1.bf16.msra.mxu0 0
        %3685 = vmatprep.mubr.bf16.mxu0 %v3207
        %3686 = vmatmul.mubr.bf16.gmra.mrb[0].mxu0 %v2177
        %v3687 = vpop.f32.mrb[0].mxu0
        %v3688 = vadd.f32 %v3495, %v3687
        %v3689 = vpop.f32.mrb[0].mxu0
        %v3690 = vadd.f32 %v3497, %v3689
        %v3691 = vpop.f32.mrb[0].mxu0
        %v3692 = vadd.f32 %v3499, %v3691
        %v3693 = vpop.f32.mrb[0].mxu0
        %v3694 = vadd.f32 %v3501, %v3693
        %3695 = vmatprep.mubr.bf16.mxu0 %v3210
        %3696 = vmatmul.mubr.bf16.gmra.mrb[0].mxu0 %v2183
        %v3697 = vpop.f32.mrb[0].mxu0
        %v3698 = vadd.f32 %v3505, %v3697
        %v3699 = vpop.f32.mrb[0].mxu0
        %v3700 = vadd.f32 %v3507, %v3699
        %v3701 = vpop.f32.mrb[0].mxu0
        %v3702 = vadd.f32 %v3509, %v3701
        %v3703 = vpop.f32.mrb[0].mxu0
        %v3704 = vadd.f32 %v3511, %v3703
        %3705 = vmatprep.mubr.bf16.mxu0 %v3213
        %3706 = vmatmul.mubr.bf16.gmra.mrb[0].mxu0 %v2189
        %v3707 = vpop.f32.mrb[0].mxu0
        %v3708 = vadd.f32 %v3515, %v3707
        %v3709 = vpop.f32.mrb[0].mxu0
        %v3710 = vadd.f32 %v3517, %v3709
        %v3711 = vpop.f32.mrb[0].mxu0
        %v3712 = vadd.f32 %v3519, %v3711
        %v3713 = vpop.f32.mrb[0].mxu0
        %v3714 = vadd.f32 %v3521, %v3713
        %3715 = vmatprep.mubr.bf16.mxu0 %v3216
        %3716 = vmatmul.mubr.bf16.gmra.mrb[0].mxu0 %v2195
        %v3717 = vpop.f32.mrb[0].mxu0
        %v3718 = vadd.f32 %v3525, %v3717
        %v3719 = vpop.f32.mrb[0].mxu0
        %v3720 = vadd.f32 %v3527, %v3719
        %v3721 = vpop.f32.mrb[0].mxu0
        %v3722 = vadd.f32 %v3529, %v3721
        %v3723 = vpop.f32.mrb[0].mxu0
        %v3724 = vadd.f32 %v3531, %v3723
        %3725 = vmatprep.mubr.bf16.mxu0 %v3219
        %3726 = vmatmul.mubr.bf16.gmra.mrb[0].mxu0 %v2201
        %v3727 = vpop.f32.mrb[0].mxu0
        %v3728 = vadd.f32 %v3535, %v3727
        %v3729 = vpop.f32.mrb[0].mxu0
        %v3730 = vadd.f32 %v3537, %v3729
        %v3731 = vpop.f32.mrb[0].mxu0
        %v3732 = vadd.f32 %v3539, %v3731
        %v3733 = vpop.f32.mrb[0].mxu0
        %v3734 = vadd.f32 %v3541, %v3733
        %3735 = vmatprep.mubr.bf16.mxu0 %v3222
        %3736 = vmatmul.mubr.bf16.gmra.mrb[0].mxu0 %v2207
        %v3737 = vpop.f32.mrb[0].mxu0
        %v3738 = vadd.f32 %v3545, %v3737
        %v3739 = vpop.f32.mrb[0].mxu0
        %v3740 = vadd.f32 %v3547, %v3739
        %v3741 = vpop.f32.mrb[0].mxu0
        %v3742 = vadd.f32 %v3549, %v3741
        %v3743 = vpop.f32.mrb[0].mxu0
        %v3744 = vadd.f32 %v3551, %v3743
        %3745 = vmatprep.mubr.bf16.mxu0 %v3225
        %3746 = vmatmul.mubr.bf16.gmra.mrb[0].mxu0 %v2213
        %v3747 = vpop.f32.mrb[0].mxu0
        %v3748 = vadd.f32 %v3555, %v3747
        %v3749 = vpop.f32.mrb[0].mxu0
        %v3750 = vadd.f32 %v3557, %v3749
        %v3751 = vpop.f32.mrb[0].mxu0
        %v3752 = vadd.f32 %v3559, %v3751
        %v3753 = vpop.f32.mrb[0].mxu0
        %v3754 = vadd.f32 %v3561, %v3753
        %3755 = vmatprep.mubr.bf16.mxu0 %v3228
        %3756 = vmatmul.mubr.bf16.gmra.mrb[0].mxu0 %v2219
        %v3757 = vpop.f32.mrb[0].mxu0
        %v3758 = vadd.f32 %v3565, %v3757
        %v3759 = vpop.f32.mrb[0].mxu0
        %v3760 = vadd.f32 %v3567, %v3759
        %v3761 = vpop.f32.mrb[0].mxu0
        %v3762 = vadd.f32 %v3569, %v3761
        %v3763 = vpop.f32.mrb[0].mxu0
        %v3764 = vadd.f32 %v3571, %v3763
        %3765 = vmatprep.mubr.bf16.mxu0 %v3231
        %3766 = vmatmul.mubr.bf16.gmra.mrb[0].mxu0 %v2225
        %v3767 = vpop.f32.mrb[0].mxu0
        %v3768 = vadd.f32 %v3575, %v3767
        %v3769 = vpop.f32.mrb[0].mxu0
        %v3770 = vadd.f32 %v3577, %v3769
        %v3771 = vpop.f32.mrb[0].mxu0
        %v3772 = vadd.f32 %v3579, %v3771
        %v3773 = vpop.f32.mrb[0].mxu0
        %v3774 = vadd.f32 %v3581, %v3773
        %3775 = vmatprep.mubr.bf16.mxu0 %v3234
        %3776 = vmatmul.mubr.bf16.gmra.mrb[0].mxu0 %v2231
        %v3777 = vpop.f32.mrb[0].mxu0
        %v3778 = vadd.f32 %v3585, %v3777
        %v3779 = vpop.f32.mrb[0].mxu0
        %v3780 = vadd.f32 %v3587, %v3779
        %v3781 = vpop.f32.mrb[0].mxu0
        %v3782 = vadd.f32 %v3589, %v3781
        %v3783 = vpop.f32.mrb[0].mxu0
        %v3784 = vadd.f32 %v3591, %v3783
        %3785 = vmatprep.mubr.bf16.mxu0 %v3237
        %3786 = vmatmul.mubr.bf16.gmra.mrb[0].mxu0 %v2237
        %v3787 = vpop.f32.mrb[0].mxu0
        %v3788 = vadd.f32 %v3595, %v3787
        %v3789 = vpop.f32.mrb[0].mxu0
        %v3790 = vadd.f32 %v3597, %v3789
        %v3791 = vpop.f32.mrb[0].mxu0
        %v3792 = vadd.f32 %v3599, %v3791
        %v3793 = vpop.f32.mrb[0].mxu0
        %v3794 = vadd.f32 %v3601, %v3793
        %3795 = vmatprep.mubr.bf16.mxu0 %v3240
        %3796 = vmatmul.mubr.bf16.gmra.mrb[0].mxu0 %v2243
        %v3797 = vpop.f32.mrb[0].mxu0
        %v3798 = vadd.f32 %v3605, %v3797
        %v3799 = vpop.f32.mrb[0].mxu0
        %v3800 = vadd.f32 %v3607, %v3799
        %v3801 = vpop.f32.mrb[0].mxu0
        %v3802 = vadd.f32 %v3609, %v3801
        %v3803 = vpop.f32.mrb[0].mxu0
        %v3804 = vadd.f32 %v3611, %v3803
        %3805 = vmatprep.mubr.bf16.mxu0 %v3243
        %3806 = vmatmul.mubr.bf16.gmra.mrb[0].mxu0 %v2249
        %v3807 = vpop.f32.mrb[0].mxu0
        %v3808 = vadd.f32 %v3615, %v3807
        %v3809 = vpop.f32.mrb[0].mxu0
        %v3810 = vadd.f32 %v3617, %v3809
        %v3811 = vpop.f32.mrb[0].mxu0
        %v3812 = vadd.f32 %v3619, %v3811
        %v3813 = vpop.f32.mrb[0].mxu0
        %v3814 = vadd.f32 %v3621, %v3813
        %3815 = vmatprep.mubr.bf16.mxu0 %v3246
        %3816 = vmatmul.mubr.bf16.gmra.mrb[0].mxu0 %v2255
        %v3817 = vpop.f32.mrb[0].mxu0
        %v3818 = vadd.f32 %v3625, %v3817
        %v3819 = vpop.f32.mrb[0].mxu0
        %v3820 = vadd.f32 %v3627, %v3819
        %v3821 = vpop.f32.mrb[0].mxu0
        %v3822 = vadd.f32 %v3629, %v3821
        %v3823 = vpop.f32.mrb[0].mxu0
        %v3824 = vadd.f32 %v3631, %v3823
        %3825 = vmatprep.mubr.bf16.mxu0 %v3249
        %3826 = vmatmul.mubr.bf16.gmra.mrb[0].mxu0 %v2261
        %v3827 = vpop.f32.mrb[0].mxu0
        %v3828 = vadd.f32 %v3635, %v3827
        %v3829 = vpop.f32.mrb[0].mxu0
        %v3830 = vadd.f32 %v3637, %v3829
        %v3831 = vpop.f32.mrb[0].mxu0
        %v3832 = vadd.f32 %v3639, %v3831
        %v3833 = vpop.f32.mrb[0].mxu0
        %v3834 = vadd.f32 %v3641, %v3833
        %3835 = vmatprep.mubr.bf16.mxu0 %v3252
        %3836 = vmatmul.mubr.bf16.gmra.mrb[0].mxu0 %v2267
        %v3837 = vpop.f32.mrb[0].mxu0
        %v3838 = vadd.f32 %v3645, %v3837
        %v3839 = vpop.f32.mrb[0].mxu0
        %v3840 = vadd.f32 %v3647, %v3839
        %v3841 = vpop.f32.mrb[0].mxu0
        %v3842 = vadd.f32 %v3649, %v3841
        %v3843 = vpop.f32.mrb[0].mxu0
        %v3844 = vadd.f32 %v3651, %v3843
        %3845 = vdwg.mxu0
        %3846 = vmatprep.subr.bf16.mxu0 %v2868
        %3847 = vmatpush1.bf16.msra.mxu0 %v2867
        %3848 = vmatprep.subr.bf16.mxu0 %v2872
        %3849 = vmatpush1.bf16.msra.mxu0 %v2871
        %3850 = vmatprep.subr.bf16.mxu0 %v2876
        %3851 = vmatpush1.bf16.msra.mxu0 %v2875
        %3852 = vmatprep.subr.bf16.mxu0 %v2880
        %3853 = vmatpush1.bf16.msra.mxu0 %v2879
        %3854 = vmatprep.subr.bf16.mxu0 %v2884
        %3855 = vmatpush1.bf16.msra.mxu0 %v2883
        %3856 = vmatprep.subr.bf16.mxu0 %v2888
        %3857 = vmatpush1.bf16.msra.mxu0 %v2887
        %3858 = vmatprep.subr.bf16.mxu0 %v2892
        %3859 = vmatpush1.bf16.msra.mxu0 %v2891
        %3860 = vmatprep.subr.bf16.mxu0 %v2896
        %3861 = vmatpush1.bf16.msra.mxu0 %v2895
        %3862 = vmatprep.subr.bf16.mxu0 %v2900
        %3863 = vmatpush1.bf16.msra.mxu0 %v2899
        %3864 = vmatprep.subr.bf16.mxu0 %v2904
        %3865 = vmatpush1.bf16.msra.mxu0 %v2903
        %3866 = vmatprep.subr.bf16.mxu0 %v2908
        %3867 = vmatpush1.bf16.msra.mxu0 %v2907
        %3868 = vmatprep.subr.bf16.mxu0 %v2912
        %3869 = vmatpush1.bf16.msra.mxu0 %v2911
        %3870 = vmatprep.subr.bf16.mxu0 %v2916
        %3871 = vmatpush1.bf16.msra.mxu0 %v2915
        %3872 = vmatprep.subr.bf16.mxu0 %v2920
        %3873 = vmatpush1.bf16.msra.mxu0 %v2919
        %3874 = vmatprep.subr.bf16.mxu0 %v2924
        %3875 = vmatpush1.bf16.msra.mxu0 %v2923
        %3876 = vmatprep.subr.bf16.mxu0 %v2928
        %3877 = vmatpush1.bf16.msra.mxu0 %v2927
        %3878 = vmatprep.mubr.bf16.mxu0 %v2174
        %3879 = vmatmul.mubr.bf16.gmra.mrb[0].mxu0 %v2173
        %v3880 = vpop.f32.mrb[0].mxu0
        %v3881 = vadd.f32 %v1727, %v3880
        %v3882 = vpop.f32.mrb[0].mxu0
        %v3883 = vadd.f32 %v1729, %v3882
        %v3884 = vpop.f32.mrb[0].mxu0
        %v3885 = vadd.f32 %v1731, %v3884
        %v3886 = vpop.f32.mrb[0].mxu0
        %v3887 = vadd.f32 %v1733, %v3886
        %3888 = vmatprep.mubr.bf16.mxu0 %v2180
        %3889 = vmatmul.mubr.bf16.gmra.mrb[0].mxu0 %v2179
        %v3890 = vpop.f32.mrb[0].mxu0
        %v3891 = vadd.f32 %v1737, %v3890
        %v3892 = vpop.f32.mrb[0].mxu0
        %v3893 = vadd.f32 %v1739, %v3892
        %v3894 = vpop.f32.mrb[0].mxu0
        %v3895 = vadd.f32 %v1741, %v3894
        %v3896 = vpop.f32.mrb[0].mxu0
        %v3897 = vadd.f32 %v1743, %v3896
        %3898 = vmatprep.mubr.bf16.mxu0 %v2186
        %3899 = vmatmul.mubr.bf16.gmra.mrb[0].mxu0 %v2185
        %v3900 = vpop.f32.mrb[0].mxu0
        %v3901 = vadd.f32 %v1747, %v3900
        %v3902 = vpop.f32.mrb[0].mxu0
        %v3903 = vadd.f32 %v1749, %v3902
        %v3904 = vpop.f32.mrb[0].mxu0
        %v3905 = vadd.f32 %v1751, %v3904
        %v3906 = vpop.f32.mrb[0].mxu0
        %v3907 = vadd.f32 %v1753, %v3906
        %3908 = vmatprep.mubr.bf16.mxu0 %v2192
        %3909 = vmatmul.mubr.bf16.gmra.mrb[0].mxu0 %v2191
        %v3910 = vpop.f32.mrb[0].mxu0
        %v3911 = vadd.f32 %v1757, %v3910
        %v3912 = vpop.f32.mrb[0].mxu0
        %v3913 = vadd.f32 %v1759, %v3912
        %v3914 = vpop.f32.mrb[0].mxu0
        %v3915 = vadd.f32 %v1761, %v3914
        %v3916 = vpop.f32.mrb[0].mxu0
        %v3917 = vadd.f32 %v1763, %v3916
        %3918 = vmatprep.mubr.bf16.mxu0 %v2198
        %3919 = vmatmul.mubr.bf16.gmra.mrb[0].mxu0 %v2197
        %v3920 = vpop.f32.mrb[0].mxu0
        %v3921 = vadd.f32 %v1767, %v3920
        %v3922 = vpop.f32.mrb[0].mxu0
        %v3923 = vadd.f32 %v1769, %v3922
        %v3924 = vpop.f32.mrb[0].mxu0
        %v3925 = vadd.f32 %v1771, %v3924
        %v3926 = vpop.f32.mrb[0].mxu0
        %v3927 = vadd.f32 %v1773, %v3926
        %3928 = vmatprep.mubr.bf16.mxu0 %v2204
        %3929 = vmatmul.mubr.bf16.gmra.mrb[0].mxu0 %v2203
        %v3930 = vpop.f32.mrb[0].mxu0
        %v3931 = vadd.f32 %v1777, %v3930
        %v3932 = vpop.f32.mrb[0].mxu0
        %v3933 = vadd.f32 %v1779, %v3932
        %v3934 = vpop.f32.mrb[0].mxu0
        %v3935 = vadd.f32 %v1781, %v3934
        %v3936 = vpop.f32.mrb[0].mxu0
        %v3937 = vadd.f32 %v1783, %v3936
        %3938 = vmatprep.mubr.bf16.mxu0 %v2210
        %3939 = vmatmul.mubr.bf16.gmra.mrb[0].mxu0 %v2209
        %v3940 = vpop.f32.mrb[0].mxu0
        %v3941 = vadd.f32 %v1787, %v3940
        %v3942 = vpop.f32.mrb[0].mxu0
        %v3943 = vadd.f32 %v1789, %v3942
        %v3944 = vpop.f32.mrb[0].mxu0
        %v3945 = vadd.f32 %v1791, %v3944
        %v3946 = vpop.f32.mrb[0].mxu0
        %v3947 = vadd.f32 %v1793, %v3946
        %3948 = vmatprep.mubr.bf16.mxu0 %v2216
        %3949 = vmatmul.mubr.bf16.gmra.mrb[0].mxu0 %v2215
        %v3950 = vpop.f32.mrb[0].mxu0
        %v3951 = vadd.f32 %v1797, %v3950
        %v3952 = vpop.f32.mrb[0].mxu0
        %v3953 = vadd.f32 %v1799, %v3952
        %v3954 = vpop.f32.mrb[0].mxu0
        %v3955 = vadd.f32 %v1801, %v3954
        %v3956 = vpop.f32.mrb[0].mxu0
        %v3957 = vadd.f32 %v1803, %v3956
        %3958 = vmatprep.mubr.bf16.mxu0 %v2222
        %3959 = vmatmul.mubr.bf16.gmra.mrb[0].mxu0 %v2221
        %v3960 = vpop.f32.mrb[0].mxu0
        %v3961 = vadd.f32 %v1807, %v3960
        %v3962 = vpop.f32.mrb[0].mxu0
        %v3963 = vadd.f32 %v1809, %v3962
        %v3964 = vpop.f32.mrb[0].mxu0
        %v3965 = vadd.f32 %v1811, %v3964
        %v3966 = vpop.f32.mrb[0].mxu0
        %v3967 = vadd.f32 %v1813, %v3966
        %3968 = vmatprep.mubr.bf16.mxu0 %v2228
        %3969 = vmatmul.mubr.bf16.gmra.mrb[0].mxu0 %v2227
        %v3970 = vpop.f32.mrb[0].mxu0
        %v3971 = vadd.f32 %v1817, %v3970
        %v3972 = vpop.f32.mrb[0].mxu0
        %v3973 = vadd.f32 %v1819, %v3972
        %v3974 = vpop.f32.mrb[0].mxu0
        %v3975 = vadd.f32 %v1821, %v3974
        %v3976 = vpop.f32.mrb[0].mxu0
        %v3977 = vadd.f32 %v1823, %v3976
        %3978 = vmatprep.mubr.bf16.mxu0 %v2234
        %3979 = vmatmul.mubr.bf16.gmra.mrb[0].mxu0 %v2233
        %v3980 = vpop.f32.mrb[0].mxu0
        %v3981 = vadd.f32 %v1827, %v3980
        %v3982 = vpop.f32.mrb[0].mxu0
        %v3983 = vadd.f32 %v1829, %v3982
        %v3984 = vpop.f32.mrb[0].mxu0
        %v3985 = vadd.f32 %v1831, %v3984
        %v3986 = vpop.f32.mrb[0].mxu0
        %v3987 = vadd.f32 %v1833, %v3986
        %3988 = vmatprep.mubr.bf16.mxu0 %v2240
        %3989 = vmatmul.mubr.bf16.gmra.mrb[0].mxu0 %v2239
        %v3990 = vpop.f32.mrb[0].mxu0
        %v3991 = vadd.f32 %v1837, %v3990
        %v3992 = vpop.f32.mrb[0].mxu0
        %v3993 = vadd.f32 %v1839, %v3992
        %v3994 = vpop.f32.mrb[0].mxu0
        %v3995 = vadd.f32 %v1841, %v3994
        %v3996 = vpop.f32.mrb[0].mxu0
        %v3997 = vadd.f32 %v1843, %v3996
        %3998 = vmatprep.mubr.bf16.mxu0 %v2246
        %3999 = vmatmul.mubr.bf16.gmra.mrb[0].mxu0 %v2245
        %v4000 = vpop.f32.mrb[0].mxu0
        %v4001 = vadd.f32 %v1847, %v4000
        %v4002 = vpop.f32.mrb[0].mxu0
        %v4003 = vadd.f32 %v1849, %v4002
        %v4004 = vpop.f32.mrb[0].mxu0
        %v4005 = vadd.f32 %v1851, %v4004
        %v4006 = vpop.f32.mrb[0].mxu0
        %v4007 = vadd.f32 %v1853, %v4006
        %4008 = vmatprep.mubr.bf16.mxu0 %v2252
        %4009 = vmatmul.mubr.bf16.gmra.mrb[0].mxu0 %v2251
        %v4010 = vpop.f32.mrb[0].mxu0
        %v4011 = vadd.f32 %v1857, %v4010
        %v4012 = vpop.f32.mrb[0].mxu0
        %v4013 = vadd.f32 %v1859, %v4012
        %v4014 = vpop.f32.mrb[0].mxu0
        %v4015 = vadd.f32 %v1861, %v4014
        %v4016 = vpop.f32.mrb[0].mxu0
        %v4017 = vadd.f32 %v1863, %v4016
        %4018 = vmatprep.mubr.bf16.mxu0 %v2258
        %4019 = vmatmul.mubr.bf16.gmra.mrb[0].mxu0 %v2257
        %v4020 = vpop.f32.mrb[0].mxu0
        %v4021 = vadd.f32 %v1867, %v4020
        %v4022 = vpop.f32.mrb[0].mxu0
        %v4023 = vadd.f32 %v1869, %v4022
        %v4024 = vpop.f32.mrb[0].mxu0
        %v4025 = vadd.f32 %v1871, %v4024
        %v4026 = vpop.f32.mrb[0].mxu0
        %v4027 = vadd.f32 %v1873, %v4026
        %4028 = vmatprep.mubr.bf16.mxu0 %v2264
        %4029 = vmatmul.mubr.bf16.gmra.mrb[0].mxu0 %v2263
        %v4030 = vpop.f32.mrb[0].mxu0
        %v4031 = vadd.f32 %v1877, %v4030
        %v4032 = vpop.f32.mrb[0].mxu0
        %v4033 = vadd.f32 %v1879, %v4032
        %v4034 = vpop.f32.mrb[0].mxu0
        %v4035 = vadd.f32 %v1881, %v4034
        %v4036 = vpop.f32.mrb[0].mxu0
        %v4037 = vadd.f32 %v1883, %v4036
        %4038 = vdwg.mxu0
        %4039 = vmatprep.subr.bf16.mxu0 %v2932
        %4040 = vmatpush1.bf16.msra.mxu0 %v2931
        %4041 = vmatprep.subr.bf16.mxu0 %v2936
        %4042 = vmatpush1.bf16.msra.mxu0 %v2935
        %4043 = vmatprep.subr.bf16.mxu0 %v2940
        %4044 = vmatpush1.bf16.msra.mxu0 %v2939
        %4045 = vmatprep.subr.bf16.mxu0 %v2944
        %4046 = vmatpush1.bf16.msra.mxu0 %v2943
        %4047 = vmatprep.subr.bf16.mxu0 %v2948
        %4048 = vmatpush1.bf16.msra.mxu0 %v2947
        %4049 = vmatprep.subr.bf16.mxu0 %v2952
        %4050 = vmatpush1.bf16.msra.mxu0 %v2951
        %4051 = vmatprep.subr.bf16.mxu0 %v2956
        %4052 = vmatpush1.bf16.msra.mxu0 %v2955
        %4053 = vmatprep.subr.bf16.mxu0 %v2960
        %4054 = vmatpush1.bf16.msra.mxu0 %v2959
        %4055 = vmatprep.subr.bf16.mxu0 %v2964
        %4056 = vmatpush1.bf16.msra.mxu0 %v2963
        %4057 = vmatprep.subr.bf16.mxu0 %v2968
        %4058 = vmatpush1.bf16.msra.mxu0 %v2967
        %4059 = vmatprep.subr.bf16.mxu0 %v2972
        %4060 = vmatpush1.bf16.msra.mxu0 %v2971
        %4061 = vmatprep.subr.bf16.mxu0 %v2976
        %4062 = vmatpush1.bf16.msra.mxu0 %v2975
        %4063 = vmatprep.subr.bf16.mxu0 %v2980
        %4064 = vmatpush1.bf16.msra.mxu0 %v2979
        %4065 = vmatprep.subr.bf16.mxu0 %v2984
        %4066 = vmatpush1.bf16.msra.mxu0 %v2983
        %4067 = vmatprep.subr.bf16.mxu0 %v2988
        %4068 = vmatpush1.bf16.msra.mxu0 %v2987
        %4069 = vmatprep.subr.bf16.mxu0 %v2992
        %4070 = vmatpush1.bf16.msra.mxu0 %v2991
        %4071 = vmatprep.mubr.bf16.mxu0 %v2176
        %4072 = vmatmul.mubr.bf16.gmra.mrb[0].mxu0 %v2175
        %v4073 = vpop.f32.mrb[0].mxu0
        %v4074 = vadd.f32 %v3881, %v4073
        %v4075 = vpop.f32.mrb[0].mxu0
        %v4076 = vadd.f32 %v3883, %v4075
        %v4077 = vpop.f32.mrb[0].mxu0
        %v4078 = vadd.f32 %v3885, %v4077
        %v4079 = vpop.f32.mrb[0].mxu0
        %v4080 = vadd.f32 %v3887, %v4079
        %4081 = vmatprep.mubr.bf16.mxu0 %v2182
        %4082 = vmatmul.mubr.bf16.gmra.mrb[0].mxu0 %v2181
        %v4083 = vpop.f32.mrb[0].mxu0
        %v4084 = vadd.f32 %v3891, %v4083
        %v4085 = vpop.f32.mrb[0].mxu0
        %v4086 = vadd.f32 %v3893, %v4085
        %v4087 = vpop.f32.mrb[0].mxu0
        %v4088 = vadd.f32 %v3895, %v4087
        %v4089 = vpop.f32.mrb[0].mxu0
        %v4090 = vadd.f32 %v3897, %v4089
        %4091 = vmatprep.mubr.bf16.mxu0 %v2188
        %4092 = vmatmul.mubr.bf16.gmra.mrb[0].mxu0 %v2187
        %v4093 = vpop.f32.mrb[0].mxu0
        %v4094 = vadd.f32 %v3901, %v4093
        %v4095 = vpop.f32.mrb[0].mxu0
        %v4096 = vadd.f32 %v3903, %v4095
        %v4097 = vpop.f32.mrb[0].mxu0
        %v4098 = vadd.f32 %v3905, %v4097
        %v4099 = vpop.f32.mrb[0].mxu0
        %v4100 = vadd.f32 %v3907, %v4099
        %4101 = vmatprep.mubr.bf16.mxu0 %v2194
        %4102 = vmatmul.mubr.bf16.gmra.mrb[0].mxu0 %v2193
        %v4103 = vpop.f32.mrb[0].mxu0
        %v4104 = vadd.f32 %v3911, %v4103
        %v4105 = vpop.f32.mrb[0].mxu0
        %v4106 = vadd.f32 %v3913, %v4105
        %v4107 = vpop.f32.mrb[0].mxu0
        %v4108 = vadd.f32 %v3915, %v4107
        %v4109 = vpop.f32.mrb[0].mxu0
        %v4110 = vadd.f32 %v3917, %v4109
        %4111 = vmatprep.mubr.bf16.mxu0 %v2200
        %4112 = vmatmul.mubr.bf16.gmra.mrb[0].mxu0 %v2199
        %v4113 = vpop.f32.mrb[0].mxu0
        %v4114 = vadd.f32 %v3921, %v4113
        %v4115 = vpop.f32.mrb[0].mxu0
        %v4116 = vadd.f32 %v3923, %v4115
        %v4117 = vpop.f32.mrb[0].mxu0
        %v4118 = vadd.f32 %v3925, %v4117
        %v4119 = vpop.f32.mrb[0].mxu0
        %v4120 = vadd.f32 %v3927, %v4119
        %4121 = vmatprep.mubr.bf16.mxu0 %v2206
        %4122 = vmatmul.mubr.bf16.gmra.mrb[0].mxu0 %v2205
        %v4123 = vpop.f32.mrb[0].mxu0
        %v4124 = vadd.f32 %v3931, %v4123
        %v4125 = vpop.f32.mrb[0].mxu0
        %v4126 = vadd.f32 %v3933, %v4125
        %v4127 = vpop.f32.mrb[0].mxu0
        %v4128 = vadd.f32 %v3935, %v4127
        %v4129 = vpop.f32.mrb[0].mxu0
        %v4130 = vadd.f32 %v3937, %v4129
        %4131 = vmatprep.mubr.bf16.mxu0 %v2212
        %4132 = vmatmul.mubr.bf16.gmra.mrb[0].mxu0 %v2211
        %v4133 = vpop.f32.mrb[0].mxu0
        %v4134 = vadd.f32 %v3941, %v4133
        %v4135 = vpop.f32.mrb[0].mxu0
        %v4136 = vadd.f32 %v3943, %v4135
        %v4137 = vpop.f32.mrb[0].mxu0
        %v4138 = vadd.f32 %v3945, %v4137
        %v4139 = vpop.f32.mrb[0].mxu0
        %v4140 = vadd.f32 %v3947, %v4139
        %4141 = vmatprep.mubr.bf16.mxu0 %v2218
        %4142 = vmatmul.mubr.bf16.gmra.mrb[0].mxu0 %v2217
        %v4143 = vpop.f32.mrb[0].mxu0
        %v4144 = vadd.f32 %v3951, %v4143
        %v4145 = vpop.f32.mrb[0].mxu0
        %v4146 = vadd.f32 %v3953, %v4145
        %v4147 = vpop.f32.mrb[0].mxu0
        %v4148 = vadd.f32 %v3955, %v4147
        %v4149 = vpop.f32.mrb[0].mxu0
        %v4150 = vadd.f32 %v3957, %v4149
        %4151 = vmatprep.mubr.bf16.mxu0 %v2224
        %4152 = vmatmul.mubr.bf16.gmra.mrb[0].mxu0 %v2223
        %v4153 = vpop.f32.mrb[0].mxu0
        %v4154 = vadd.f32 %v3961, %v4153
        %v4155 = vpop.f32.mrb[0].mxu0
        %v4156 = vadd.f32 %v3963, %v4155
        %v4157 = vpop.f32.mrb[0].mxu0
        %v4158 = vadd.f32 %v3965, %v4157
        %v4159 = vpop.f32.mrb[0].mxu0
        %v4160 = vadd.f32 %v3967, %v4159
        %4161 = vmatprep.mubr.bf16.mxu0 %v2230
        %4162 = vmatmul.mubr.bf16.gmra.mrb[0].mxu0 %v2229
        %v4163 = vpop.f32.mrb[0].mxu0
        %v4164 = vadd.f32 %v3971, %v4163
        %v4165 = vpop.f32.mrb[0].mxu0
        %v4166 = vadd.f32 %v3973, %v4165
        %v4167 = vpop.f32.mrb[0].mxu0
        %v4168 = vadd.f32 %v3975, %v4167
        %v4169 = vpop.f32.mrb[0].mxu0
        %v4170 = vadd.f32 %v3977, %v4169
        %4171 = vmatprep.mubr.bf16.mxu0 %v2236
        %4172 = vmatmul.mubr.bf16.gmra.mrb[0].mxu0 %v2235
        %v4173 = vpop.f32.mrb[0].mxu0
        %v4174 = vadd.f32 %v3981, %v4173
        %v4175 = vpop.f32.mrb[0].mxu0
        %v4176 = vadd.f32 %v3983, %v4175
        %v4177 = vpop.f32.mrb[0].mxu0
        %v4178 = vadd.f32 %v3985, %v4177
        %v4179 = vpop.f32.mrb[0].mxu0
        %v4180 = vadd.f32 %v3987, %v4179
        %4181 = vmatprep.mubr.bf16.mxu0 %v2242
        %4182 = vmatmul.mubr.bf16.gmra.mrb[0].mxu0 %v2241
        %v4183 = vpop.f32.mrb[0].mxu0
        %v4184 = vadd.f32 %v3991, %v4183
        %v4185 = vpop.f32.mrb[0].mxu0
        %v4186 = vadd.f32 %v3993, %v4185
        %v4187 = vpop.f32.mrb[0].mxu0
        %v4188 = vadd.f32 %v3995, %v4187
        %v4189 = vpop.f32.mrb[0].mxu0
        %v4190 = vadd.f32 %v3997, %v4189
        %4191 = vmatprep.mubr.bf16.mxu0 %v2248
        %4192 = vmatmul.mubr.bf16.gmra.mrb[0].mxu0 %v2247
        %v4193 = vpop.f32.mrb[0].mxu0
        %v4194 = vadd.f32 %v4001, %v4193
        %v4195 = vpop.f32.mrb[0].mxu0
        %v4196 = vadd.f32 %v4003, %v4195
        %v4197 = vpop.f32.mrb[0].mxu0
        %v4198 = vadd.f32 %v4005, %v4197
        %v4199 = vpop.f32.mrb[0].mxu0
        %v4200 = vadd.f32 %v4007, %v4199
        %4201 = vmatprep.mubr.bf16.mxu0 %v2254
        %4202 = vmatmul.mubr.bf16.gmra.mrb[0].mxu0 %v2253
        %v4203 = vpop.f32.mrb[0].mxu0
        %v4204 = vadd.f32 %v4011, %v4203
        %v4205 = vpop.f32.mrb[0].mxu0
        %v4206 = vadd.f32 %v4013, %v4205
        %v4207 = vpop.f32.mrb[0].mxu0
        %v4208 = vadd.f32 %v4015, %v4207
        %v4209 = vpop.f32.mrb[0].mxu0
        %v4210 = vadd.f32 %v4017, %v4209
        %4211 = vmatprep.mubr.bf16.mxu0 %v2260
        %4212 = vmatmul.mubr.bf16.gmra.mrb[0].mxu0 %v2259
        %v4213 = vpop.f32.mrb[0].mxu0
        %v4214 = vadd.f32 %v4021, %v4213
        %v4215 = vpop.f32.mrb[0].mxu0
        %v4216 = vadd.f32 %v4023, %v4215
        %v4217 = vpop.f32.mrb[0].mxu0
        %v4218 = vadd.f32 %v4025, %v4217
        %v4219 = vpop.f32.mrb[0].mxu0
        %v4220 = vadd.f32 %v4027, %v4219
        %4221 = vmatprep.mubr.bf16.mxu0 %v2266
        %4222 = vmatmul.mubr.bf16.gmra.mrb[0].mxu0 %v2265
        %v4223 = vpop.f32.mrb[0].mxu0
        %v4224 = vadd.f32 %v4031, %v4223
        %v4225 = vpop.f32.mrb[0].mxu0
        %v4226 = vadd.f32 %v4033, %v4225
        %v4227 = vpop.f32.mrb[0].mxu0
        %v4228 = vadd.f32 %v4035, %v4227
        %v4229 = vpop.f32.mrb[0].mxu0
        %v4230 = vadd.f32 %v4037, %v4229
        %4231 = vdwg.mxu0
        %4232 = vmatprep.subr.bf16.mxu0 %v2996
        %4233 = vmatpush1.bf16.msra.mxu0 %v2995
        %4234 = vmatprep.subr.bf16.mxu0 %v3000
        %4235 = vmatpush1.bf16.msra.mxu0 %v2999
        %4236 = vmatprep.subr.bf16.mxu0 %v3004
        %4237 = vmatpush1.bf16.msra.mxu0 %v3003
        %4238 = vmatprep.subr.bf16.mxu0 %v3008
        %4239 = vmatpush1.bf16.msra.mxu0 %v3007
        %4240 = vmatprep.subr.bf16.mxu0 %v3012
        %4241 = vmatpush1.bf16.msra.mxu0 %v3011
        %4242 = vmatprep.subr.bf16.mxu0 %v3016
        %4243 = vmatpush1.bf16.msra.mxu0 %v3015
        %4244 = vmatprep.subr.bf16.mxu0 %v3020
        %4245 = vmatpush1.bf16.msra.mxu0 %v3019
        %4246 = vmatprep.subr.bf16.mxu0 %v3024
        %4247 = vmatpush1.bf16.msra.mxu0 %v3023
        %4248 = vmatprep.subr.bf16.mxu0 %v3028
        %4249 = vmatpush1.bf16.msra.mxu0 %v3027
        %4250 = vmatprep.subr.bf16.mxu0 %v3032
        %4251 = vmatpush1.bf16.msra.mxu0 %v3031
        %4252 = vmatprep.subr.bf16.mxu0 %v3265
        %4253 = vmatpush1.bf16.msra.mxu0 %v3262
        %4254 = vmatprep.subr.bf16.mxu0 0
        %4255 = vmatpush1.bf16.msra.mxu0 0
        %4256 = vmatprep.subr.bf16.mxu0 0
        %4257 = vmatpush1.bf16.msra.mxu0 0
        %4258 = vmatprep.subr.bf16.mxu0 0
        %4259 = vmatpush1.bf16.msra.mxu0 0
        %4260 = vmatprep.subr.bf16.mxu0 0
        %4261 = vmatpush1.bf16.msra.mxu0 0
        %4262 = vmatprep.subr.bf16.mxu0 0
        %4263 = vmatpush1.bf16.msra.mxu0 0
        %4264 = vmatprep.mubr.bf16.mxu0 %v3207
        %4265 = vmatmul.mubr.bf16.gmra.mrb[0].mxu0 %v2177
        %v4266 = vpop.f32.mrb[0].mxu0
        %v4267 = vadd.f32 %v4074, %v4266
        %v4268 = vpop.f32.mrb[0].mxu0
        %v4269 = vadd.f32 %v4076, %v4268
        %v4270 = vpop.f32.mrb[0].mxu0
        %v4271 = vadd.f32 %v4078, %v4270
        %v4272 = vpop.f32.mrb[0].mxu0
        %v4273 = vadd.f32 %v4080, %v4272
        %4274 = vmatprep.mubr.bf16.mxu0 %v3210
        %4275 = vmatmul.mubr.bf16.gmra.mrb[0].mxu0 %v2183
        %v4276 = vpop.f32.mrb[0].mxu0
        %v4277 = vadd.f32 %v4084, %v4276
        %v4278 = vpop.f32.mrb[0].mxu0
        %v4279 = vadd.f32 %v4086, %v4278
        %v4280 = vpop.f32.mrb[0].mxu0
        %v4281 = vadd.f32 %v4088, %v4280
        %v4282 = vpop.f32.mrb[0].mxu0
        %v4283 = vadd.f32 %v4090, %v4282
        %4284 = vmatprep.mubr.bf16.mxu0 %v3213
        %4285 = vmatmul.mubr.bf16.gmra.mrb[0].mxu0 %v2189
        %v4286 = vpop.f32.mrb[0].mxu0
        %v4287 = vadd.f32 %v4094, %v4286
        %v4288 = vpop.f32.mrb[0].mxu0
        %v4289 = vadd.f32 %v4096, %v4288
        %v4290 = vpop.f32.mrb[0].mxu0
        %v4291 = vadd.f32 %v4098, %v4290
        %v4292 = vpop.f32.mrb[0].mxu0
        %v4293 = vadd.f32 %v4100, %v4292
        %4294 = vmatprep.mubr.bf16.mxu0 %v3216
        %4295 = vmatmul.mubr.bf16.gmra.mrb[0].mxu0 %v2195
        %v4296 = vpop.f32.mrb[0].mxu0
        %v4297 = vadd.f32 %v4104, %v4296
        %v4298 = vpop.f32.mrb[0].mxu0
        %v4299 = vadd.f32 %v4106, %v4298
        %v4300 = vpop.f32.mrb[0].mxu0
        %v4301 = vadd.f32 %v4108, %v4300
        %v4302 = vpop.f32.mrb[0].mxu0
        %v4303 = vadd.f32 %v4110, %v4302
        %4304 = vmatprep.mubr.bf16.mxu0 %v3219
        %4305 = vmatmul.mubr.bf16.gmra.mrb[0].mxu0 %v2201
        %v4306 = vpop.f32.mrb[0].mxu0
        %v4307 = vadd.f32 %v4114, %v4306
        %v4308 = vpop.f32.mrb[0].mxu0
        %v4309 = vadd.f32 %v4116, %v4308
        %v4310 = vpop.f32.mrb[0].mxu0
        %v4311 = vadd.f32 %v4118, %v4310
        %v4312 = vpop.f32.mrb[0].mxu0
        %v4313 = vadd.f32 %v4120, %v4312
        %4314 = vmatprep.mubr.bf16.mxu0 %v3222
        %4315 = vmatmul.mubr.bf16.gmra.mrb[0].mxu0 %v2207
        %v4316 = vpop.f32.mrb[0].mxu0
        %v4317 = vadd.f32 %v4124, %v4316
        %v4318 = vpop.f32.mrb[0].mxu0
        %v4319 = vadd.f32 %v4126, %v4318
        %v4320 = vpop.f32.mrb[0].mxu0
        %v4321 = vadd.f32 %v4128, %v4320
        %v4322 = vpop.f32.mrb[0].mxu0
        %v4323 = vadd.f32 %v4130, %v4322
        %4324 = vmatprep.mubr.bf16.mxu0 %v3225
        %4325 = vmatmul.mubr.bf16.gmra.mrb[0].mxu0 %v2213
        %v4326 = vpop.f32.mrb[0].mxu0
        %v4327 = vadd.f32 %v4134, %v4326
        %v4328 = vpop.f32.mrb[0].mxu0
        %v4329 = vadd.f32 %v4136, %v4328
        %v4330 = vpop.f32.mrb[0].mxu0
        %v4331 = vadd.f32 %v4138, %v4330
        %v4332 = vpop.f32.mrb[0].mxu0
        %v4333 = vadd.f32 %v4140, %v4332
        %4334 = vmatprep.mubr.bf16.mxu0 %v3228
        %4335 = vmatmul.mubr.bf16.gmra.mrb[0].mxu0 %v2219
        %v4336 = vpop.f32.mrb[0].mxu0
        %v4337 = vadd.f32 %v4144, %v4336
        %v4338 = vpop.f32.mrb[0].mxu0
        %v4339 = vadd.f32 %v4146, %v4338
        %v4340 = vpop.f32.mrb[0].mxu0
        %v4341 = vadd.f32 %v4148, %v4340
        %v4342 = vpop.f32.mrb[0].mxu0
        %v4343 = vadd.f32 %v4150, %v4342
        %4344 = vmatprep.mubr.bf16.mxu0 %v3231
        %4345 = vmatmul.mubr.bf16.gmra.mrb[0].mxu0 %v2225
        %v4346 = vpop.f32.mrb[0].mxu0
        %v4347 = vadd.f32 %v4154, %v4346
        %v4348 = vpop.f32.mrb[0].mxu0
        %v4349 = vadd.f32 %v4156, %v4348
        %v4350 = vpop.f32.mrb[0].mxu0
        %v4351 = vadd.f32 %v4158, %v4350
        %v4352 = vpop.f32.mrb[0].mxu0
        %v4353 = vadd.f32 %v4160, %v4352
        %4354 = vmatprep.mubr.bf16.mxu0 %v3234
        %4355 = vmatmul.mubr.bf16.gmra.mrb[0].mxu0 %v2231
        %v4356 = vpop.f32.mrb[0].mxu0
        %v4357 = vadd.f32 %v4164, %v4356
        %v4358 = vpop.f32.mrb[0].mxu0
        %v4359 = vadd.f32 %v4166, %v4358
        %v4360 = vpop.f32.mrb[0].mxu0
        %v4361 = vadd.f32 %v4168, %v4360
        %v4362 = vpop.f32.mrb[0].mxu0
        %v4363 = vadd.f32 %v4170, %v4362
        %4364 = vmatprep.mubr.bf16.mxu0 %v3237
        %4365 = vmatmul.mubr.bf16.gmra.mrb[0].mxu0 %v2237
        %v4366 = vpop.f32.mrb[0].mxu0
        %v4367 = vadd.f32 %v4174, %v4366
        %v4368 = vpop.f32.mrb[0].mxu0
        %v4369 = vadd.f32 %v4176, %v4368
        %v4370 = vpop.f32.mrb[0].mxu0
        %v4371 = vadd.f32 %v4178, %v4370
        %v4372 = vpop.f32.mrb[0].mxu0
        %v4373 = vadd.f32 %v4180, %v4372
        %4374 = vmatprep.mubr.bf16.mxu0 %v3240
        %4375 = vmatmul.mubr.bf16.gmra.mrb[0].mxu0 %v2243
        %v4376 = vpop.f32.mrb[0].mxu0
        %v4377 = vadd.f32 %v4184, %v4376
        %v4378 = vpop.f32.mrb[0].mxu0
        %v4379 = vadd.f32 %v4186, %v4378
        %v4380 = vpop.f32.mrb[0].mxu0
        %v4381 = vadd.f32 %v4188, %v4380
        %v4382 = vpop.f32.mrb[0].mxu0
        %v4383 = vadd.f32 %v4190, %v4382
        %4384 = vmatprep.mubr.bf16.mxu0 %v3243
        %4385 = vmatmul.mubr.bf16.gmra.mrb[0].mxu0 %v2249
        %v4386 = vpop.f32.mrb[0].mxu0
        %v4387 = vadd.f32 %v4194, %v4386
        %v4388 = vpop.f32.mrb[0].mxu0
        %v4389 = vadd.f32 %v4196, %v4388
        %v4390 = vpop.f32.mrb[0].mxu0
        %v4391 = vadd.f32 %v4198, %v4390
        %v4392 = vpop.f32.mrb[0].mxu0
        %v4393 = vadd.f32 %v4200, %v4392
        %4394 = vmatprep.mubr.bf16.mxu0 %v3246
        %4395 = vmatmul.mubr.bf16.gmra.mrb[0].mxu0 %v2255
        %v4396 = vpop.f32.mrb[0].mxu0
        %v4397 = vadd.f32 %v4204, %v4396
        %v4398 = vpop.f32.mrb[0].mxu0
        %v4399 = vadd.f32 %v4206, %v4398
        %v4400 = vpop.f32.mrb[0].mxu0
        %v4401 = vadd.f32 %v4208, %v4400
        %v4402 = vpop.f32.mrb[0].mxu0
        %v4403 = vadd.f32 %v4210, %v4402
        %4404 = vmatprep.mubr.bf16.mxu0 %v3249
        %4405 = vmatmul.mubr.bf16.gmra.mrb[0].mxu0 %v2261
        %v4406 = vpop.f32.mrb[0].mxu0
        %v4407 = vadd.f32 %v4214, %v4406
        %v4408 = vpop.f32.mrb[0].mxu0
        %v4409 = vadd.f32 %v4216, %v4408
        %v4410 = vpop.f32.mrb[0].mxu0
        %v4411 = vadd.f32 %v4218, %v4410
        %v4412 = vpop.f32.mrb[0].mxu0
        %v4413 = vadd.f32 %v4220, %v4412
        %4414 = vmatprep.mubr.bf16.mxu0 %v3252
        %4415 = vmatmul.mubr.bf16.gmra.mrb[0].mxu0 %v2267
        %v4416 = vpop.f32.mrb[0].mxu0
        %v4417 = vadd.f32 %v4224, %v4416
        %v4418 = vpop.f32.mrb[0].mxu0
        %v4419 = vadd.f32 %v4226, %v4418
        %v4420 = vpop.f32.mrb[0].mxu0
        %v4421 = vadd.f32 %v4228, %v4420
        %v4422 = vpop.f32.mrb[0].mxu0
        %v4423 = vadd.f32 %v4230, %v4422
        %4424 = vdwg.mxu0
        %v4425 = vld [vmem:[%s0] sm:$0xff]
        %v4428 = vunpack.c.l.s4 1966171168
        %v4429 = vunpack.c.0.s8 %v4428
        %v4430 = vlaneseq
        %v4431 = vshrl.u32 %v4430, 7
        %v4432 = vsub.s32 %v4429, %v4431
        %v4433 = vrot.slane %v4425, %v4432
        %v4434 = vcombine.high %v4433, %v4433
        %v4435 = vlaneseq
        %v4436 = vshrl.u32 %v4435, 7
        %v4437 = vsub.s32 0, %v4436
        %v4438 = vrot.slane %v4433, %v4437
        %v4439 = vlaneseq
        %v4440 = vshrl.u32 %v4439, 7
        %v4441 = vsub.s32 1, %v4440
        %v4442 = vrot.slane %v4433, %v4441
        %v4443 = vlaneseq
        %v4444 = vshrl.u32 %v4443, 7
        %v4445 = vsub.s32 2, %v4444
        %v4446 = vrot.slane %v4433, %v4445
        %v4447 = vlaneseq
        %v4448 = vshrl.u32 %v4447, 7
        %v4449 = vsub.s32 3, %v4448
        %v4450 = vrot.slane %v4433, %v4449
        %v4451 = vlaneseq
        %v4452 = vshrl.u32 %v4451, 7
        %v4453 = vsub.s32 0, %v4452
        %v4454 = vrot.slane %v4434, %v4453
        %v4455 = vlaneseq
        %v4456 = vshrl.u32 %v4455, 7
        %v4457 = vsub.s32 1, %v4456
        %v4458 = vrot.slane %v4434, %v4457
        %v4459 = vlaneseq
        %v4460 = vshrl.u32 %v4459, 7
        %v4461 = vsub.s32 2, %v4460
        %v4462 = vrot.slane %v4434, %v4461
        %v4463 = vlaneseq
        %v4464 = vshrl.u32 %v4463, 7
        %v4465 = vsub.s32 3, %v4464
        %v4466 = vrot.slane %v4434, %v4465
        %v4475 = vadd.f32 %v3688, %v4438
        %v4476 = vadd.f32 %v3690, %v4442
        %v4477 = vadd.f32 %v4267, %v4446
        %v4478 = vadd.f32 %v4269, %v4450
        %v4479 = vadd.f32 %v3692, %v4438
        %v4480 = vadd.f32 %v3694, %v4442
        %v4481 = vadd.f32 %v4271, %v4446
        %v4482 = vadd.f32 %v4273, %v4450
        %v4483 = vadd.f32 %v3698, %v4438
        %v4484 = vadd.f32 %v3700, %v4442
        %v4485 = vadd.f32 %v4277, %v4446
        %v4486 = vadd.f32 %v4279, %v4450
        %v4487 = vadd.f32 %v3702, %v4438
        %v4488 = vadd.f32 %v3704, %v4442
        %v4489 = vadd.f32 %v4281, %v4446
        %v4490 = vadd.f32 %v4283, %v4450
        %v4491 = vadd.f32 %v3708, %v4438
        %v4492 = vadd.f32 %v3710, %v4442
        %v4493 = vadd.f32 %v4287, %v4446
        %v4494 = vadd.f32 %v4289, %v4450
        %v4495 = vadd.f32 %v3712, %v4438
        %v4496 = vadd.f32 %v3714, %v4442
        %v4497 = vadd.f32 %v4291, %v4446
        %v4498 = vadd.f32 %v4293, %v4450
        %v4499 = vadd.f32 %v3718, %v4438
        %v4500 = vadd.f32 %v3720, %v4442
        %v4501 = vadd.f32 %v4297, %v4446
        %v4502 = vadd.f32 %v4299, %v4450
        %v4503 = vadd.f32 %v3722, %v4438
        %v4504 = vadd.f32 %v3724, %v4442
        %v4505 = vadd.f32 %v4301, %v4446
        %v4506 = vadd.f32 %v4303, %v4450
        %v4507 = vadd.f32 %v3728, %v4438
        %v4508 = vadd.f32 %v3730, %v4442
        %v4509 = vadd.f32 %v4307, %v4446
        %v4510 = vadd.f32 %v4309, %v4450
        %v4511 = vadd.f32 %v3732, %v4438
        %v4512 = vadd.f32 %v3734, %v4442
        %v4513 = vadd.f32 %v4311, %v4446
        %v4514 = vadd.f32 %v4313, %v4450
        %v4515 = vadd.f32 %v3738, %v4438
        %v4516 = vadd.f32 %v3740, %v4442
        %v4517 = vadd.f32 %v4317, %v4446
        %v4518 = vadd.f32 %v4319, %v4450
        %v4519 = vadd.f32 %v3742, %v4438
        %v4520 = vadd.f32 %v3744, %v4442
        %v4521 = vadd.f32 %v4321, %v4446
        %v4522 = vadd.f32 %v4323, %v4450
        %v4523 = vadd.f32 %v3748, %v4438
        %v4524 = vadd.f32 %v3750, %v4442
        %v4525 = vadd.f32 %v4327, %v4446
        %v4526 = vadd.f32 %v4329, %v4450
        %v4527 = vadd.f32 %v3752, %v4438
        %v4528 = vadd.f32 %v3754, %v4442
        %v4529 = vadd.f32 %v4331, %v4446
        %v4530 = vadd.f32 %v4333, %v4450
        %v4531 = vadd.f32 %v3758, %v4438
        %v4532 = vadd.f32 %v3760, %v4442
        %v4533 = vadd.f32 %v4337, %v4446
        %v4534 = vadd.f32 %v4339, %v4450
        %v4535 = vadd.f32 %v3762, %v4438
        %v4536 = vadd.f32 %v3764, %v4442
        %v4537 = vadd.f32 %v4341, %v4446
        %v4538 = vadd.f32 %v4343, %v4450
        %v4539 = vadd.f32 %v3768, %v4454
        %v4540 = vadd.f32 %v3770, %v4458
        %v4541 = vadd.f32 %v4347, %v4462
        %v4542 = vadd.f32 %v4349, %v4466
        %v4543 = vadd.f32 %v3772, %v4454
        %v4544 = vadd.f32 %v3774, %v4458
        %v4545 = vadd.f32 %v4351, %v4462
        %v4546 = vadd.f32 %v4353, %v4466
        %v4547 = vadd.f32 %v3778, %v4454
        %v4548 = vadd.f32 %v3780, %v4458
        %v4549 = vadd.f32 %v4357, %v4462
        %v4550 = vadd.f32 %v4359, %v4466
        %v4551 = vadd.f32 %v3782, %v4454
        %v4552 = vadd.f32 %v3784, %v4458
        %v4553 = vadd.f32 %v4361, %v4462
        %v4554 = vadd.f32 %v4363, %v4466
        %v4555 = vadd.f32 %v3788, %v4454
        %v4556 = vadd.f32 %v3790, %v4458
        %v4557 = vadd.f32 %v4367, %v4462
        %v4558 = vadd.f32 %v4369, %v4466
        %v4559 = vadd.f32 %v3792, %v4454
        %v4560 = vadd.f32 %v3794, %v4458
        %v4561 = vadd.f32 %v4371, %v4462
        %v4562 = vadd.f32 %v4373, %v4466
        %v4563 = vadd.f32 %v3798, %v4454
        %v4564 = vadd.f32 %v3800, %v4458
        %v4565 = vadd.f32 %v4377, %v4462
        %v4566 = vadd.f32 %v4379, %v4466
        %v4567 = vadd.f32 %v3802, %v4454
        %v4568 = vadd.f32 %v3804, %v4458
        %v4569 = vadd.f32 %v4381, %v4462
        %v4570 = vadd.f32 %v4383, %v4466
        %v4571 = vadd.f32 %v3808, %v4454
        %v4572 = vadd.f32 %v3810, %v4458
        %v4573 = vadd.f32 %v4387, %v4462
        %v4574 = vadd.f32 %v4389, %v4466
        %v4575 = vadd.f32 %v3812, %v4454
        %v4576 = vadd.f32 %v3814, %v4458
        %v4577 = vadd.f32 %v4391, %v4462
        %v4578 = vadd.f32 %v4393, %v4466
        %v4579 = vadd.f32 %v3818, %v4454
        %v4580 = vadd.f32 %v3820, %v4458
        %v4581 = vadd.f32 %v4397, %v4462
        %v4582 = vadd.f32 %v4399, %v4466
        %v4583 = vadd.f32 %v3822, %v4454
        %v4584 = vadd.f32 %v3824, %v4458
        %v4585 = vadd.f32 %v4401, %v4462
        %v4586 = vadd.f32 %v4403, %v4466
        %v4587 = vadd.f32 %v3828, %v4454
        %v4588 = vadd.f32 %v3830, %v4458
        %v4589 = vadd.f32 %v4407, %v4462
        %v4590 = vadd.f32 %v4409, %v4466
        %v4591 = vadd.f32 %v3832, %v4454
        %v4592 = vadd.f32 %v3834, %v4458
        %v4593 = vadd.f32 %v4411, %v4462
        %v4594 = vadd.f32 %v4413, %v4466
        %v4595 = vadd.f32 %v3838, %v4454
        %v4596 = vadd.f32 %v3840, %v4458
        %v4597 = vadd.f32 %v4417, %v4462
        %v4598 = vadd.f32 %v4419, %v4466
        %v4599 = vadd.f32 %v3842, %v4454
        %v4600 = vadd.f32 %v3844, %v4458
        %v4601 = vadd.f32 %v4421, %v4462
        %v4602 = vadd.f32 %v4423, %v4466
        %v4603 = vpack.c.bf16 %v4479, %v4475
        %v4604 = vpack.c.bf16 %v4480, %v4476
        %v4605 = vpack.c.bf16 %v4481, %v4477
        %v4606 = vpack.c.bf16 %v4482, %v4478
        %v4607 = vpack.c.bf16 %v4487, %v4483
        %v4608 = vpack.c.bf16 %v4488, %v4484
        %v4609 = vpack.c.bf16 %v4489, %v4485
        %v4610 = vpack.c.bf16 %v4490, %v4486
        %v4611 = vpack.c.bf16 %v4495, %v4491
        %v4612 = vpack.c.bf16 %v4496, %v4492
        %v4613 = vpack.c.bf16 %v4497, %v4493
        %v4614 = vpack.c.bf16 %v4498, %v4494
        %v4615 = vpack.c.bf16 %v4503, %v4499
        %v4616 = vpack.c.bf16 %v4504, %v4500
        %v4617 = vpack.c.bf16 %v4505, %v4501
        %v4618 = vpack.c.bf16 %v4506, %v4502
        %v4619 = vpack.c.bf16 %v4511, %v4507
        %v4620 = vpack.c.bf16 %v4512, %v4508
        %v4621 = vpack.c.bf16 %v4513, %v4509
        %v4622 = vpack.c.bf16 %v4514, %v4510
        %v4623 = vpack.c.bf16 %v4519, %v4515
        %v4624 = vpack.c.bf16 %v4520, %v4516
        %v4625 = vpack.c.bf16 %v4521, %v4517
        %v4626 = vpack.c.bf16 %v4522, %v4518
        %v4627 = vpack.c.bf16 %v4527, %v4523
        %v4628 = vpack.c.bf16 %v4528, %v4524
        %v4629 = vpack.c.bf16 %v4529, %v4525
        %v4630 = vpack.c.bf16 %v4530, %v4526
        %v4631 = vpack.c.bf16 %v4535, %v4531
        %v4632 = vpack.c.bf16 %v4536, %v4532
        %v4633 = vpack.c.bf16 %v4537, %v4533
        %v4634 = vpack.c.bf16 %v4538, %v4534
        %v4635 = vpack.c.bf16 %v4543, %v4539
        %v4636 = vpack.c.bf16 %v4544, %v4540
        %v4637 = vpack.c.bf16 %v4545, %v4541
        %v4638 = vpack.c.bf16 %v4546, %v4542
        %v4639 = vpack.c.bf16 %v4551, %v4547
        %v4640 = vpack.c.bf16 %v4552, %v4548
        %v4641 = vpack.c.bf16 %v4553, %v4549
        %v4642 = vpack.c.bf16 %v4554, %v4550
        %v4643 = vpack.c.bf16 %v4559, %v4555
        %v4644 = vpack.c.bf16 %v4560, %v4556
        %v4645 = vpack.c.bf16 %v4561, %v4557
        %v4646 = vpack.c.bf16 %v4562, %v4558
        %v4647 = vpack.c.bf16 %v4567, %v4563
        %v4648 = vpack.c.bf16 %v4568, %v4564
        %v4649 = vpack.c.bf16 %v4569, %v4565
        %v4650 = vpack.c.bf16 %v4570, %v4566
        %v4651 = vpack.c.bf16 %v4575, %v4571
        %v4652 = vpack.c.bf16 %v4576, %v4572
        %v4653 = vpack.c.bf16 %v4577, %v4573
        %v4654 = vpack.c.bf16 %v4578, %v4574
        %v4655 = vpack.c.bf16 %v4583, %v4579
        %v4656 = vpack.c.bf16 %v4584, %v4580
        %v4657 = vpack.c.bf16 %v4585, %v4581
        %v4658 = vpack.c.bf16 %v4586, %v4582
        %v4659 = vpack.c.bf16 %v4591, %v4587
        %v4660 = vpack.c.bf16 %v4592, %v4588
        %v4661 = vpack.c.bf16 %v4593, %v4589
        %v4662 = vpack.c.bf16 %v4594, %v4590
        %v4663 = vpack.c.bf16 %v4599, %v4595
        %v4664 = vpack.c.bf16 %v4600, %v4596
        %v4665 = vpack.c.bf16 %v4601, %v4597
        %v4666 = vpack.c.bf16 %v4602, %v4598
        %v4667 = vtanh.bf16.pop %v4603
        %v4668 = vtanh.bf16.pop %v4604
        %v4669 = vtanh.bf16.pop %v4605
        %v4670 = vtanh.bf16.pop %v4606
        %v4671 = vtanh.bf16.pop %v4607
        %v4672 = vtanh.bf16.pop %v4608
        %v4673 = vtanh.bf16.pop %v4609
        %v4674 = vtanh.bf16.pop %v4610
        %v4675 = vtanh.bf16.pop %v4611
        %v4676 = vtanh.bf16.pop %v4612
        %v4677 = vtanh.bf16.pop %v4613
        %v4678 = vtanh.bf16.pop %v4614
        %v4679 = vtanh.bf16.pop %v4615
        %v4680 = vtanh.bf16.pop %v4616
        %v4681 = vtanh.bf16.pop %v4617
        %v4682 = vtanh.bf16.pop %v4618
        %v4683 = vtanh.bf16.pop %v4619
        %v4684 = vtanh.bf16.pop %v4620
        %v4685 = vtanh.bf16.pop %v4621
        %v4686 = vtanh.bf16.pop %v4622
        %v4687 = vtanh.bf16.pop %v4623
        %v4688 = vtanh.bf16.pop %v4624
        %v4689 = vtanh.bf16.pop %v4625
        %v4690 = vtanh.bf16.pop %v4626
        %v4691 = vtanh.bf16.pop %v4627
        %v4692 = vtanh.bf16.pop %v4628
        %v4693 = vtanh.bf16.pop %v4629
        %v4694 = vtanh.bf16.pop %v4630
        %v4695 = vtanh.bf16.pop %v4631
        %v4696 = vtanh.bf16.pop %v4632
        %v4697 = vtanh.bf16.pop %v4633
        %v4698 = vtanh.bf16.pop %v4634
        %v4699 = vtanh.bf16.pop %v4635
        %v4700 = vtanh.bf16.pop %v4636
        %v4701 = vtanh.bf16.pop %v4637
        %v4702 = vtanh.bf16.pop %v4638
        %v4703 = vtanh.bf16.pop %v4639
        %v4704 = vtanh.bf16.pop %v4640
        %v4705 = vtanh.bf16.pop %v4641
        %v4706 = vtanh.bf16.pop %v4642
        %v4707 = vtanh.bf16.pop %v4643
        %v4708 = vtanh.bf16.pop %v4644
        %v4709 = vtanh.bf16.pop %v4645
        %v4710 = vtanh.bf16.pop %v4646
        %v4711 = vtanh.bf16.pop %v4647
        %v4712 = vtanh.bf16.pop %v4648
        %v4713 = vtanh.bf16.pop %v4649
        %v4714 = vtanh.bf16.pop %v4650
        %v4715 = vtanh.bf16.pop %v4651
        %v4716 = vtanh.bf16.pop %v4652
        %v4717 = vtanh.bf16.pop %v4653
        %v4718 = vtanh.bf16.pop %v4654
        %v4719 = vtanh.bf16.pop %v4655
        %v4720 = vtanh.bf16.pop %v4656
        %v4721 = vtanh.bf16.pop %v4657
        %v4722 = vtanh.bf16.pop %v4658
        %v4723 = vtanh.bf16.pop %v4659
        %v4724 = vtanh.bf16.pop %v4660
        %v4725 = vtanh.bf16.pop %v4661
        %v4726 = vtanh.bf16.pop %v4662
        %v4727 = vtanh.bf16.pop %v4663
        %v4728 = vtanh.bf16.pop %v4664
        %v4729 = vtanh.bf16.pop %v4665
        %v4730 = vtanh.bf16.pop %v4666
        %v4731 = vld [vmem:[%s6] sm:$0xf]
        %v4732 = vld [vmem:[%s831] sm:$0x1]
        %v4735 = vunpack.c.l.s4 1966171168
        %v4736 = vunpack.c.0.s8 %v4735
        %v4737 = vlaneseq
        %v4738 = vshrl.u32 %v4737, 7
        %v4739 = vsub.s32 %v4736, %v4738
        %v4740 = vrot.slane %v4731, %v4739
        %v4741 = vcombine.high %v4740, %v4740
        %v4743 = vunpack.c.l.s4 1966171168
        %v4744 = vunpack.c.0.s8 %v4743
        %v4745 = vlaneseq
        %v4746 = vshrl.u32 %v4745, 7
        %v4747 = vsub.s32 %v4744, %v4746
        %v4748 = vrot.slane %v4740, %v4747
        %v4750 = vunpack.c.l.s4 1966171168
        %v4751 = vunpack.c.0.s8 %v4750
        %v4752 = vlaneseq
        %v4753 = vshrl.u32 %v4752, 7
        %v4754 = vsub.s32 %v4751, %v4753
        %v4755 = vrot.slane %v4741, %v4754
        %v4756 = vcombine.high %v4748, %v4748
        %v4757 = vcombine.high %v4755, %v4755
        %4762 = vmatprep.subr.bf16.mxu0 %v4668
        %4763 = vmatpush1.bf16.xpose.msra.mxu0 %v4667
        %4764 = vmatprep.subr.bf16.mxu0 %v4672
        %4765 = vmatpush1.bf16.xpose.msra.mxu0 %v4671
        %4766 = vmatprep.subr.bf16.mxu0 %v4676
        %4767 = vmatpush1.bf16.xpose.msra.mxu0 %v4675
        %4768 = vmatprep.subr.bf16.mxu0 %v4680
        %4769 = vmatpush1.bf16.xpose.msra.mxu0 %v4679
        %4770 = vmatprep.subr.bf16.mxu0 %v4684
        %4771 = vmatpush1.bf16.xpose.msra.mxu0 %v4683
        %4772 = vmatprep.subr.bf16.mxu0 %v4688
        %4773 = vmatpush1.bf16.xpose.msra.mxu0 %v4687
        %4774 = vmatprep.subr.bf16.mxu0 %v4692
        %4775 = vmatpush1.bf16.xpose.msra.mxu0 %v4691
        %4776 = vmatprep.subr.bf16.mxu0 %v4696
        %4777 = vmatpush1.bf16.xpose.msra.mxu0 %v4695
        %4778 = vmatprep.subr.bf16.mxu0 0
        %4779 = vmatpush1.bf16.xpose.msra.mxu0 0
        %4780 = vmatprep.subr.bf16.mxu0 0
        %4781 = vmatpush1.bf16.xpose.msra.mxu0 0
        %4782 = vmatprep.subr.bf16.mxu0 0
        %4783 = vmatpush1.bf16.xpose.msra.mxu0 0
        %4784 = vmatprep.subr.bf16.mxu0 0
        %4785 = vmatpush1.bf16.xpose.msra.mxu0 0
        %4786 = vmatprep.subr.bf16.mxu0 0
        %4787 = vmatpush1.bf16.xpose.msra.mxu0 0
        %4788 = vmatprep.subr.bf16.mxu0 0
        %4789 = vmatpush1.bf16.xpose.msra.mxu0 0
        %4790 = vmatprep.subr.bf16.mxu0 0
        %4791 = vmatpush1.bf16.xpose.msra.mxu0 0
        %4792 = vmatprep.subr.bf16.mxu0 0
        %4793 = vmatpush1.bf16.xpose.msra.mxu0 0
        %4794 = vmatprep.mubr.bf16.mxu0 %v4755
        %4795 = vmatmul.mubr.bf16.gmra.mrb[0].mxu0 %v4748
        %v4796 = vpop.f32.mrb[0].mxu0
        %v4797 = vadd.f32 %v4732, %v4796
        %v4798 = vpop.f32.mrb[0].mxu0
        %v4799 = vpop.f32.mrb[0].mxu0
        %v4800 = vpop.f32.mrb[0].mxu0
        %4801 = vdwg.mxu0
        %4802 = vmatprep.subr.bf16.mxu0 %v4670
        %4803 = vmatpush1.bf16.xpose.msra.mxu0 %v4669
        %4804 = vmatprep.subr.bf16.mxu0 %v4674
        %4805 = vmatpush1.bf16.xpose.msra.mxu0 %v4673
        %4806 = vmatprep.subr.bf16.mxu0 %v4678
        %4807 = vmatpush1.bf16.xpose.msra.mxu0 %v4677
        %4808 = vmatprep.subr.bf16.mxu0 %v4682
        %4809 = vmatpush1.bf16.xpose.msra.mxu0 %v4681
        %4810 = vmatprep.subr.bf16.mxu0 %v4686
        %4811 = vmatpush1.bf16.xpose.msra.mxu0 %v4685
        %4812 = vmatprep.subr.bf16.mxu0 %v4690
        %4813 = vmatpush1.bf16.xpose.msra.mxu0 %v4689
        %4814 = vmatprep.subr.bf16.mxu0 %v4694
        %4815 = vmatpush1.bf16.xpose.msra.mxu0 %v4693
        %4816 = vmatprep.subr.bf16.mxu0 %v4698
        %4817 = vmatpush1.bf16.xpose.msra.mxu0 %v4697
        %4818 = vmatprep.subr.bf16.mxu0 0
        %4819 = vmatpush1.bf16.xpose.msra.mxu0 0
        %4820 = vmatprep.subr.bf16.mxu0 0
        %4821 = vmatpush1.bf16.xpose.msra.mxu0 0
        %4822 = vmatprep.subr.bf16.mxu0 0
        %4823 = vmatpush1.bf16.xpose.msra.mxu0 0
        %4824 = vmatprep.subr.bf16.mxu0 0
        %4825 = vmatpush1.bf16.xpose.msra.mxu0 0
        %4826 = vmatprep.subr.bf16.mxu0 0
        %4827 = vmatpush1.bf16.xpose.msra.mxu0 0
        %4828 = vmatprep.subr.bf16.mxu0 0
        %4829 = vmatpush1.bf16.xpose.msra.mxu0 0
        %4830 = vmatprep.subr.bf16.mxu0 0
        %4831 = vmatpush1.bf16.xpose.msra.mxu0 0
        %4832 = vmatprep.subr.bf16.mxu0 0
        %4833 = vmatpush1.bf16.xpose.msra.mxu0 0
        %4834 = vmatprep.mubr.bf16.mxu0 %v4757
        %4835 = vmatmul.mubr.bf16.gmra.mrb[0].mxu0 %v4756
        %v4836 = vpop.f32.mrb[0].mxu0
        %v4837 = vadd.f32 %v4797, %v4836
        %v4838 = vpop.f32.mrb[0].mxu0
        %v4839 = vpop.f32.mrb[0].mxu0
        %v4840 = vpop.f32.mrb[0].mxu0
        %4841 = vdwg.mxu0
        %4842 = vmatprep.subr.bf16.mxu0 %v4700
        %4843 = vmatpush1.bf16.xpose.msra.mxu0 %v4699
        %4844 = vmatprep.subr.bf16.mxu0 %v4704
        %4845 = vmatpush1.bf16.xpose.msra.mxu0 %v4703
        %4846 = vmatprep.subr.bf16.mxu0 %v4708
        %4847 = vmatpush1.bf16.xpose.msra.mxu0 %v4707
        %4848 = vmatprep.subr.bf16.mxu0 %v4712
        %4849 = vmatpush1.bf16.xpose.msra.mxu0 %v4711
        %4850 = vmatprep.subr.bf16.mxu0 %v4716
        %4851 = vmatpush1.bf16.xpose.msra.mxu0 %v4715
        %4852 = vmatprep.subr.bf16.mxu0 %v4720
        %4853 = vmatpush1.bf16.xpose.msra.mxu0 %v4719
        %4854 = vmatprep.subr.bf16.mxu0 %v4724
        %4855 = vmatpush1.bf16.xpose.msra.mxu0 %v4723
        %4856 = vmatprep.subr.bf16.mxu0 %v4728
        %4857 = vmatpush1.bf16.xpose.msra.mxu0 %v4727
        %4858 = vmatprep.subr.bf16.mxu0 0
        %4859 = vmatpush1.bf16.xpose.msra.mxu0 0
        %4860 = vmatprep.subr.bf16.mxu0 0
        %4861 = vmatpush1.bf16.xpose.msra.mxu0 0
        %4862 = vmatprep.subr.bf16.mxu0 0
        %4863 = vmatpush1.bf16.xpose.msra.mxu0 0
        %4864 = vmatprep.subr.bf16.mxu0 0
        %4865 = vmatpush1.bf16.xpose.msra.mxu0 0
        %4866 = vmatprep.subr.bf16.mxu0 0
        %4867 = vmatpush1.bf16.xpose.msra.mxu0 0
        %4868 = vmatprep.subr.bf16.mxu0 0
        %4869 = vmatpush1.bf16.xpose.msra.mxu0 0
        %4870 = vmatprep.subr.bf16.mxu0 0
        %4871 = vmatpush1.bf16.xpose.msra.mxu0 0
        %4872 = vmatprep.subr.bf16.mxu0 0
        %4873 = vmatpush1.bf16.xpose.msra.mxu0 0
        %4874 = vmatprep.mubr.bf16.mxu0 %v4755
        %4875 = vmatmul.mubr.bf16.gmra.mrb[0].mxu0 %v4748
        %v4876 = vpop.f32.mrb[0].mxu0
        %v4877 = vadd.f32 %v4732, %v4876
        %v4878 = vpop.f32.mrb[0].mxu0
        %v4879 = vpop.f32.mrb[0].mxu0
        %v4880 = vpop.f32.mrb[0].mxu0
        %4881 = vdwg.mxu0
        %4882 = vmatprep.subr.bf16.mxu0 %v4702
        %4883 = vmatpush1.bf16.xpose.msra.mxu0 %v4701
        %4884 = vmatprep.subr.bf16.mxu0 %v4706
        %4885 = vmatpush1.bf16.xpose.msra.mxu0 %v4705
        %4886 = vmatprep.subr.bf16.mxu0 %v4710
        %4887 = vmatpush1.bf16.xpose.msra.mxu0 %v4709
        %4888 = vmatprep.subr.bf16.mxu0 %v4714
        %4889 = vmatpush1.bf16.xpose.msra.mxu0 %v4713
        %4890 = vmatprep.subr.bf16.mxu0 %v4718
        %4891 = vmatpush1.bf16.xpose.msra.mxu0 %v4717
        %4892 = vmatprep.subr.bf16.mxu0 %v4722
        %4893 = vmatpush1.bf16.xpose.msra.mxu0 %v4721
        %4894 = vmatprep.subr.bf16.mxu0 %v4726
        %4895 = vmatpush1.bf16.xpose.msra.mxu0 %v4725
        %4896 = vmatprep.subr.bf16.mxu0 %v4730
        %4897 = vmatpush1.bf16.xpose.msra.mxu0 %v4729
        %4898 = vmatprep.subr.bf16.mxu0 0
        %4899 = vmatpush1.bf16.xpose.msra.mxu0 0
        %4900 = vmatprep.subr.bf16.mxu0 0
        %4901 = vmatpush1.bf16.xpose.msra.mxu0 0
        %4902 = vmatprep.subr.bf16.mxu0 0
        %4903 = vmatpush1.bf16.xpose.msra.mxu0 0
        %4904 = vmatprep.subr.bf16.mxu0 0
        %4905 = vmatpush1.bf16.xpose.msra.mxu0 0
        %4906 = vmatprep.subr.bf16.mxu0 0
        %4907 = vmatpush1.bf16.xpose.msra.mxu0 0
        %4908 = vmatprep.subr.bf16.mxu0 0
        %4909 = vmatpush1.bf16.xpose.msra.mxu0 0
        %4910 = vmatprep.subr.bf16.mxu0 0
        %4911 = vmatpush1.bf16.xpose.msra.mxu0 0
        %4912 = vmatprep.subr.bf16.mxu0 0
        %4913 = vmatpush1.bf16.xpose.msra.mxu0 0
        %4914 = vmatprep.mubr.bf16.mxu0 %v4757
        %4915 = vmatmul.mubr.bf16.gmra.mrb[0].mxu0 %v4756
        %v4916 = vpop.f32.mrb[0].mxu0
        %v4917 = vadd.f32 %v4877, %v4916
        %v4918 = vpop.f32.mrb[0].mxu0
        %v4919 = vpop.f32.mrb[0].mxu0
        %v4920 = vpop.f32.mrb[0].mxu0
        %4921 = vdwg.mxu0
        %v4924 = vrot.slane %v4917, 7
        %vm4925 = vcmask 1041409
        %v4926 = vsel %vm4925, %v4924, %v4837
        %4928 = vst [vmem:[%s807] sm:$0x3] %v4926
        %v4929 = vld [vmem:[%s845] sm:$0x1]
        %v4930 = vld [vmem:[%s845 + $0x1] sm:$0x1]
        %vm4931 = vcmask 1040384
        %v4932 = vsel %vm4931, %v4837, -inf
        %4933 = vmax.xlane.f32.xlu0 %v4932
        %v4934 = vpop.xlane.xlu0 %4933
        %v4935 = vsel %vm4931, %v4917, -inf
        %4936 = vmax.xlane.f32.xlu0 %v4935
        %v4937 = vpop.xlane.xlu0 %4936
        %v4938 = vmax.f32 %v4929, %v4934
        %v4939 = vmax.f32 %v4930, %v4937
        %v4940 = vsub.f32 %v4929, %v4938
        %v4941 = vsub.f32 %v4930, %v4939
        %v4942 = vmul.f32 %v4940, 1.442695
        %v4943 = vpow.pop %v4942
        %v4944 = vmul.f32 %v4941, 1.442695
        %v4945 = vpow.pop %v4944
        %4947 = vset.pattern.permute.xlu0 0
        %4948 = vperm.xlu0 %4947, %v4938
        %v4949 = vpop.permute.xlu0 %4948
        %v4951 = vlaneseq
        %v4952 = vshrl.u32 %v4951, 7
        %v4953 = vsub.s32 0, %v4952
        %v4954 = vrot.slane %v4949, %v4953
        %4956 = vset.pattern.permute.xlu0 0
        %4957 = vperm.xlu0 %4956, %v4939
        %v4958 = vpop.permute.xlu0 %4957
        %v4960 = vlaneseq
        %v4961 = vshrl.u32 %v4960, 7
        %v4962 = vsub.s32 0, %v4961
        %v4963 = vrot.slane %v4958, %v4962
        %v4964 = vsub.f32 %v4837, %v4954
        %v4965 = vsub.f32 %v4917, %v4963
        %v4966 = vmul.f32 %v4964, 1.442695
        %v4967 = vpow.pop %v4966
        %v4968 = vmul.f32 %v4965, 1.442695
        %v4969 = vpow.pop %v4968
        %v4970 = vld [vmem:[%s849] sm:$0x1]
        %v4971 = vld [vmem:[%s849 + $0x1] sm:$0x1]
        %v4972 = vmul.f32 %v4943, %v4970
        %v4973 = vmul.f32 %v4945, %v4971
        %v4974 = vsel %vm4931, %v4967, 0.0
        %4975 = vadd.xlane.f32.xlu0 %v4974
        %v4976 = vpop.xlane.xlu0 %4975
        %v4977 = vsel %vm4931, %v4969, 0.0
        %4978 = vadd.xlane.f32.xlu0 %v4977
        %v4979 = vpop.xlane.xlu0 %4978
        %v4980 = vadd.f32 %v4972, %v4976
        %v4981 = vadd.f32 %v4973, %v4979
        %vm4982 = vcmask 0
        %4983 = vst.msk [vmem:[%s849] sm:$0x1] %vm4982, %v4980
        %4984 = vst.msk [vmem:[%s849 + $0x1] sm:$0x1] %vm4982, %v4981
        %v4985 = vld [vmem:[%s826] sm:$0x3f]
        %v4986 = vld [vmem:[%s826 + $0x6] sm:$0x3f]
        %4988 = vset.pattern.permute.xlu0 0
        %4989 = vperm.xlu0 %4988, %v4943
        %v4990 = vpop.permute.xlu0 %4989
        %v4992 = vlaneseq
        %v4993 = vshrl.u32 %v4992, 7
        %v4994 = vsub.s32 0, %v4993
        %v4995 = vrot.slane %v4990, %v4994
        %4997 = vset.pattern.permute.xlu0 0
        %4998 = vperm.xlu0 %4997, %v4945
        %v4999 = vpop.permute.xlu0 %4998
        %v5001 = vlaneseq
        %v5002 = vshrl.u32 %v5001, 7
        %v5003 = vsub.s32 0, %v5002
        %v5004 = vrot.slane %v4999, %v5003
        %v5005 = vmul.f32 %v4995, %v4985
        %v5006 = vmul.f32 %v5004, %v4986
        %v5007 = vpack.c.bf16 %v4967, %v4967
        %v5008 = vpack.c.bf16 %v4969, %v4969
        %5017 = vmatprep.subr.bf16.mxu0 %v2174
        %5018 = vmatpush1.bf16.msra.mxu0 %v2173
        %5019 = vmatprep.subr.bf16.mxu0 %v2180
        %5020 = vmatpush1.bf16.msra.mxu0 %v2179
        %5021 = vmatprep.subr.bf16.mxu0 %v2186
        %5022 = vmatpush1.bf16.msra.mxu0 %v2185
        %5023 = vmatprep.subr.bf16.mxu0 %v2192
        %5024 = vmatpush1.bf16.msra.mxu0 %v2191
        %5025 = vmatprep.subr.bf16.mxu0 %v2198
        %5026 = vmatpush1.bf16.msra.mxu0 %v2197
        %5027 = vmatprep.subr.bf16.mxu0 %v2204
        %5028 = vmatpush1.bf16.msra.mxu0 %v2203
        %5029 = vmatprep.subr.bf16.mxu0 %v2210
        %5030 = vmatpush1.bf16.msra.mxu0 %v2209
        %5031 = vmatprep.subr.bf16.mxu0 %v2216
        %5032 = vmatpush1.bf16.msra.mxu0 %v2215
        %5033 = vmatprep.subr.bf16.mxu0 0
        %5034 = vmatpush1.bf16.msra.mxu0 0
        %5035 = vmatprep.subr.bf16.mxu0 0
        %5036 = vmatpush1.bf16.msra.mxu0 0
        %5037 = vmatprep.subr.bf16.mxu0 0
        %5038 = vmatpush1.bf16.msra.mxu0 0
        %5039 = vmatprep.subr.bf16.mxu0 0
        %5040 = vmatpush1.bf16.msra.mxu0 0
        %5041 = vmatprep.subr.bf16.mxu0 0
        %5042 = vmatpush1.bf16.msra.mxu0 0
        %5043 = vmatprep.subr.bf16.mxu0 0
        %5044 = vmatpush1.bf16.msra.mxu0 0
        %5045 = vmatprep.subr.bf16.mxu0 0
        %5046 = vmatpush1.bf16.msra.mxu0 0
        %5047 = vmatprep.subr.bf16.mxu0 0
        %5048 = vmatpush1.bf16.msra.mxu0 0
        %5049 = vmatprep.mubr.bf16.mxu0 0
        %5050 = vmatmul.mubr.bf16.gmra.mrb[0].mxu0 %v5007
        %v5051 = vpop.f32.mrb[0].mxu0
        %v5052 = vadd.f32 0.0, %v5051
        %v5053 = vpop.f32.mrb[0].mxu0
        %v5054 = vadd.f32 0.0, %v5053
        %v5055 = vpop.f32.mrb[0].mxu0
        %v5056 = vpop.f32.mrb[0].mxu0
        %5057 = vdwg.mxu0
        %5058 = vmatprep.subr.bf16.mxu0 %v2176
        %5059 = vmatpush1.bf16.msra.mxu0 %v2175
        %5060 = vmatprep.subr.bf16.mxu0 %v2182
        %5061 = vmatpush1.bf16.msra.mxu0 %v2181
        %5062 = vmatprep.subr.bf16.mxu0 %v2188
        %5063 = vmatpush1.bf16.msra.mxu0 %v2187
        %5064 = vmatprep.subr.bf16.mxu0 %v2194
        %5065 = vmatpush1.bf16.msra.mxu0 %v2193
        %5066 = vmatprep.subr.bf16.mxu0 %v2200
        %5067 = vmatpush1.bf16.msra.mxu0 %v2199
        %5068 = vmatprep.subr.bf16.mxu0 %v2206
        %5069 = vmatpush1.bf16.msra.mxu0 %v2205
        %5070 = vmatprep.subr.bf16.mxu0 %v2212
        %5071 = vmatpush1.bf16.msra.mxu0 %v2211
        %5072 = vmatprep.subr.bf16.mxu0 %v2218
        %5073 = vmatpush1.bf16.msra.mxu0 %v2217
        %5074 = vmatprep.subr.bf16.mxu0 0
        %5075 = vmatpush1.bf16.msra.mxu0 0
        %5076 = vmatprep.subr.bf16.mxu0 0
        %5077 = vmatpush1.bf16.msra.mxu0 0
        %5078 = vmatprep.subr.bf16.mxu0 0
        %5079 = vmatpush1.bf16.msra.mxu0 0
        %5080 = vmatprep.subr.bf16.mxu0 0
        %5081 = vmatpush1.bf16.msra.mxu0 0
        %5082 = vmatprep.subr.bf16.mxu0 0
        %5083 = vmatpush1.bf16.msra.mxu0 0
        %5084 = vmatprep.subr.bf16.mxu0 0
        %5085 = vmatpush1.bf16.msra.mxu0 0
        %5086 = vmatprep.subr.bf16.mxu0 0
        %5087 = vmatpush1.bf16.msra.mxu0 0
        %5088 = vmatprep.subr.bf16.mxu0 0
        %5089 = vmatpush1.bf16.msra.mxu0 0
        %5090 = vmatprep.mubr.bf16.mxu0 0
        %5091 = vmatmul.mubr.bf16.gmra.mrb[0].mxu0 %v5007
        %v5092 = vpop.f32.mrb[0].mxu0
        %v5093 = vadd.f32 0.0, %v5092
        %v5094 = vpop.f32.mrb[0].mxu0
        %v5095 = vadd.f32 0.0, %v5094
        %v5096 = vpop.f32.mrb[0].mxu0
        %v5097 = vpop.f32.mrb[0].mxu0
        %5098 = vdwg.mxu0
        %5099 = vmatprep.subr.bf16.mxu0 %v2178
        %5100 = vmatpush1.bf16.msra.mxu0 %v2177
        %5101 = vmatprep.subr.bf16.mxu0 %v2184
        %5102 = vmatpush1.bf16.msra.mxu0 %v2183
        %5103 = vmatprep.subr.bf16.mxu0 %v2190
        %5104 = vmatpush1.bf16.msra.mxu0 %v2189
        %5105 = vmatprep.subr.bf16.mxu0 %v2196
        %5106 = vmatpush1.bf16.msra.mxu0 %v2195
        %5107 = vmatprep.subr.bf16.mxu0 %v2202
        %5108 = vmatpush1.bf16.msra.mxu0 %v2201
        %5109 = vmatprep.subr.bf16.mxu0 %v2208
        %5110 = vmatpush1.bf16.msra.mxu0 %v2207
        %5111 = vmatprep.subr.bf16.mxu0 %v2214
        %5112 = vmatpush1.bf16.msra.mxu0 %v2213
        %5113 = vmatprep.subr.bf16.mxu0 %v2220
        %5114 = vmatpush1.bf16.msra.mxu0 %v2219
        %5115 = vmatprep.subr.bf16.mxu0 0
        %5116 = vmatpush1.bf16.msra.mxu0 0
        %5117 = vmatprep.subr.bf16.mxu0 0
        %5118 = vmatpush1.bf16.msra.mxu0 0
        %5119 = vmatprep.subr.bf16.mxu0 0
        %5120 = vmatpush1.bf16.msra.mxu0 0
        %5121 = vmatprep.subr.bf16.mxu0 0
        %5122 = vmatpush1.bf16.msra.mxu0 0
        %5123 = vmatprep.subr.bf16.mxu0 0
        %5124 = vmatpush1.bf16.msra.mxu0 0
        %5125 = vmatprep.subr.bf16.mxu0 0
        %5126 = vmatpush1.bf16.msra.mxu0 0
        %5127 = vmatprep.subr.bf16.mxu0 0
        %5128 = vmatpush1.bf16.msra.mxu0 0
        %5129 = vmatprep.subr.bf16.mxu0 0
        %5130 = vmatpush1.bf16.msra.mxu0 0
        %5131 = vmatprep.mubr.bf16.mxu0 0
        %5132 = vmatmul.mubr.bf16.gmra.mrb[0].mxu0 %v5007
        %v5133 = vpop.f32.mrb[0].mxu0
        %v5134 = vadd.f32 0.0, %v5133
        %v5135 = vpop.f32.mrb[0].mxu0
        %v5136 = vadd.f32 0.0, %v5135
        %v5137 = vpop.f32.mrb[0].mxu0
        %v5138 = vpop.f32.mrb[0].mxu0
        %5139 = vdwg.mxu0
        %5148 = vmatprep.subr.bf16.mxu0 %v2222
        %5149 = vmatpush1.bf16.msra.mxu0 %v2221
        %5150 = vmatprep.subr.bf16.mxu0 %v2228
        %5151 = vmatpush1.bf16.msra.mxu0 %v2227
        %5152 = vmatprep.subr.bf16.mxu0 %v2234
        %5153 = vmatpush1.bf16.msra.mxu0 %v2233
        %5154 = vmatprep.subr.bf16.mxu0 %v2240
        %5155 = vmatpush1.bf16.msra.mxu0 %v2239
        %5156 = vmatprep.subr.bf16.mxu0 %v2246
        %5157 = vmatpush1.bf16.msra.mxu0 %v2245
        %5158 = vmatprep.subr.bf16.mxu0 %v2252
        %5159 = vmatpush1.bf16.msra.mxu0 %v2251
        %5160 = vmatprep.subr.bf16.mxu0 %v2258
        %5161 = vmatpush1.bf16.msra.mxu0 %v2257
        %5162 = vmatprep.subr.bf16.mxu0 %v2264
        %5163 = vmatpush1.bf16.msra.mxu0 %v2263
        %5164 = vmatprep.subr.bf16.mxu0 0
        %5165 = vmatpush1.bf16.msra.mxu0 0
        %5166 = vmatprep.subr.bf16.mxu0 0
        %5167 = vmatpush1.bf16.msra.mxu0 0
        %5168 = vmatprep.subr.bf16.mxu0 0
        %5169 = vmatpush1.bf16.msra.mxu0 0
        %5170 = vmatprep.subr.bf16.mxu0 0
        %5171 = vmatpush1.bf16.msra.mxu0 0
        %5172 = vmatprep.subr.bf16.mxu0 0
        %5173 = vmatpush1.bf16.msra.mxu0 0
        %5174 = vmatprep.subr.bf16.mxu0 0
        %5175 = vmatpush1.bf16.msra.mxu0 0
        %5176 = vmatprep.subr.bf16.mxu0 0
        %5177 = vmatpush1.bf16.msra.mxu0 0
        %5178 = vmatprep.subr.bf16.mxu0 0
        %5179 = vmatpush1.bf16.msra.mxu0 0
        %5180 = vmatprep.mubr.bf16.mxu0 0
        %5181 = vmatmul.mubr.bf16.gmra.mrb[0].mxu0 %v5008
        %v5182 = vpop.f32.mrb[0].mxu0
        %v5183 = vadd.f32 0.0, %v5182
        %v5184 = vpop.f32.mrb[0].mxu0
        %v5185 = vadd.f32 0.0, %v5184
        %v5186 = vpop.f32.mrb[0].mxu0
        %v5187 = vpop.f32.mrb[0].mxu0
        %5188 = vdwg.mxu0
        %5189 = vmatprep.subr.bf16.mxu0 %v2224
        %5190 = vmatpush1.bf16.msra.mxu0 %v2223
        %5191 = vmatprep.subr.bf16.mxu0 %v2230
        %5192 = vmatpush1.bf16.msra.mxu0 %v2229
        %5193 = vmatprep.subr.bf16.mxu0 %v2236
        %5194 = vmatpush1.bf16.msra.mxu0 %v2235
        %5195 = vmatprep.subr.bf16.mxu0 %v2242
        %5196 = vmatpush1.bf16.msra.mxu0 %v2241
        %5197 = vmatprep.subr.bf16.mxu0 %v2248
        %5198 = vmatpush1.bf16.msra.mxu0 %v2247
        %5199 = vmatprep.subr.bf16.mxu0 %v2254
        %5200 = vmatpush1.bf16.msra.mxu0 %v2253
        %5201 = vmatprep.subr.bf16.mxu0 %v2260
        %5202 = vmatpush1.bf16.msra.mxu0 %v2259
        %5203 = vmatprep.subr.bf16.mxu0 %v2266
        %5204 = vmatpush1.bf16.msra.mxu0 %v2265
        %5205 = vmatprep.subr.bf16.mxu0 0
        %5206 = vmatpush1.bf16.msra.mxu0 0
        %5207 = vmatprep.subr.bf16.mxu0 0
        %5208 = vmatpush1.bf16.msra.mxu0 0
        %5209 = vmatprep.subr.bf16.mxu0 0
        %5210 = vmatpush1.bf16.msra.mxu0 0
        %5211 = vmatprep.subr.bf16.mxu0 0
        %5212 = vmatpush1.bf16.msra.mxu0 0
        %5213 = vmatprep.subr.bf16.mxu0 0
        %5214 = vmatpush1.bf16.msra.mxu0 0
        %5215 = vmatprep.subr.bf16.mxu0 0
        %5216 = vmatpush1.bf16.msra.mxu0 0
        %5217 = vmatprep.subr.bf16.mxu0 0
        %5218 = vmatpush1.bf16.msra.mxu0 0
        %5219 = vmatprep.subr.bf16.mxu0 0
        %5220 = vmatpush1.bf16.msra.mxu0 0
        %5221 = vmatprep.mubr.bf16.mxu0 0
        %5222 = vmatmul.mubr.bf16.gmra.mrb[0].mxu0 %v5008
        %v5223 = vpop.f32.mrb[0].mxu0
        %v5224 = vadd.f32 0.0, %v5223
        %v5225 = vpop.f32.mrb[0].mxu0
        %v5226 = vadd.f32 0.0, %v5225
        %v5227 = vpop.f32.mrb[0].mxu0
        %v5228 = vpop.f32.mrb[0].mxu0
        %5229 = vdwg.mxu0
        %5230 = vmatprep.subr.bf16.mxu0 %v2226
        %5231 = vmatpush1.bf16.msra.mxu0 %v2225
        %5232 = vmatprep.subr.bf16.mxu0 %v2232
        %5233 = vmatpush1.bf16.msra.mxu0 %v2231
        %5234 = vmatprep.subr.bf16.mxu0 %v2238
        %5235 = vmatpush1.bf16.msra.mxu0 %v2237
        %5236 = vmatprep.subr.bf16.mxu0 %v2244
        %5237 = vmatpush1.bf16.msra.mxu0 %v2243
        %5238 = vmatprep.subr.bf16.mxu0 %v2250
        %5239 = vmatpush1.bf16.msra.mxu0 %v2249
        %5240 = vmatprep.subr.bf16.mxu0 %v2256
        %5241 = vmatpush1.bf16.msra.mxu0 %v2255
        %5242 = vmatprep.subr.bf16.mxu0 %v2262
        %5243 = vmatpush1.bf16.msra.mxu0 %v2261
        %5244 = vmatprep.subr.bf16.mxu0 %v2268
        %5245 = vmatpush1.bf16.msra.mxu0 %v2267
        %5246 = vmatprep.subr.bf16.mxu0 0
        %5247 = vmatpush1.bf16.msra.mxu0 0
        %5248 = vmatprep.subr.bf16.mxu0 0
        %5249 = vmatpush1.bf16.msra.mxu0 0
        %5250 = vmatprep.subr.bf16.mxu0 0
        %5251 = vmatpush1.bf16.msra.mxu0 0
        %5252 = vmatprep.subr.bf16.mxu0 0
        %5253 = vmatpush1.bf16.msra.mxu0 0
        %5254 = vmatprep.subr.bf16.mxu0 0
        %5255 = vmatpush1.bf16.msra.mxu0 0
        %5256 = vmatprep.subr.bf16.mxu0 0
        %5257 = vmatpush1.bf16.msra.mxu0 0
        %5258 = vmatprep.subr.bf16.mxu0 0
        %5259 = vmatpush1.bf16.msra.mxu0 0
        %5260 = vmatprep.subr.bf16.mxu0 0
        %5261 = vmatpush1.bf16.msra.mxu0 0
        %5262 = vmatprep.mubr.bf16.mxu0 0
        %5263 = vmatmul.mubr.bf16.gmra.mrb[0].mxu0 %v5008
        %v5264 = vpop.f32.mrb[0].mxu0
        %v5265 = vadd.f32 0.0, %v5264
        %v5266 = vpop.f32.mrb[0].mxu0
        %v5267 = vadd.f32 0.0, %v5266
        %v5268 = vpop.f32.mrb[0].mxu0
        %v5269 = vpop.f32.mrb[0].mxu0
        %5270 = vdwg.mxu0
        %v5283 = vcombine.low %v5052, %v5054
        %v5284 = vcombine.low %v5093, %v5095
        %v5285 = vcombine.low %v5134, %v5136
        %v5287 = vunpack.c.l.s4 1966171168
        %v5288 = vunpack.c.0.s8 %v5287
        %v5289 = vlaneseq
        %v5290 = vshrl.u32 %v5289, 7
        %v5291 = vsub.s32 %v5288, %v5290
        %v5292 = vrot.slane %v5283, %v5291
        %v5294 = vunpack.c.l.s4 1966171168
        %v5295 = vunpack.c.0.s8 %v5294
        %v5296 = vlaneseq
        %v5297 = vshrl.u32 %v5296, 7
        %v5298 = vsub.s32 %v5295, %v5297
        %v5299 = vrot.slane %v5284, %v5298
        %v5301 = vunpack.c.l.s4 1966171168
        %v5302 = vunpack.c.0.s8 %v5301
        %v5303 = vlaneseq
        %v5304 = vshrl.u32 %v5303, 7
        %v5305 = vsub.s32 %v5302, %v5304
        %v5306 = vrot.slane %v5285, %v5305
        %v5307 = vcombine.low %v5292, %v5299
        %v5309 = vunpack.c.l.s4 1966171168
        %v5310 = vunpack.c.0.s8 %v5309
        %v5311 = vlaneseq
        %v5312 = vshrl.u32 %v5311, 7
        %v5313 = vsub.s32 %v5310, %v5312
        %v5314 = vrot.slane %v5307, %v5313
        %v5316 = vunpack.c.l.s4 1966171168
        %v5317 = vunpack.c.0.s8 %v5316
        %v5318 = vlaneseq
        %v5319 = vshrl.u32 %v5318, 7
        %v5320 = vsub.s32 %v5317, %v5319
        %v5321 = vrot.slane %v5306, %v5320
        %v5322 = vcombine.low %v5314, %v5321
        %v5323 = vcombine.low %v5183, %v5185
        %v5324 = vcombine.low %v5224, %v5226
        %v5325 = vcombine.low %v5265, %v5267
        %v5327 = vunpack.c.l.s4 1966171168
        %v5328 = vunpack.c.0.s8 %v5327
        %v5329 = vlaneseq
        %v5330 = vshrl.u32 %v5329, 7
        %v5331 = vsub.s32 %v5328, %v5330
        %v5332 = vrot.slane %v5323, %v5331
        %v5334 = vunpack.c.l.s4 1966171168
        %v5335 = vunpack.c.0.s8 %v5334
        %v5336 = vlaneseq
        %v5337 = vshrl.u32 %v5336, 7
        %v5338 = vsub.s32 %v5335, %v5337
        %v5339 = vrot.slane %v5324, %v5338
        %v5341 = vunpack.c.l.s4 1966171168
        %v5342 = vunpack.c.0.s8 %v5341
        %v5343 = vlaneseq
        %v5344 = vshrl.u32 %v5343, 7
        %v5345 = vsub.s32 %v5342, %v5344
        %v5346 = vrot.slane %v5325, %v5345
        %v5347 = vcombine.low %v5332, %v5339
        %v5349 = vunpack.c.l.s4 1966171168
        %v5350 = vunpack.c.0.s8 %v5349
        %v5351 = vlaneseq
        %v5352 = vshrl.u32 %v5351, 7
        %v5353 = vsub.s32 %v5350, %v5352
        %v5354 = vrot.slane %v5347, %v5353
        %v5356 = vunpack.c.l.s4 1966171168
        %v5357 = vunpack.c.0.s8 %v5356
        %v5358 = vlaneseq
        %v5359 = vshrl.u32 %v5358, 7
        %v5360 = vsub.s32 %v5357, %v5359
        %v5361 = vrot.slane %v5346, %v5360
        %v5362 = vcombine.low %v5354, %v5361
        %v5365 = vadd.f32 %v5005, %v5322
        %v5366 = vadd.f32 %v5006, %v5362
        %v5367 = vlaneseq
        %vm5368 = vcmp.ge.s32.totalorder %v5367, 0
        %vm5369 = vcmp.lt.s32.totalorder %v5367, 684
        %vm5370 = vmand %vm5368, %vm5369
        %5371 = vst.msk [vmem:[%s826] sm:$0x3f] %vm5370, %v5365
        %5372 = vst.msk [vmem:[%s826 + $0x6] sm:$0x3f] %vm5370, %v5366
        %5373 = vst.msk [vmem:[%s845] sm:$0x1] %vm4982, %v4938
        %5374 = vst.msk [vmem:[%s845 + $0x1] sm:$0x1] %vm4982, %v4939
        %s5375 = sand.u32 %s226, 1
        %s5376 = scalar_lea.sflag [#allocation5], %s5375
        %s5377 = sand.u32 %s226, 1
        %s5378 = smul.addr %s5377, 2
        %s5379 = scalar_lea.vmem [#allocation4], %s5378
        %p5380 = scmp.lt.s32.totalorder %s32, 1
        %s5381 = scalar_select %p5380, %s32, 1
        %s5382 = smul.addr %s5381, 2
        %s5383 = scalar_lea.vmem %s8, %s5382
        %p5384 = scmp.lt.s32.totalorder %s32, 1
        %s5385 = scalar_select %p5384, %s32, 1
        %s5386 = smul.addr %s5385, 2
        %s5387 = scalar_lea.vmem %s9, %s5386
        %s5388 = sand.u32 %s304, 1
        %s5389 = scalar_lea.sflag [#allocation7], %s5388
        %s5390 = sand.u32 %s304, 1
        %s5391 = smul.addr %s5390, 12
        %s5392 = scalar_lea.vmem [#allocation6], %s5391
        // Predicated region
        $region117: #{tpu_custom_call.1} parent=103 // pred_check
          %p5393 = pneg %p236
        $region118: #{tpu_custom_call.1} parent=103 // pred_check_branch
          %5395 = sbr.rel (%p5393) target = $region120
        $region119: #{tpu_custom_call.1} parent=103 // pred_region
          %s5396 = smul.u32 %s32, 2
          %s5397 = sadd.s32 %s5396, %s33
          %s5399 = ssub.s32 32, 32
          %5400 = vsyncadd %s5376, %s5399
          %s5401 = smul.addr %s5397, 32
          %s5402 = scalar_lea.hbm %s7, %s5401
          %s5404 = sshll.u32 %s5379, 4
          %s5405 = int_to_ptr.vmem [resolvable:$true] %s5404
          %5407 = dma.vmem_to_hbm [thread:$0]  %s5405, 32, %s5402, %s5376
        $region120: #{tpu_custom_call.1} parent=103 // pred_fallthru
          _
        // Predicated region
        $region121: #{tpu_custom_call.1} parent=103 // pred_check
          %p5408 = pneg %p262
        $region122: #{tpu_custom_call.1} parent=103 // pred_check_branch
          %5410 = sbr.rel (%p5408) target = $region124
        $region123: #{tpu_custom_call.1} parent=103 // pred_region
          _
        $region124: #{tpu_custom_call.1} parent=103 // pred_fallthru
          _
        // Predicated region
        $region125: #{tpu_custom_call.1} parent=103 // pred_check
          %p5411 = pneg %p288
        $region126: #{tpu_custom_call.1} parent=103 // pred_check_branch
          %5413 = sbr.rel (%p5411) target = $region128
        $region127: #{tpu_custom_call.1} parent=103 // pred_region
          _
        $region128: #{tpu_custom_call.1} parent=103 // pred_fallthru
          _
        // Predicated region
        $region129: #{tpu_custom_call.1} parent=103 // pred_check
          %p5414 = pneg %p314
        $region130: #{tpu_custom_call.1} parent=103 // pred_check_branch
          %5416 = sbr.rel (%p5414) target = $region132
        $region131: #{tpu_custom_call.1} parent=103 // pred_region
          %s5418 = ssub.s32 192, 192
          %5419 = vsyncadd %s5389, %s5418
          %s5420 = smul.addr %s32, 12
          %s5421 = smul.addr %s5420, 16
          %s5422 = scalar_lea.hbm %s10, %s5421
          %s5423 = sshll.u32 %s5392, 4
          %s5424 = int_to_ptr.vmem [resolvable:$true] %s5423
          %5429 = dma.vmem_to_hbm [thread:$0]  %s5424, 192, %s5422, %s5389, 96, 96, 6
        $region132: #{tpu_custom_call.1} parent=103 // pred_fallthru
          _
      $region104: #{tpu_custom_call.1} parent=5 // pred_fallthru
        _
      %p5430 = scmp.le.s32.totalorder 2, %s23
      // Predicated region
      $region133: #{tpu_custom_call.1} parent=5 // pred_check
        %p5431 = pneg %p5430
      $region134: #{tpu_custom_call.1} parent=5 // pred_check_branch
        %5433 = sbr.rel (%p5431) target = $region136
      $region135: #{tpu_custom_call.1} parent=5 // pred_region
        %s5434 = ssub.s32 %s23, 2
        // Predicated region
        $region137: #{tpu_custom_call.1} parent=135 // pred_check
          %p5435 = pneg %p242
        $region138: #{tpu_custom_call.1} parent=135 // pred_check_branch
          %5437 = sbr.rel (%p5435) target = $region140
        $region139: #{tpu_custom_call.1} parent=135 // pred_region
          %s5438 = sand.u32 %s227, 1
          %s5439 = scalar_lea.sflag [#allocation5], %s5438
          %s5440 = sand.u32 %s227, 1
          %s5441 = smul.addr %s5440, 2
          %s5442 = scalar_lea.vmem [#allocation4], %s5441
          %5443 = dma.done %s5439, 32
        $region140: #{tpu_custom_call.1} parent=135 // pred_fallthru
          _
        // Predicated region
        $region141: #{tpu_custom_call.1} parent=135 // pred_check
          %p5444 = pneg %p268
        $region142: #{tpu_custom_call.1} parent=135 // pred_check_branch
          %5446 = sbr.rel (%p5444) target = $region144
        $region143: #{tpu_custom_call.1} parent=135 // pred_region
          %p5447 = scmp.lt.s32.totalorder %s34, 1
          %s5448 = scalar_select %p5447, %s34, 1
          %s5449 = smul.addr %s5448, 2
          %s5450 = scalar_lea.vmem %s8, %s5449
        $region144: #{tpu_custom_call.1} parent=135 // pred_fallthru
          _
        // Predicated region
        $region145: #{tpu_custom_call.1} parent=135 // pred_check
          %p5451 = pneg %p294
        $region146: #{tpu_custom_call.1} parent=135 // pred_check_branch
          %5453 = sbr.rel (%p5451) target = $region148
        $region147: #{tpu_custom_call.1} parent=135 // pred_region
          %p5454 = scmp.lt.s32.totalorder %s34, 1
          %s5455 = scalar_select %p5454, %s34, 1
          %s5456 = smul.addr %s5455, 2
          %s5457 = scalar_lea.vmem %s9, %s5456
        $region148: #{tpu_custom_call.1} parent=135 // pred_fallthru
          _
        // Predicated region
        $region149: #{tpu_custom_call.1} parent=135 // pred_check
          %p5458 = pneg %p320
        $region150: #{tpu_custom_call.1} parent=135 // pred_check_branch
          %5460 = sbr.rel (%p5458) target = $region152
        $region151: #{tpu_custom_call.1} parent=135 // pred_region
          %s5461 = sand.u32 %s305, 1
          %s5462 = scalar_lea.sflag [#allocation7], %s5461
          %s5463 = sand.u32 %s305, 1
          %s5464 = smul.addr %s5463, 12
          %s5465 = scalar_lea.vmem [#allocation6], %s5464
          %5466 = dma.done %s5462, 192
        $region152: #{tpu_custom_call.1} parent=135 // pred_fallthru
          _
      $region136: #{tpu_custom_call.1} parent=5 // pred_fallthru
        _
    $region6: #{tpu_custom_call.1} parent=1 // loop_footer
      %s27 = sadd.s32 1, %s23
    $region7: #{tpu_custom_call.1} parent=1 // loop_footer_branch
      %22 = sbr.rel target = $region3
    $region8: #{tpu_custom_call.1} parent=1 // loop_exit
      _
    %5467 = vsyncpa [#allocation5], 1
    %s5468 = scalar_lea.sflag [#allocation5], 1
    %5469 = vsyncpa %s5468, 1
    %5470 = vsyncpa [#allocation7], 1
    %s5471 = scalar_lea.sflag [#allocation7], 1
    %5472 = vsyncpa %s5471, 1

</llo_original>
